<compile_context>
chip_gen: v7x
topology: tpu7x:2x2x1
jax: 0.10.0
libtpu: 0.0.40
codegen_flags: <defaults>
</compile_context>

<pallas_src>
import numpy as np
import jax
import jax.numpy as jnp
from jax.experimental import pallas as pl
from jax.experimental.pallas import tpu as pltpu

# ---- module hyperparameters (MelSpectrogram defaults) ----
FILTER_LENGTH = 1024            # n_fft
HOP_LENGTH = 256
WIN_LENGTH = 1024
N_MELS = 100
SAMPLE_RATE = 24000
# power=1 (magnitude), center=True, normalized=False, norm=None, mel_scale='htk'

# num_frames = 1 + T // hop only holds because win_length == n_fft and center=True.
assert WIN_LENGTH == FILTER_LENGTH, "frame-count formula assumes win_length == n_fft"
assert FILTER_LENGTH % HOP_LENGTH == 0, "hop-decomposed framing assumes hop_length | n_fft"

N_CHUNKS = FILTER_LENGTH // HOP_LENGTH                  # 4 hop-sized chunks per frame
N_FREQS = FILTER_LENGTH // 2 + 1                        # 513 (onesided)
N_FREQS_PAD = ((N_FREQS + 127) // 128) * 128            # 640 (lane-aligned)
N_MELS_PAD = 128                                        # lane-dense output width
BASIS_COLS = 2 * N_FREQS_PAD                            # 1280: [re | im] fused basis
TILE_ROWS_MAX = 512             # frames per grid step; ~10 MiB VMEM -> fits v5e/v6e/v7x
OVERLAP_ROWS = 8                # extra hop rows staged per tile (>= N_CHUNKS-1, 8-aligned)


def _round_up(x: int, m: int) -> int:
    return ((x + m - 1) // m) * m


def _cdiv(a: int, b: int) -> int:
    return -(-a // b)


def _hann_window_periodic(win_length: int) -> np.ndarray:
    n = np.arange(win_length)
    return (0.5 - 0.5 * np.cos(2.0 * np.pi * n / win_length)).astype(np.float64)


def _build_dft_basis() -> np.ndarray:
    """Windowed real/imag DFT bases fused as one (n_fft, 2*n_freqs_pad) matrix."""
    w = _hann_window_periodic(WIN_LENGTH)               # win_length == n_fft here
    n = np.arange(FILTER_LENGTH)[:, None]
    k = np.arange(N_FREQS)[None, :]
    ang = 2.0 * np.pi * n * k / FILTER_LENGTH
    br = np.cos(ang) * w[:, None]                       # real part basis
    bi = -np.sin(ang) * w[:, None]                      # imag part basis
    br = np.pad(br, ((0, 0), (0, N_FREQS_PAD - N_FREQS)))
    bi = np.pad(bi, ((0, 0), (0, N_FREQS_PAD - N_FREQS)))
    return np.concatenate([br, bi], axis=1).astype(np.float32)   # (1024, 1280)


def _build_mel_filterbank() -> np.ndarray:
    """torchaudio.functional.melscale_fbanks, mel_scale='htk', norm=None.
    Shape (n_freqs_pad, n_mels_pad), zero-padded rows and columns."""
    all_freqs = np.linspace(0.0, SAMPLE_RATE / 2.0, N_FREQS)

    def hz_to_mel(f):
        return 2595.0 * np.log10(1.0 + f / 700.0)

    def mel_to_hz(m):
        return 700.0 * (10.0 ** (m / 2595.0) - 1.0)

    m_min, m_max = hz_to_mel(0.0), hz_to_mel(SAMPLE_RATE / 2.0)
    m_pts = np.linspace(m_min, m_max, N_MELS + 2)
    f_pts = mel_to_hz(m_pts)
    f_diff = f_pts[1:] - f_pts[:-1]                     # (n_mels+1,)
    slopes = f_pts[None, :] - all_freqs[:, None]        # (n_freqs, n_mels+2)
    down = -slopes[:, :-2] / f_diff[:-1]
    up = slopes[:, 2:] / f_diff[1:]
    fb = np.maximum(0.0, np.minimum(down, up)).astype(np.float32)  # (n_freqs, n_mels)
    fb = np.pad(fb, ((0, N_FREQS_PAD - N_FREQS), (0, N_MELS_PAD - N_MELS)))
    return fb                                            # (640, 128)


# Constants built once at import; bf16 DFT basis for the big MXU pass, f32 mel fb
# so the (small) mel projection runs at full precision.
_BASIS_BF16 = jnp.asarray(_build_dft_basis(), dtype=jnp.bfloat16)      # (1024, 1280)
_MEL_FB_F32 = jnp.asarray(_build_mel_filterbank(), dtype=jnp.float32)  # (640, 128)


def _mel_kernel(cur_ref, nxt_ref, basis_ref, fb_ref, out_ref, ext_ref, acc_ref):
    """Per-tile: hop-decomposed STFT matmul -> magnitude -> mel -> clamp(1e-5).log().

    cur_ref : (TILE_ROWS, 256) f32   hop rows [i*TR, (i+1)*TR)
    nxt_ref : (8, 256)        f32    first hop rows of the next tile (frame overlap)
    basis   : (1024, 1280)    bf16   windowed [cos | -sin] DFT basis
    fb      : (640, 128)      f32    mel filterbank (zero-padded)
    ext     : (TILE_ROWS+8, 256) f32 scratch: contiguous hop slab for shifted views
    acc     : (TILE_ROWS, 1280) f32  scratch: STFT re|im accumulator
    """
    tr = cur_ref.shape[0]
    # Stage the contiguous hop slab so the 4 frame-shifted views are cheap
    # sublane-offset loads from VMEM (no HBM re-read of overlapping frames).
    ext_ref[pl.ds(0, tr), :] = cur_ref[...]
    ext_ref[pl.ds(tr, OVERLAP_ROWS), :] = nxt_ref[...]

    for j in range(N_CHUNKS):   # static unroll: 4 shifted (TR,256)x(256,1280) matmuls
        slab = ext_ref[pl.ds(j, tr), :].astype(jnp.bfloat16)
        contrib = jnp.dot(slab, basis_ref[pl.ds(j * HOP_LENGTH, HOP_LENGTH), :],
                          preferred_element_type=jnp.float32)
        if j == 0:
            acc_ref[...] = contrib
        else:
            acc_ref[...] += contrib

    y = acc_ref[...]                                     # (TR, 1280) f32
    re = y[:, :N_FREQS_PAD]
    im = y[:, N_FREQS_PAD:]
    mag = jnp.sqrt(re * re + im * im)                    # f32, power = 1
    mel = jnp.dot(mag, fb_ref[...], preferred_element_type=jnp.float32)  # f32 x f32
    out_ref[...] = jnp.log(jnp.maximum(mel, 1e-5))


@jax.jit
def mel_spectrogram(t: jax.Array) -> jax.Array:
    """Input (B, T) or (B, 1, T) float32 -> (B, n_mel_channels, T') float32 (log-mel)."""
    if t.ndim == 3:
        t = jnp.squeeze(t, axis=1)
    assert t.ndim == 2, f"expected 2D or 3D input, got {t.ndim}D"
    B, T = t.shape

    pad = FILTER_LENGTH // 2
    num_frames = 1 + T // HOP_LENGTH                    # valid: win_length == n_fft, center

    # Adaptive row tile: 512 for long audio, shrink for short clips so the batch
    # axis still gives >= 2 grid steps (keeps both v7x TensorCores busy).
    tile_rows = min(TILE_ROWS_MAX, _round_up(num_frames, 8))
    num_row_tiles = _cdiv(num_frames, tile_rows)
    rows_pad = num_row_tiles * tile_rows
    # One extra tile of hop rows so the "next tile" BlockSpec (i+1) is always in range.
    hops_padded = (num_row_tiles + 1) * tile_rows

    # center=True: reflect-pad n_fft//2 both sides (torch.stft pad_mode='reflect'),
    # then zero-extend so the signal reshapes exactly into hop rows.  Real frames
    # never read the zero tail; padded rows are discarded after the kernel.
    # TODO(synk): reflect pad and the final (B,T',M)->(B,M,T') transpose stay in XLA
    # glue (O(T) elementwise); could be folded into the kernel with edge DMAs if needed.
    x = jnp.pad(t, ((0, 0), (pad, pad)), mode="reflect")
    x = jnp.pad(x, ((0, 0), (0, hops_padded * HOP_LENGTH - x.shape[1])))
    hops = x.reshape(B, hops_padded, HOP_LENGTH)        # f32; bf16 cast happens in-kernel

    rows = B * num_frames
    flops = 2 * rows * (FILTER_LENGTH * BASIS_COLS + N_FREQS_PAD * N_MELS_PAD)
    transcendentals = rows * (N_FREQS_PAD + N_MELS_PAD)           # sqrt + log
    bytes_accessed = (hops.size * 4 + _BASIS_BF16.size * 2 + _MEL_FB_F32.size * 4
                      + B * rows_pad * N_MELS_PAD * 4)

    out = pl.pallas_call(
        _mel_kernel,
        out_shape=jax.ShapeDtypeStruct((B, rows_pad, N_MELS_PAD), jnp.float32),
        grid=(B, num_row_tiles),
        in_specs=[
            # streamed hop rows of the current tile
            pl.BlockSpec((None, tile_rows, HOP_LENGTH), lambda b, i: (b, i, 0)),
            # first 8 hop rows of the next tile (frame overlap across the boundary)
            pl.BlockSpec((None, OVERLAP_ROWS, HOP_LENGTH),
                         lambda b, i: (b, (i + 1) * (tile_rows // OVERLAP_ROWS), 0)),
            # grid-invariant operands: VMEM-resident, single-buffered
            pl.BlockSpec((FILTER_LENGTH, BASIS_COLS), lambda b, i: (0, 0),
                         pipeline_mode=pl.Buffered(1)),
            pl.BlockSpec((N_FREQS_PAD, N_MELS_PAD), lambda b, i: (0, 0),
                         pipeline_mode=pl.Buffered(1)),
        ],
        out_specs=pl.BlockSpec((None, tile_rows, N_MELS_PAD), lambda b, i: (b, i, 0)),
        scratch_shapes=[
            pltpu.VMEM((tile_rows + OVERLAP_ROWS, HOP_LENGTH), jnp.float32),  # hop slab
            pltpu.VMEM((tile_rows, BASIS_COLS), jnp.float32),                 # STFT acc
        ],
        compiler_params=pltpu.CompilerParams(
            dimension_semantics=("parallel", "parallel"),   # megacore sharding on v7x
            vmem_limit_bytes=32 * 1024 * 1024,
        ),
        cost_estimate=pl.CostEstimate(flops=flops, transcendentals=transcendentals,
                                      bytes_accessed=bytes_accessed),
    )(hops, hops, _BASIS_BF16, _MEL_FB_F32)

    # (B, rows_pad, n_mels_pad) -> (B, n_mels, T')
    out = out[:, :num_frames, :N_MELS]
    return out.transpose(0, 2, 1)


if __name__ == "__main__":
    key = jax.random.PRNGKey(0)
    B, T = 2, 2048                      # small audio clip: 2 waveforms of 2048 samples
    t = jax.random.normal(key, (B, T), dtype=jnp.float32)

    mel = mel_spectrogram(t)
    jax.block_until_ready(mel)

    expected_frames = 1 + T // HOP_LENGTH
    assert mel.shape == (B, N_MELS, expected_frames), mel.shape
    assert mel.dtype == jnp.float32
    assert bool(jnp.all(jnp.isfinite(mel)))
    print("KERNEL_OK")
</pallas_src>

<mosaic_0001>
module attributes {stable_mosaic.version = 11 : i64} {
  func.func @_mel_kernel(%arg0: i32, %arg1: i32, %arg2: memref<1x16x256xf32, #tpu.memory_space<vmem>>, %arg3: memref<1x8x256xf32, #tpu.memory_space<vmem>>, %arg4: memref<1024x1280xbf16, #tpu.memory_space<vmem>>, %arg5: memref<640x128xf32, #tpu.memory_space<vmem>>, %arg6: memref<1x16x128xf32, #tpu.memory_space<vmem>>, %arg7: memref<24x256xf32, #tpu.memory_space<vmem>>, %arg8: memref<16x1280xf32, #tpu.memory_space<vmem>>) attributes {dimension_semantics = [#tpu.dimension_semantics<parallel>, #tpu.dimension_semantics<parallel>], iteration_bounds = array<i64: 2, 1>, scalar_prefetch = 0 : i64, scratch_operands = 2 : i64, tpu.core_type = #tpu.core_type<tc>, window_params = [{transform_indices = @transform_0, window_bounds = array<i64: 1, 16, 256>}, {transform_indices = @transform_1, window_bounds = array<i64: 1, 8, 256>}, {pipeline_mode = #tpu.pipeline_mode<synchronous>, transform_indices = @transform_2, window_bounds = array<i64: 1024, 1280>}, {pipeline_mode = #tpu.pipeline_mode<synchronous>, transform_indices = @transform_3, window_bounds = array<i64: 640, 128>}, {transform_indices = @transform_4, window_bounds = array<i64: 1, 16, 128>}]} {
    %c0 = arith.constant 0 : index
    %c0_0 = arith.constant 0 : index
    %c0_1 = arith.constant 0 : index
    %0 = vector.load %arg2[%c0, %c0_0, %c0_1] : memref<1x16x256xf32, #tpu.memory_space<vmem>>, vector<1x16x256xf32>
    %1 = vector.shape_cast %0 : vector<1x16x256xf32> to vector<16x256xf32>
    %c0_2 = arith.constant 0 : index
    %c0_3 = arith.constant 0 : index
    %2 = vector.load %arg7[%c0_2, %c0_3] : memref<24x256xf32, #tpu.memory_space<vmem>>, vector<16x256xf32>
    tpu.vector_store %arg7[%c0_2, %c0_3], %1 {strides = array<i32>} : memref<24x256xf32, #tpu.memory_space<vmem>>, vector<16x256xf32>,
    %c0_4 = arith.constant 0 : index
    %c0_5 = arith.constant 0 : index
    %c0_6 = arith.constant 0 : index
    %3 = vector.load %arg3[%c0_4, %c0_5, %c0_6] : memref<1x8x256xf32, #tpu.memory_space<vmem>>, vector<1x8x256xf32>
    %4 = vector.shape_cast %3 : vector<1x8x256xf32> to vector<8x256xf32>
    %c16 = arith.constant 16 : index
    %c0_7 = arith.constant 0 : index
    %5 = vector.load %arg7[%c16, %c0_7] : memref<24x256xf32, #tpu.memory_space<vmem>>, vector<8x256xf32>
    tpu.vector_store %arg7[%c16, %c0_7], %4 {strides = array<i32>} : memref<24x256xf32, #tpu.memory_space<vmem>>, vector<8x256xf32>,
    %c0_8 = arith.constant 0 : index
    %c0_9 = arith.constant 0 : index
    %6 = vector.load %arg7[%c0_8, %c0_9] : memref<24x256xf32, #tpu.memory_space<vmem>>, vector<16x256xf32>
    %7 = arith.truncf %6 : vector<16x256xf32> to vector<16x256xbf16>
    %c0_10 = arith.constant 0 : index
    %c0_11 = arith.constant 0 : index
    %8 = vector.load %arg4[%c0_10, %c0_11] : memref<1024x1280xbf16, #tpu.memory_space<vmem>>, vector<256x1280xbf16>
    %cst = arith.constant dense<0.000000e+00> : vector<16x1280xf32>
    %9 = tpu.matmul %7, %8, %cst {dimension_numbers = #tpu.dot_dimension_numbers<[1], [0], [0], [1], [0, 0, 1, 1], [], []>} : vector<16x256xbf16>, vector<256x1280xbf16>, vector<16x1280xf32> -> vector<16x1280xf32>
    %c0_12 = arith.constant 0 : index
    %c0_13 = arith.constant 0 : index
    %10 = vector.load %arg8[%c0_12, %c0_13] : memref<16x1280xf32, #tpu.memory_space<vmem>>, vector<16x1280xf32>
    tpu.vector_store %arg8[%c0_12, %c0_13], %9 {strides = array<i32>} : memref<16x1280xf32, #tpu.memory_space<vmem>>, vector<16x1280xf32>,
    %c1 = arith.constant 1 : index
    %c0_14 = arith.constant 0 : index
    %11 = vector.load %arg7[%c1, %c0_14] : memref<24x256xf32, #tpu.memory_space<vmem>>, vector<16x256xf32>
    %12 = arith.truncf %11 : vector<16x256xf32> to vector<16x256xbf16>
    %c256 = arith.constant 256 : index
    %c0_15 = arith.constant 0 : index
    %13 = vector.load %arg4[%c256, %c0_15] : memref<1024x1280xbf16, #tpu.memory_space<vmem>>, vector<256x1280xbf16>
    %cst_16 = arith.constant dense<0.000000e+00> : vector<16x1280xf32>
    %14 = tpu.matmul %12, %13, %cst_16 {dimension_numbers = #tpu.dot_dimension_numbers<[1], [0], [0], [1], [0, 0, 1, 1], [], []>} : vector<16x256xbf16>, vector<256x1280xbf16>, vector<16x1280xf32> -> vector<16x1280xf32>
    %c0_17 = arith.constant 0 : index
    %c0_18 = arith.constant 0 : index
    %15 = vector.load %arg8[%c0_17, %c0_18] : memref<16x1280xf32, #tpu.memory_space<vmem>>, vector<16x1280xf32>
    %16 = arith.addf %15, %14 : vector<16x1280xf32>
    %c0_19 = arith.constant 0 : index
    %c0_20 = arith.constant 0 : index
    %17 = vector.load %arg8[%c0_19, %c0_20] : memref<16x1280xf32, #tpu.memory_space<vmem>>, vector<16x1280xf32>
    tpu.vector_store %arg8[%c0_19, %c0_20], %16 {strides = array<i32>} : memref<16x1280xf32, #tpu.memory_space<vmem>>, vector<16x1280xf32>,
    %c2 = arith.constant 2 : index
    %c0_21 = arith.constant 0 : index
    %18 = vector.load %arg7[%c2, %c0_21] : memref<24x256xf32, #tpu.memory_space<vmem>>, vector<16x256xf32>
    %19 = arith.truncf %18 : vector<16x256xf32> to vector<16x256xbf16>
    %c512 = arith.constant 512 : index
    %c0_22 = arith.constant 0 : index
    %20 = vector.load %arg4[%c512, %c0_22] : memref<1024x1280xbf16, #tpu.memory_space<vmem>>, vector<256x1280xbf16>
    %cst_23 = arith.constant dense<0.000000e+00> : vector<16x1280xf32>
    %21 = tpu.matmul %19, %20, %cst_23 {dimension_numbers = #tpu.dot_dimension_numbers<[1], [0], [0], [1], [0, 0, 1, 1], [], []>} : vector<16x256xbf16>, vector<256x1280xbf16>, vector<16x1280xf32> -> vector<16x1280xf32>
    %c0_24 = arith.constant 0 : index
    %c0_25 = arith.constant 0 : index
    %22 = vector.load %arg8[%c0_24, %c0_25] : memref<16x1280xf32, #tpu.memory_space<vmem>>, vector<16x1280xf32>
    %23 = arith.addf %22, %21 : vector<16x1280xf32>
    %c0_26 = arith.constant 0 : index
    %c0_27 = arith.constant 0 : index
    %24 = vector.load %arg8[%c0_26, %c0_27] : memref<16x1280xf32, #tpu.memory_space<vmem>>, vector<16x1280xf32>
    tpu.vector_store %arg8[%c0_26, %c0_27], %23 {strides = array<i32>} : memref<16x1280xf32, #tpu.memory_space<vmem>>, vector<16x1280xf32>,
    %c3 = arith.constant 3 : index
    %c0_28 = arith.constant 0 : index
    %25 = vector.load %arg7[%c3, %c0_28] : memref<24x256xf32, #tpu.memory_space<vmem>>, vector<16x256xf32>
    %26 = arith.truncf %25 : vector<16x256xf32> to vector<16x256xbf16>
    %c768 = arith.constant 768 : index
    %c0_29 = arith.constant 0 : index
    %27 = vector.load %arg4[%c768, %c0_29] : memref<1024x1280xbf16, #tpu.memory_space<vmem>>, vector<256x1280xbf16>
    %cst_30 = arith.constant dense<0.000000e+00> : vector<16x1280xf32>
    %28 = tpu.matmul %26, %27, %cst_30 {dimension_numbers = #tpu.dot_dimension_numbers<[1], [0], [0], [1], [0, 0, 1, 1], [], []>} : vector<16x256xbf16>, vector<256x1280xbf16>, vector<16x1280xf32> -> vector<16x1280xf32>
    %c0_31 = arith.constant 0 : index
    %c0_32 = arith.constant 0 : index
    %29 = vector.load %arg8[%c0_31, %c0_32] : memref<16x1280xf32, #tpu.memory_space<vmem>>, vector<16x1280xf32>
    %30 = arith.addf %29, %28 : vector<16x1280xf32>
    %c0_33 = arith.constant 0 : index
    %c0_34 = arith.constant 0 : index
    %31 = vector.load %arg8[%c0_33, %c0_34] : memref<16x1280xf32, #tpu.memory_space<vmem>>, vector<16x1280xf32>
    tpu.vector_store %arg8[%c0_33, %c0_34], %30 {strides = array<i32>} : memref<16x1280xf32, #tpu.memory_space<vmem>>, vector<16x1280xf32>,
    %c0_35 = arith.constant 0 : index
    %c0_36 = arith.constant 0 : index
    %32 = vector.load %arg8[%c0_35, %c0_36] : memref<16x1280xf32, #tpu.memory_space<vmem>>, vector<16x1280xf32>
    %33 = vector.extract_strided_slice %32 {offsets = [0, 0], sizes = [16, 640], strides = [1, 1]} : vector<16x1280xf32> to vector<16x640xf32>
    %34 = vector.extract_strided_slice %32 {offsets = [0, 640], sizes = [16, 640], strides = [1, 1]} : vector<16x1280xf32> to vector<16x640xf32>
    %35 = arith.mulf %33, %33 : vector<16x640xf32>
    %36 = arith.mulf %34, %34 : vector<16x640xf32>
    %37 = arith.addf %35, %36 : vector<16x640xf32>
    %38 = math.sqrt %37 : vector<16x640xf32>
    %c0_37 = arith.constant 0 : index
    %c0_38 = arith.constant 0 : index
    %39 = vector.load %arg5[%c0_37, %c0_38] : memref<640x128xf32, #tpu.memory_space<vmem>>, vector<640x128xf32>
    %cst_39 = arith.constant dense<0.000000e+00> : vector<16x128xf32>
    %40 = tpu.matmul %38, %39, %cst_39 {dimension_numbers = #tpu.dot_dimension_numbers<[1], [0], [0], [1], [0, 0, 1, 1], [], []>} : vector<16x640xf32>, vector<640x128xf32>, vector<16x128xf32> -> vector<16x128xf32>
    %cst_40 = arith.constant 9.99999974E-6 : f32
    %41 = vector.broadcast %cst_40 : f32 to vector<16x128xf32>
    %42 = arith.maximumf %40, %41 : vector<16x128xf32>
    %43 = math.log %42 : vector<16x128xf32>
    %c0_41 = arith.constant 0 : index
    %c0_42 = arith.constant 0 : index
    %c0_43 = arith.constant 0 : index
    %44 = vector.load %arg6[%c0_41, %c0_42, %c0_43] : memref<1x16x128xf32, #tpu.memory_space<vmem>>, vector<1x16x128xf32>
    %45 = vector.shape_cast %44 : vector<1x16x128xf32> to vector<16x128xf32>
    %46 = vector.shape_cast %43 : vector<16x128xf32> to vector<1x16x128xf32>
    tpu.vector_store %arg6[%c0_41, %c0_42, %c0_43], %46 {strides = array<i32>} : memref<1x16x128xf32, #tpu.memory_space<vmem>>, vector<1x16x128xf32>,
    return
  }
  func.func @transform_0(%arg0: i32, %arg1: i32) -> (i32, i32, i32) {
    %c0_i32 = arith.constant 0 : i32
    %c0_i32_0 = arith.constant 0 : i32
    return %arg0, %arg1, %c0_i32 : i32, i32, i32
  }
  func.func @transform_1(%arg0: i32, %arg1: i32) -> (i32, i32, i32) {
    %c1_i32 = arith.constant 1 : i32
    %0 = arith.addi %arg1, %c1_i32 : i32
    %c2_i32 = arith.constant 2 : i32
    %1 = arith.muli %0, %c2_i32 : i32
    %c0_i32 = arith.constant 0 : i32
    %c0_i32_0 = arith.constant 0 : i32
    return %arg0, %1, %c0_i32 : i32, i32, i32
  }
  func.func @transform_2(%arg0: i32, %arg1: i32) -> (i32, i32) {
    %c0_i32 = arith.constant 0 : i32
    %c0_i32_0 = arith.constant 0 : i32
    %c0_i32_1 = arith.constant 0 : i32
    return %c0_i32, %c0_i32_0 : i32, i32
  }
  func.func @transform_3(%arg0: i32, %arg1: i32) -> (i32, i32) {
    %c0_i32 = arith.constant 0 : i32
    %c0_i32_0 = arith.constant 0 : i32
    %c0_i32_1 = arith.constant 0 : i32
    return %c0_i32, %c0_i32_0 : i32, i32
  }
  func.func @transform_4(%arg0: i32, %arg1: i32) -> (i32, i32, i32) {
    %c0_i32 = arith.constant 0 : i32
    %c0_i32_0 = arith.constant 0 : i32
    return %arg0, %arg1, %c0_i32 : i32, i32, i32
  }
}

</mosaic_0001>

<llo_original>
// kernel: mel_spectrogram.1
$region0: #{mel_spectrogram.1}
  #allocation0 [shape = 'u32[]', space=smem, size = 0x4, offset = 0x4, fixed_abs, tag = 'smem constant byte address 0x4 - core index']
  #allocation1 [shape = 'u32[144,128]{1,0:T(1,128)}', space=vmem, size = 0x12000, scoped, tag = 'internal scratch']
  #allocation2 [shape = 'f32[24,256]{1,0:T(8,128)}', space=vmem, size = 0x6000, scoped, tag = 'scratch operand']
  #allocation3 [shape = 'f32[16,1280]{1,0:T(8,128)}', space=vmem, size = 0x14000, scoped, tag = 'scratch operand']
  %s0 = inlined_call_operand.vmem [shape: f32[2,32,256], index: 0, kind: input, shape index: {}, may-alias: {0,1}]
  %s1 = inlined_call_operand.vmem [shape: f32[2,32,256], index: 1, kind: input, shape index: {}, may-alias: {0,1}]
  %s2 = inlined_call_operand.vmem [shape: bf16[1024,1280], index: 2, kind: input, shape index: {}]
  %s3 = inlined_call_operand.vmem [shape: f32[640,128], index: 3, kind: input, shape index: {}]
  %s4 = inlined_call_operand.vmem [shape: f32[2,16,128], index: 4, kind: output, shape index: {}]
  %s5 = sld [smem:[#allocation0]]
  $region49: #{mel_spectrogram.1} parent=0
    _
  %s7 = ssub.s32 1, %s5
  %s8 = scalar_select 0, %s7, %s5
  loop: start=0, step=1, limit=4
  $region2: #{mel_spectrogram.1} parent=0 // loop_pre_header
    _
  $region3: #{mel_spectrogram.1} parent=0 // loop_header
    %s10 = sphi 0, %s14
    %p11 = scmp.ge.s32.totalorder %s10, 4
    %s17 = sphi 0, %s29
    %s18 = sphi 0, %s25
    %s19 = sphi 0, %s17
    %s20 = sphi 0, %s18
    %s21 = sphi 0, %s19
    %s22 = sphi 0, %s20
    %s34 = sphi 0, %s36
    %s37 = sphi 0, %s34
    %s38 = sphi 0, %s37
    %s54 = sphi 0, %s38
    %s66 = sphi 0, %s68
    %s69 = sphi 0, %s66
    %s70 = sphi 0, %s69
    %s86 = sphi 0, %s70
    %s90 = sphi 0, %s90
    %s92 = sphi 0, %s90
    %s93 = sphi 0, %s92
    %s107 = sphi 0, %s93
    %s111 = sphi 0, %s111
    %s113 = sphi 0, %s111
    %s114 = sphi 0, %s113
    %s128 = sphi 0, %s114
    %s136 = sphi 0, %s138
    %s139 = sphi 0, %s136
    %s140 = sphi 0, %s139
    %s156 = sphi 0, %s140
  $region4: #{mel_spectrogram.1} parent=0 // loop_header_branch
    %13 = sbr.rel (%p11) target = $region8
  $region5: #{mel_spectrogram.1} parent=0 // loop_body
    %s15 = ssub.s32 %s10, 1
    %s16 = ssub.s32 %s10, 2
    %s23 = sadd.s32 1, %s18
    %p24 = scmp.ge.s32.totalorder %s23, 1
    %s25 = scalar_select %p24, 0, %s23
    %s26 = sadd.s32 1, %s17
    %s27 = scalar_select %p24, %s26, %s17
    %p28 = scmp.ge.s32.totalorder %s27, 2
    %s29 = scalar_select %p28, 0, %s27
    %s30 = ssub.s32 %s17, %s29
    %s31 = ssub.s32 %s18, %s25
    %s32 = sor.u32 %s30, %s31
    %p33 = scmp.eq.s32.totalorder %s32, 0
    %s35 = sadd.s32 %s34, 1
    %s36 = scalar_select %p33, %s34, %s35
    %p39 = pneg %p33
    %p40 = scmp.eq.s32.totalorder %s10, 1
    %p41 = por %p39, %p40
    %p42 = scmp.ne.s32.totalorder %s34, %s37
    %p43 = scmp.eq.s32.totalorder %s10, 0
    %p44 = por %p42, %p43
    %p45 = scmp.ne.s32.totalorder %s34, %s37
    %p46 = scmp.eq.s32.totalorder %s15, 1
    %p47 = por %p45, %p46
    %p48 = scmp.ne.s32.totalorder %s37, %s38
    %p49 = scmp.eq.s32.totalorder %s15, 0
    %p50 = por %p48, %p49
    %p51 = scmp.ne.s32.totalorder %s37, %s38
    %p52 = scmp.eq.s32.totalorder %s16, 1
    %p53 = por %p51, %p52
    %p55 = scmp.ne.s32.totalorder %s38, %s54
    %p56 = scmp.eq.s32.totalorder %s16, 0
    %p57 = por %p55, %p56
    %s58 = sadd.s32 %s18, 1
    %s59 = smul.u32 %s58, 2
    %s60 = sadd.s32 %s25, 1
    %s61 = smul.u32 %s60, 2
    %s62 = ssub.s32 %s17, %s29
    %s63 = ssub.s32 %s59, %s61
    %s64 = sor.u32 %s62, %s63
    %p65 = scmp.eq.s32.totalorder %s64, 0
    %s67 = sadd.s32 %s66, 1
    %s68 = scalar_select %p65, %s66, %s67
    %p71 = pneg %p65
    %p72 = scmp.eq.s32.totalorder %s10, 1
    %p73 = por %p71, %p72
    %p74 = scmp.ne.s32.totalorder %s66, %s69
    %p75 = scmp.eq.s32.totalorder %s10, 0
    %p76 = por %p74, %p75
    %p77 = scmp.ne.s32.totalorder %s66, %s69
    %p78 = scmp.eq.s32.totalorder %s15, 1
    %p79 = por %p77, %p78
    %p80 = scmp.ne.s32.totalorder %s69, %s70
    %p81 = scmp.eq.s32.totalorder %s15, 0
    %p82 = por %p80, %p81
    %p83 = scmp.ne.s32.totalorder %s69, %s70
    %p84 = scmp.eq.s32.totalorder %s16, 1
    %p85 = por %p83, %p84
    %p87 = scmp.ne.s32.totalorder %s70, %s86
    %p88 = scmp.eq.s32.totalorder %s16, 0
    %p89 = por %p87, %p88
    %s91 = sadd.s32 %s90, 1
    %p94 = scmp.eq.s32.totalorder %s10, 1
    %p95 = scmp.ne.s32.totalorder %s90, %s92
    %p96 = scmp.eq.s32.totalorder %s10, 0
    %p97 = por %p95, %p96
    %p98 = scmp.ne.s32.totalorder %s90, %s92
    %p99 = scmp.eq.s32.totalorder %s15, 1
    %p100 = por %p98, %p99
    %p101 = scmp.ne.s32.totalorder %s92, %s93
    %p102 = scmp.eq.s32.totalorder %s15, 0
    %p103 = por %p101, %p102
    %p104 = scmp.ne.s32.totalorder %s92, %s93
    %p105 = scmp.eq.s32.totalorder %s16, 1
    %p106 = por %p104, %p105
    %p108 = scmp.ne.s32.totalorder %s93, %s107
    %p109 = scmp.eq.s32.totalorder %s16, 0
    %p110 = por %p108, %p109
    %s112 = sadd.s32 %s111, 1
    %p115 = scmp.eq.s32.totalorder %s10, 1
    %p116 = scmp.ne.s32.totalorder %s111, %s113
    %p117 = scmp.eq.s32.totalorder %s10, 0
    %p118 = por %p116, %p117
    %p119 = scmp.ne.s32.totalorder %s111, %s113
    %p120 = scmp.eq.s32.totalorder %s15, 1
    %p121 = por %p119, %p120
    %p122 = scmp.ne.s32.totalorder %s113, %s114
    %p123 = scmp.eq.s32.totalorder %s15, 0
    %p124 = por %p122, %p123
    %p125 = scmp.ne.s32.totalorder %s113, %s114
    %p126 = scmp.eq.s32.totalorder %s16, 1
    %p127 = por %p125, %p126
    %p129 = scmp.ne.s32.totalorder %s114, %s128
    %p130 = scmp.eq.s32.totalorder %s16, 0
    %p131 = por %p129, %p130
    %s132 = ssub.s32 %s17, %s29
    %s133 = ssub.s32 %s18, %s25
    %s134 = sor.u32 %s132, %s133
    %p135 = scmp.eq.s32.totalorder %s134, 0
    %s137 = sadd.s32 %s136, 1
    %s138 = scalar_select %p135, %s136, %s137
    %p141 = pneg %p135
    %p142 = scmp.eq.s32.totalorder %s10, 1
    %p143 = por %p141, %p142
    %p144 = scmp.ne.s32.totalorder %s136, %s139
    %p145 = scmp.eq.s32.totalorder %s10, 0
    %p146 = por %p144, %p145
    %p147 = scmp.ne.s32.totalorder %s136, %s139
    %p148 = scmp.eq.s32.totalorder %s15, 1
    %p149 = por %p147, %p148
    %p150 = scmp.ne.s32.totalorder %s139, %s140
    %p151 = scmp.eq.s32.totalorder %s15, 0
    %p152 = por %p150, %p151
    %p153 = scmp.ne.s32.totalorder %s139, %s140
    %p154 = scmp.eq.s32.totalorder %s16, 1
    %p155 = por %p153, %p154
    %p157 = scmp.ne.s32.totalorder %s140, %s156
    %p158 = scmp.eq.s32.totalorder %s16, 0
    %p159 = por %p157, %p158
    %p160 = scmp.le.s32.totalorder 1, %s10
    %p161 = scmp.lt.s32.totalorder %s10, 3
    %p162 = pnand %p160, %p161
    %p163 = pneg %p162
    // Predicated region
    $region9: #{mel_spectrogram.1} parent=5 // pred_check
      _
    $region10: #{mel_spectrogram.1} parent=5 // pred_check_branch
      %165 = sbr.rel (%p162) target = $region12
    $region11: #{mel_spectrogram.1} parent=5 // pred_region
      %s166 = ssub.s32 %s10, 1
      // Predicated region
      $region13: #{mel_spectrogram.1} parent=11 // pred_check
        %p167 = pneg %p103
      $region14: #{mel_spectrogram.1} parent=11 // pred_check_branch
        %169 = sbr.rel (%p167) target = $region16
      $region15: #{mel_spectrogram.1} parent=11 // pred_region
        _
      $region16: #{mel_spectrogram.1} parent=11 // pred_fallthru
        _
      // Predicated region
      $region17: #{mel_spectrogram.1} parent=11 // pred_check
        %p170 = pneg %p124
      $region18: #{mel_spectrogram.1} parent=11 // pred_check_branch
        %172 = sbr.rel (%p170) target = $region20
      $region19: #{mel_spectrogram.1} parent=11 // pred_region
        _
      $region20: #{mel_spectrogram.1} parent=11 // pred_fallthru
        _
    $region12: #{mel_spectrogram.1} parent=5 // pred_fallthru
      _
    %p173 = scmp.lt.s32.totalorder %s10, 2
    // Predicated region
    $region21: #{mel_spectrogram.1} parent=5 // pred_check
      %p174 = pneg %p173
    $region22: #{mel_spectrogram.1} parent=5 // pred_check_branch
      %176 = sbr.rel (%p174) target = $region24
    $region23: #{mel_spectrogram.1} parent=5 // pred_region
      // Predicated region
      $region25: #{mel_spectrogram.1} parent=23 // pred_check
        %p177 = pneg %p44
      $region26: #{mel_spectrogram.1} parent=23 // pred_check_branch
        %179 = sbr.rel (%p177) target = $region28
      $region27: #{mel_spectrogram.1} parent=23 // pred_region
        %s180 = smul.u32 2, %s18
        %p181 = scmp.lt.s32.totalorder %s17, 1
        %s182 = scalar_select %p181, %s17, 1
        %p183 = scmp.lt.s32.totalorder %s180, 3
        %s184 = scalar_select %p183, %s180, 3
        %s185 = smul.addr %s184, 2
        %s186 = smul.addr %s182, 8
        %s187 = sadd.s32 %s185, %s186
        %s188 = smul.addr %s187, 8
        %s189 = scalar_lea.vmem %s0, %s188
        %s190 = smul.u32 2, %s18
      $region28: #{mel_spectrogram.1} parent=23 // pred_fallthru
        _
      // Predicated region
      $region29: #{mel_spectrogram.1} parent=23 // pred_check
        %p191 = pneg %p76
      $region30: #{mel_spectrogram.1} parent=23 // pred_check_branch
        %193 = sbr.rel (%p191) target = $region32
      $region31: #{mel_spectrogram.1} parent=23 // pred_region
        %s194 = sadd.s32 %s18, 1
        %s195 = smul.u32 %s194, 2
        %p196 = scmp.lt.s32.totalorder %s17, 1
        %s197 = scalar_select %p196, %s17, 1
        %p198 = scmp.lt.s32.totalorder %s195, 3
        %s199 = scalar_select %p198, %s195, 3
        %s200 = smul.addr %s199, 2
        %s201 = smul.addr %s197, 8
        %s202 = sadd.s32 %s200, %s201
        %s203 = smul.addr %s202, 8
        %s204 = scalar_lea.vmem %s1, %s203
        %s205 = sadd.s32 %s18, 1
        %s206 = smul.u32 %s205, 2
      $region32: #{mel_spectrogram.1} parent=23 // pred_fallthru
        _
    $region24: #{mel_spectrogram.1} parent=5 // pred_fallthru
      _
    %p207 = scmp.le.s32.totalorder 1, %s10
    %p208 = scmp.lt.s32.totalorder %s10, 3
    %p209 = pnand %p207, %p208
    %p210 = pneg %p209
    // Predicated region
    $region33: #{mel_spectrogram.1} parent=5 // pred_check
      _
    $region34: #{mel_spectrogram.1} parent=5 // pred_check_branch
      %212 = sbr.rel (%p209) target = $region36
    $region35: #{mel_spectrogram.1} parent=5 // pred_region
      %s213 = ssub.s32 %s10, 1
      %s214 = smul.u32 2, %s20
      %p215 = scmp.lt.s32.totalorder %s19, 1
      %s216 = scalar_select %p215, %s19, 1
      %p217 = scmp.lt.s32.totalorder %s214, 3
      %s218 = scalar_select %p217, %s214, 3
      %s219 = smul.addr %s218, 2
      %s220 = smul.addr %s216, 8
      %s221 = sadd.s32 %s219, %s220
      %s222 = smul.addr %s221, 8
      %s223 = scalar_lea.vmem %s0, %s222
      %p224 = pneg %p50
      %p225 = pneg %p47
      %s226 = sadd.s32 %s20, 1
      %s227 = smul.u32 %s226, 2
      %p228 = scmp.lt.s32.totalorder %s19, 1
      %s229 = scalar_select %p228, %s19, 1
      %p230 = scmp.lt.s32.totalorder %s227, 3
      %s231 = scalar_select %p230, %s227, 3
      %s232 = smul.addr %s231, 2
      %s233 = smul.addr %s229, 8
      %s234 = sadd.s32 %s232, %s233
      %s235 = smul.addr %s234, 8
      %s236 = scalar_lea.vmem %s1, %s235
      %p237 = pneg %p82
      %p238 = pneg %p79
      %p239 = pneg %p103
      %p240 = pneg %p100
      %p241 = pneg %p124
      %p242 = pneg %p121
      %p243 = pneg %p152
      %p244 = pneg %p149
      %s245 = smul.u32 2, %s20
      %p246 = scmp.lt.s32.totalorder %s19, 1
      %s247 = scalar_select %p246, %s19, 1
      %p248 = scmp.lt.s32.totalorder %s245, 1
      %s249 = scalar_select %p248, %s245, 1
      %s250 = smul.addr %s247, 2
      %s251 = sadd.s32 %s249, %s250
      %s252 = smul.addr %s251, 8
      %s253 = scalar_lea.vmem %s4, %s252
      %s254 = smul.u32 2, %s20
      %p255 = scmp.lt.s32.totalorder %s19, 1
      %s256 = scalar_select %p255, %s19, 1
      %p257 = scmp.lt.s32.totalorder %s254, 3
      %s258 = scalar_select %p257, %s254, 3
      %s259 = smul.addr %s258, 2
      %s260 = smul.addr %s256, 8
      %s261 = sadd.s32 %s259, %s260
      %s262 = smul.addr %s261, 8
      %s263 = scalar_lea.vmem %s0, %s262
      %s264 = smul.u32 2, %s20
      %s265 = sadd.s32 %s20, 1
      %s266 = smul.u32 %s265, 2
      %p267 = scmp.lt.s32.totalorder %s19, 1
      %s268 = scalar_select %p267, %s19, 1
      %p269 = scmp.lt.s32.totalorder %s266, 3
      %s270 = scalar_select %p269, %s266, 3
      %s271 = smul.addr %s270, 2
      %s272 = smul.addr %s268, 8
      %s273 = sadd.s32 %s271, %s272
      %s274 = smul.addr %s273, 8
      %s275 = scalar_lea.vmem %s1, %s274
      %s276 = sadd.s32 %s20, 1
      %s277 = smul.u32 %s276, 2
      %s278 = smul.u32 2, %s20
      %p279 = scmp.lt.s32.totalorder %s19, 1
      %s280 = scalar_select %p279, %s19, 1
      %p281 = scmp.lt.s32.totalorder %s278, 1
      %s282 = scalar_select %p281, %s278, 1
      %s283 = smul.addr %s280, 2
      %s284 = sadd.s32 %s282, %s283
      %s285 = smul.addr %s284, 8
      %s286 = scalar_lea.vmem %s4, %s285
      %s287 = smul.u32 2, %s20
      %v288 = vld [vmem:[%s263] sm:$0xff]
      %v289 = vld [vmem:[%s263 + $0x8] sm:$0xff]
      %v290 = vld [vmem:[%s263 + $0x10] sm:$0xff]
      %v291 = vld [vmem:[%s263 + $0x18] sm:$0xff]
      %292 = vst [vmem:[#allocation2] sm:$0xff] %v288
      %293 = vst [vmem:[#allocation2 + $0x8] sm:$0xff] %v289
      %294 = vst [vmem:[#allocation2 + $0x10] sm:$0xff] %v290
      %295 = vst [vmem:[#allocation2 + $0x18] sm:$0xff] %v291
      %v296 = vld [vmem:[%s275] sm:$0xff]
      %v297 = vld [vmem:[%s275 + $0x8] sm:$0xff]
      %298 = vst [vmem:[#allocation2 + $0x20] sm:$0xff] %v296
      %299 = vst [vmem:[#allocation2 + $0x28] sm:$0xff] %v297
      %v300 = vld [vmem:[#allocation2] sm:$0xff]
      %v301 = vld [vmem:[#allocation2 + $0x8] sm:$0xff]
      %v302 = vld [vmem:[#allocation2 + $0x10] sm:$0xff]
      %v303 = vld [vmem:[#allocation2 + $0x18] sm:$0xff]
      %v304 = vpack.c.bf16 %v302, %v300
      %v305 = vpack.c.bf16 %v303, %v301
      %v306 = vld [vmem:[%s2] sm:$0xff]
      %v307 = vld [vmem:[%s2 + $0x8] sm:$0xff]
      %v308 = vld [vmem:[%s2 + $0x10] sm:$0xff]
      %v309 = vld [vmem:[%s2 + $0x18] sm:$0xff]
      %v310 = vld [vmem:[%s2 + $0x20] sm:$0xff]
      %v311 = vld [vmem:[%s2 + $0x28] sm:$0xff]
      %v312 = vld [vmem:[%s2 + $0x30] sm:$0xff]
      %v313 = vld [vmem:[%s2 + $0x38] sm:$0xff]
      %v314 = vld [vmem:[%s2 + $0x40] sm:$0xff]
      %v315 = vld [vmem:[%s2 + $0x48] sm:$0xff]
      %v316 = vld [vmem:[%s2 + $0x50] sm:$0xff]
      %v317 = vld [vmem:[%s2 + $0x58] sm:$0xff]
      %v318 = vld [vmem:[%s2 + $0x60] sm:$0xff]
      %v319 = vld [vmem:[%s2 + $0x68] sm:$0xff]
      %v320 = vld [vmem:[%s2 + $0x70] sm:$0xff]
      %v321 = vld [vmem:[%s2 + $0x78] sm:$0xff]
      %v322 = vld [vmem:[%s2 + $0x80] sm:$0xff]
      %v323 = vld [vmem:[%s2 + $0x88] sm:$0xff]
      %v324 = vld [vmem:[%s2 + $0x90] sm:$0xff]
      %v325 = vld [vmem:[%s2 + $0x98] sm:$0xff]
      %v326 = vld [vmem:[%s2 + $0xa0] sm:$0xff]
      %v327 = vld [vmem:[%s2 + $0xa8] sm:$0xff]
      %v328 = vld [vmem:[%s2 + $0xb0] sm:$0xff]
      %v329 = vld [vmem:[%s2 + $0xb8] sm:$0xff]
      %v330 = vld [vmem:[%s2 + $0xc0] sm:$0xff]
      %v331 = vld [vmem:[%s2 + $0xc8] sm:$0xff]
      %v332 = vld [vmem:[%s2 + $0xd0] sm:$0xff]
      %v333 = vld [vmem:[%s2 + $0xd8] sm:$0xff]
      %v334 = vld [vmem:[%s2 + $0xe0] sm:$0xff]
      %v335 = vld [vmem:[%s2 + $0xe8] sm:$0xff]
      %v336 = vld [vmem:[%s2 + $0xf0] sm:$0xff]
      %v337 = vld [vmem:[%s2 + $0xf8] sm:$0xff]
      %v338 = vld [vmem:[%s2 + $0x100] sm:$0xff]
      %v339 = vld [vmem:[%s2 + $0x108] sm:$0xff]
      %v340 = vld [vmem:[%s2 + $0x110] sm:$0xff]
      %v341 = vld [vmem:[%s2 + $0x118] sm:$0xff]
      %v342 = vld [vmem:[%s2 + $0x120] sm:$0xff]
      %v343 = vld [vmem:[%s2 + $0x128] sm:$0xff]
      %v344 = vld [vmem:[%s2 + $0x130] sm:$0xff]
      %v345 = vld [vmem:[%s2 + $0x138] sm:$0xff]
      %v346 = vld [vmem:[%s2 + $0x140] sm:$0xff]
      %v347 = vld [vmem:[%s2 + $0x148] sm:$0xff]
      %v348 = vld [vmem:[%s2 + $0x150] sm:$0xff]
      %v349 = vld [vmem:[%s2 + $0x158] sm:$0xff]
      %v350 = vld [vmem:[%s2 + $0x160] sm:$0xff]
      %v351 = vld [vmem:[%s2 + $0x168] sm:$0xff]
      %v352 = vld [vmem:[%s2 + $0x170] sm:$0xff]
      %v353 = vld [vmem:[%s2 + $0x178] sm:$0xff]
      %v354 = vld [vmem:[%s2 + $0x180] sm:$0xff]
      %v355 = vld [vmem:[%s2 + $0x188] sm:$0xff]
      %v356 = vld [vmem:[%s2 + $0x190] sm:$0xff]
      %v357 = vld [vmem:[%s2 + $0x198] sm:$0xff]
      %v358 = vld [vmem:[%s2 + $0x1a0] sm:$0xff]
      %v359 = vld [vmem:[%s2 + $0x1a8] sm:$0xff]
      %v360 = vld [vmem:[%s2 + $0x1b0] sm:$0xff]
      %v361 = vld [vmem:[%s2 + $0x1b8] sm:$0xff]
      %v362 = vld [vmem:[%s2 + $0x1c0] sm:$0xff]
      %v363 = vld [vmem:[%s2 + $0x1c8] sm:$0xff]
      %v364 = vld [vmem:[%s2 + $0x1d0] sm:$0xff]
      %v365 = vld [vmem:[%s2 + $0x1d8] sm:$0xff]
      %v366 = vld [vmem:[%s2 + $0x1e0] sm:$0xff]
      %v367 = vld [vmem:[%s2 + $0x1e8] sm:$0xff]
      %v368 = vld [vmem:[%s2 + $0x1f0] sm:$0xff]
      %v369 = vld [vmem:[%s2 + $0x1f8] sm:$0xff]
      %v370 = vld [vmem:[%s2 + $0x200] sm:$0xff]
      %v371 = vld [vmem:[%s2 + $0x208] sm:$0xff]
      %v372 = vld [vmem:[%s2 + $0x210] sm:$0xff]
      %v373 = vld [vmem:[%s2 + $0x218] sm:$0xff]
      %v374 = vld [vmem:[%s2 + $0x220] sm:$0xff]
      %v375 = vld [vmem:[%s2 + $0x228] sm:$0xff]
      %v376 = vld [vmem:[%s2 + $0x230] sm:$0xff]
      %v377 = vld [vmem:[%s2 + $0x238] sm:$0xff]
      %v378 = vld [vmem:[%s2 + $0x240] sm:$0xff]
      %v379 = vld [vmem:[%s2 + $0x248] sm:$0xff]
      %v380 = vld [vmem:[%s2 + $0x250] sm:$0xff]
      %v381 = vld [vmem:[%s2 + $0x258] sm:$0xff]
      %v382 = vld [vmem:[%s2 + $0x260] sm:$0xff]
      %v383 = vld [vmem:[%s2 + $0x268] sm:$0xff]
      %v384 = vld [vmem:[%s2 + $0x270] sm:$0xff]
      %v385 = vld [vmem:[%s2 + $0x278] sm:$0xff]
      %v386 = vld [vmem:[%s2 + $0x280] sm:$0xff]
      %v387 = vld [vmem:[%s2 + $0x288] sm:$0xff]
      %v388 = vld [vmem:[%s2 + $0x290] sm:$0xff]
      %v389 = vld [vmem:[%s2 + $0x298] sm:$0xff]
      %v390 = vld [vmem:[%s2 + $0x2a0] sm:$0xff]
      %v391 = vld [vmem:[%s2 + $0x2a8] sm:$0xff]
      %v392 = vld [vmem:[%s2 + $0x2b0] sm:$0xff]
      %v393 = vld [vmem:[%s2 + $0x2b8] sm:$0xff]
      %v394 = vld [vmem:[%s2 + $0x2c0] sm:$0xff]
      %v395 = vld [vmem:[%s2 + $0x2c8] sm:$0xff]
      %v396 = vld [vmem:[%s2 + $0x2d0] sm:$0xff]
      %v397 = vld [vmem:[%s2 + $0x2d8] sm:$0xff]
      %v398 = vld [vmem:[%s2 + $0x2e0] sm:$0xff]
      %v399 = vld [vmem:[%s2 + $0x2e8] sm:$0xff]
      %v400 = vld [vmem:[%s2 + $0x2f0] sm:$0xff]
      %v401 = vld [vmem:[%s2 + $0x2f8] sm:$0xff]
      %v402 = vld [vmem:[%s2 + $0x300] sm:$0xff]
      %v403 = vld [vmem:[%s2 + $0x308] sm:$0xff]
      %v404 = vld [vmem:[%s2 + $0x310] sm:$0xff]
      %v405 = vld [vmem:[%s2 + $0x318] sm:$0xff]
      %v406 = vld [vmem:[%s2 + $0x320] sm:$0xff]
      %v407 = vld [vmem:[%s2 + $0x328] sm:$0xff]
      %v408 = vld [vmem:[%s2 + $0x330] sm:$0xff]
      %v409 = vld [vmem:[%s2 + $0x338] sm:$0xff]
      %v410 = vld [vmem:[%s2 + $0x340] sm:$0xff]
      %v411 = vld [vmem:[%s2 + $0x348] sm:$0xff]
      %v412 = vld [vmem:[%s2 + $0x350] sm:$0xff]
      %v413 = vld [vmem:[%s2 + $0x358] sm:$0xff]
      %v414 = vld [vmem:[%s2 + $0x360] sm:$0xff]
      %v415 = vld [vmem:[%s2 + $0x368] sm:$0xff]
      %v416 = vld [vmem:[%s2 + $0x370] sm:$0xff]
      %v417 = vld [vmem:[%s2 + $0x378] sm:$0xff]
      %v418 = vld [vmem:[%s2 + $0x380] sm:$0xff]
      %v419 = vld [vmem:[%s2 + $0x388] sm:$0xff]
      %v420 = vld [vmem:[%s2 + $0x390] sm:$0xff]
      %v421 = vld [vmem:[%s2 + $0x398] sm:$0xff]
      %v422 = vld [vmem:[%s2 + $0x3a0] sm:$0xff]
      %v423 = vld [vmem:[%s2 + $0x3a8] sm:$0xff]
      %v424 = vld [vmem:[%s2 + $0x3b0] sm:$0xff]
      %v425 = vld [vmem:[%s2 + $0x3b8] sm:$0xff]
      %v426 = vld [vmem:[%s2 + $0x3c0] sm:$0xff]
      %v427 = vld [vmem:[%s2 + $0x3c8] sm:$0xff]
      %v428 = vld [vmem:[%s2 + $0x3d0] sm:$0xff]
      %v429 = vld [vmem:[%s2 + $0x3d8] sm:$0xff]
      %v430 = vld [vmem:[%s2 + $0x3e0] sm:$0xff]
      %v431 = vld [vmem:[%s2 + $0x3e8] sm:$0xff]
      %v432 = vld [vmem:[%s2 + $0x3f0] sm:$0xff]
      %v433 = vld [vmem:[%s2 + $0x3f8] sm:$0xff]
      %v434 = vld [vmem:[%s2 + $0x400] sm:$0xff]
      %v435 = vld [vmem:[%s2 + $0x408] sm:$0xff]
      %v436 = vld [vmem:[%s2 + $0x410] sm:$0xff]
      %v437 = vld [vmem:[%s2 + $0x418] sm:$0xff]
      %v438 = vld [vmem:[%s2 + $0x420] sm:$0xff]
      %v439 = vld [vmem:[%s2 + $0x428] sm:$0xff]
      %v440 = vld [vmem:[%s2 + $0x430] sm:$0xff]
      %v441 = vld [vmem:[%s2 + $0x438] sm:$0xff]
      %v442 = vld [vmem:[%s2 + $0x440] sm:$0xff]
      %v443 = vld [vmem:[%s2 + $0x448] sm:$0xff]
      %v444 = vld [vmem:[%s2 + $0x450] sm:$0xff]
      %v445 = vld [vmem:[%s2 + $0x458] sm:$0xff]
      %v446 = vld [vmem:[%s2 + $0x460] sm:$0xff]
      %v447 = vld [vmem:[%s2 + $0x468] sm:$0xff]
      %v448 = vld [vmem:[%s2 + $0x470] sm:$0xff]
      %v449 = vld [vmem:[%s2 + $0x478] sm:$0xff]
      %v450 = vld [vmem:[%s2 + $0x480] sm:$0xff]
      %v451 = vld [vmem:[%s2 + $0x488] sm:$0xff]
      %v452 = vld [vmem:[%s2 + $0x490] sm:$0xff]
      %v453 = vld [vmem:[%s2 + $0x498] sm:$0xff]
      %v454 = vld [vmem:[%s2 + $0x4a0] sm:$0xff]
      %v455 = vld [vmem:[%s2 + $0x4a8] sm:$0xff]
      %v456 = vld [vmem:[%s2 + $0x4b0] sm:$0xff]
      %v457 = vld [vmem:[%s2 + $0x4b8] sm:$0xff]
      %v458 = vld [vmem:[%s2 + $0x4c0] sm:$0xff]
      %v459 = vld [vmem:[%s2 + $0x4c8] sm:$0xff]
      %v460 = vld [vmem:[%s2 + $0x4d0] sm:$0xff]
      %v461 = vld [vmem:[%s2 + $0x4d8] sm:$0xff]
      %v462 = vld [vmem:[%s2 + $0x4e0] sm:$0xff]
      %v463 = vld [vmem:[%s2 + $0x4e8] sm:$0xff]
      %v464 = vld [vmem:[%s2 + $0x4f0] sm:$0xff]
      %v465 = vld [vmem:[%s2 + $0x4f8] sm:$0xff]
      %v626 = vunpack.c.l.b16 %v306
      %v627 = vunpack.c.h.b16 %v306
      %v628 = vunpack.c.l.b16 %v307
      %v629 = vunpack.c.h.b16 %v307
      %v630 = vunpack.c.l.b16 %v308
      %v631 = vunpack.c.h.b16 %v308
      %v632 = vunpack.c.l.b16 %v309
      %v633 = vunpack.c.h.b16 %v309
      %v634 = vunpack.c.l.b16 %v310
      %v635 = vunpack.c.h.b16 %v310
      %v636 = vunpack.c.l.b16 %v311
      %v637 = vunpack.c.h.b16 %v311
      %v638 = vunpack.c.l.b16 %v312
      %v639 = vunpack.c.h.b16 %v312
      %v640 = vunpack.c.l.b16 %v313
      %v641 = vunpack.c.h.b16 %v313
      %v642 = vunpack.c.l.b16 %v314
      %v643 = vunpack.c.h.b16 %v314
      %v644 = vunpack.c.l.b16 %v315
      %v645 = vunpack.c.h.b16 %v315
      %v646 = vunpack.c.l.b16 %v316
      %v647 = vunpack.c.h.b16 %v316
      %v648 = vunpack.c.l.b16 %v317
      %v649 = vunpack.c.h.b16 %v317
      %v650 = vunpack.c.l.b16 %v318
      %v651 = vunpack.c.h.b16 %v318
      %v652 = vunpack.c.l.b16 %v319
      %v653 = vunpack.c.h.b16 %v319
      %v654 = vunpack.c.l.b16 %v320
      %v655 = vunpack.c.h.b16 %v320
      %v656 = vunpack.c.l.b16 %v321
      %v657 = vunpack.c.h.b16 %v321
      %v658 = vunpack.c.l.b16 %v322
      %v659 = vunpack.c.h.b16 %v322
      %v660 = vunpack.c.l.b16 %v323
      %v661 = vunpack.c.h.b16 %v323
      %v662 = vunpack.c.l.b16 %v324
      %v663 = vunpack.c.h.b16 %v324
      %v664 = vunpack.c.l.b16 %v325
      %v665 = vunpack.c.h.b16 %v325
      %v666 = vunpack.c.l.b16 %v326
      %v667 = vunpack.c.h.b16 %v326
      %v668 = vunpack.c.l.b16 %v327
      %v669 = vunpack.c.h.b16 %v327
      %v670 = vunpack.c.l.b16 %v328
      %v671 = vunpack.c.h.b16 %v328
      %v672 = vunpack.c.l.b16 %v329
      %v673 = vunpack.c.h.b16 %v329
      %v674 = vunpack.c.l.b16 %v330
      %v675 = vunpack.c.h.b16 %v330
      %v676 = vunpack.c.l.b16 %v331
      %v677 = vunpack.c.h.b16 %v331
      %v678 = vunpack.c.l.b16 %v332
      %v679 = vunpack.c.h.b16 %v332
      %v680 = vunpack.c.l.b16 %v333
      %v681 = vunpack.c.h.b16 %v333
      %v682 = vunpack.c.l.b16 %v334
      %v683 = vunpack.c.h.b16 %v334
      %v684 = vunpack.c.l.b16 %v335
      %v685 = vunpack.c.h.b16 %v335
      %v686 = vunpack.c.l.b16 %v336
      %v687 = vunpack.c.h.b16 %v336
      %v688 = vunpack.c.l.b16 %v337
      %v689 = vunpack.c.h.b16 %v337
      %v690 = vunpack.c.l.b16 %v338
      %v691 = vunpack.c.h.b16 %v338
      %v692 = vunpack.c.l.b16 %v339
      %v693 = vunpack.c.h.b16 %v339
      %v694 = vunpack.c.l.b16 %v340
      %v695 = vunpack.c.h.b16 %v340
      %v696 = vunpack.c.l.b16 %v341
      %v697 = vunpack.c.h.b16 %v341
      %v698 = vunpack.c.l.b16 %v342
      %v699 = vunpack.c.h.b16 %v342
      %v700 = vunpack.c.l.b16 %v343
      %v701 = vunpack.c.h.b16 %v343
      %v702 = vunpack.c.l.b16 %v344
      %v703 = vunpack.c.h.b16 %v344
      %v704 = vunpack.c.l.b16 %v345
      %v705 = vunpack.c.h.b16 %v345
      %v706 = vunpack.c.l.b16 %v346
      %v707 = vunpack.c.h.b16 %v346
      %v708 = vunpack.c.l.b16 %v347
      %v709 = vunpack.c.h.b16 %v347
      %v710 = vunpack.c.l.b16 %v348
      %v711 = vunpack.c.h.b16 %v348
      %v712 = vunpack.c.l.b16 %v349
      %v713 = vunpack.c.h.b16 %v349
      %v714 = vunpack.c.l.b16 %v350
      %v715 = vunpack.c.h.b16 %v350
      %v716 = vunpack.c.l.b16 %v351
      %v717 = vunpack.c.h.b16 %v351
      %v718 = vunpack.c.l.b16 %v352
      %v719 = vunpack.c.h.b16 %v352
      %v720 = vunpack.c.l.b16 %v353
      %v721 = vunpack.c.h.b16 %v353
      %v722 = vunpack.c.l.b16 %v354
      %v723 = vunpack.c.h.b16 %v354
      %v724 = vunpack.c.l.b16 %v355
      %v725 = vunpack.c.h.b16 %v355
      %v726 = vunpack.c.l.b16 %v356
      %v727 = vunpack.c.h.b16 %v356
      %v728 = vunpack.c.l.b16 %v357
      %v729 = vunpack.c.h.b16 %v357
      %v730 = vunpack.c.l.b16 %v358
      %v731 = vunpack.c.h.b16 %v358
      %v732 = vunpack.c.l.b16 %v359
      %v733 = vunpack.c.h.b16 %v359
      %v734 = vunpack.c.l.b16 %v360
      %v735 = vunpack.c.h.b16 %v360
      %v736 = vunpack.c.l.b16 %v361
      %v737 = vunpack.c.h.b16 %v361
      %v738 = vunpack.c.l.b16 %v362
      %v739 = vunpack.c.h.b16 %v362
      %v740 = vunpack.c.l.b16 %v363
      %v741 = vunpack.c.h.b16 %v363
      %v742 = vunpack.c.l.b16 %v364
      %v743 = vunpack.c.h.b16 %v364
      %v744 = vunpack.c.l.b16 %v365
      %v745 = vunpack.c.h.b16 %v365
      %v746 = vunpack.c.l.b16 %v366
      %v747 = vunpack.c.h.b16 %v366
      %v748 = vunpack.c.l.b16 %v367
      %v749 = vunpack.c.h.b16 %v367
      %v750 = vunpack.c.l.b16 %v368
      %v751 = vunpack.c.h.b16 %v368
      %v752 = vunpack.c.l.b16 %v369
      %v753 = vunpack.c.h.b16 %v369
      %v754 = vunpack.c.l.b16 %v370
      %v755 = vunpack.c.h.b16 %v370
      %v756 = vunpack.c.l.b16 %v371
      %v757 = vunpack.c.h.b16 %v371
      %v758 = vunpack.c.l.b16 %v372
      %v759 = vunpack.c.h.b16 %v372
      %v760 = vunpack.c.l.b16 %v373
      %v761 = vunpack.c.h.b16 %v373
      %v762 = vunpack.c.l.b16 %v374
      %v763 = vunpack.c.h.b16 %v374
      %v764 = vunpack.c.l.b16 %v375
      %v765 = vunpack.c.h.b16 %v375
      %v766 = vunpack.c.l.b16 %v376
      %v767 = vunpack.c.h.b16 %v376
      %v768 = vunpack.c.l.b16 %v377
      %v769 = vunpack.c.h.b16 %v377
      %v770 = vunpack.c.l.b16 %v378
      %v771 = vunpack.c.h.b16 %v378
      %v772 = vunpack.c.l.b16 %v379
      %v773 = vunpack.c.h.b16 %v379
      %v774 = vunpack.c.l.b16 %v380
      %v775 = vunpack.c.h.b16 %v380
      %v776 = vunpack.c.l.b16 %v381
      %v777 = vunpack.c.h.b16 %v381
      %v778 = vunpack.c.l.b16 %v382
      %v779 = vunpack.c.h.b16 %v382
      %v780 = vunpack.c.l.b16 %v383
      %v781 = vunpack.c.h.b16 %v383
      %v782 = vunpack.c.l.b16 %v384
      %v783 = vunpack.c.h.b16 %v384
      %v784 = vunpack.c.l.b16 %v385
      %v785 = vunpack.c.h.b16 %v385
      %v786 = vunpack.c.l.b16 %v386
      %v787 = vunpack.c.h.b16 %v386
      %v788 = vunpack.c.l.b16 %v387
      %v789 = vunpack.c.h.b16 %v387
      %v790 = vunpack.c.l.b16 %v388
      %v791 = vunpack.c.h.b16 %v388
      %v792 = vunpack.c.l.b16 %v389
      %v793 = vunpack.c.h.b16 %v389
      %v794 = vunpack.c.l.b16 %v390
      %v795 = vunpack.c.h.b16 %v390
      %v796 = vunpack.c.l.b16 %v391
      %v797 = vunpack.c.h.b16 %v391
      %v798 = vunpack.c.l.b16 %v392
      %v799 = vunpack.c.h.b16 %v392
      %v800 = vunpack.c.l.b16 %v393
      %v801 = vunpack.c.h.b16 %v393
      %v802 = vunpack.c.l.b16 %v394
      %v803 = vunpack.c.h.b16 %v394
      %v804 = vunpack.c.l.b16 %v395
      %v805 = vunpack.c.h.b16 %v395
      %v806 = vunpack.c.l.b16 %v396
      %v807 = vunpack.c.h.b16 %v396
      %v808 = vunpack.c.l.b16 %v397
      %v809 = vunpack.c.h.b16 %v397
      %v810 = vunpack.c.l.b16 %v398
      %v811 = vunpack.c.h.b16 %v398
      %v812 = vunpack.c.l.b16 %v399
      %v813 = vunpack.c.h.b16 %v399
      %v814 = vunpack.c.l.b16 %v400
      %v815 = vunpack.c.h.b16 %v400
      %v816 = vunpack.c.l.b16 %v401
      %v817 = vunpack.c.h.b16 %v401
      %v818 = vunpack.c.l.b16 %v402
      %v819 = vunpack.c.h.b16 %v402
      %v820 = vunpack.c.l.b16 %v403
      %v821 = vunpack.c.h.b16 %v403
      %v822 = vunpack.c.l.b16 %v404
      %v823 = vunpack.c.h.b16 %v404
      %v824 = vunpack.c.l.b16 %v405
      %v825 = vunpack.c.h.b16 %v405
      %v826 = vunpack.c.l.b16 %v406
      %v827 = vunpack.c.h.b16 %v406
      %v828 = vunpack.c.l.b16 %v407
      %v829 = vunpack.c.h.b16 %v407
      %v830 = vunpack.c.l.b16 %v408
      %v831 = vunpack.c.h.b16 %v408
      %v832 = vunpack.c.l.b16 %v409
      %v833 = vunpack.c.h.b16 %v409
      %v834 = vunpack.c.l.b16 %v410
      %v835 = vunpack.c.h.b16 %v410
      %v836 = vunpack.c.l.b16 %v411
      %v837 = vunpack.c.h.b16 %v411
      %v838 = vunpack.c.l.b16 %v412
      %v839 = vunpack.c.h.b16 %v412
      %v840 = vunpack.c.l.b16 %v413
      %v841 = vunpack.c.h.b16 %v413
      %v842 = vunpack.c.l.b16 %v414
      %v843 = vunpack.c.h.b16 %v414
      %v844 = vunpack.c.l.b16 %v415
      %v845 = vunpack.c.h.b16 %v415
      %v846 = vunpack.c.l.b16 %v416
      %v847 = vunpack.c.h.b16 %v416
      %v848 = vunpack.c.l.b16 %v417
      %v849 = vunpack.c.h.b16 %v417
      %v850 = vunpack.c.l.b16 %v418
      %v851 = vunpack.c.h.b16 %v418
      %v852 = vunpack.c.l.b16 %v419
      %v853 = vunpack.c.h.b16 %v419
      %v854 = vunpack.c.l.b16 %v420
      %v855 = vunpack.c.h.b16 %v420
      %v856 = vunpack.c.l.b16 %v421
      %v857 = vunpack.c.h.b16 %v421
      %v858 = vunpack.c.l.b16 %v422
      %v859 = vunpack.c.h.b16 %v422
      %v860 = vunpack.c.l.b16 %v423
      %v861 = vunpack.c.h.b16 %v423
      %v862 = vunpack.c.l.b16 %v424
      %v863 = vunpack.c.h.b16 %v424
      %v864 = vunpack.c.l.b16 %v425
      %v865 = vunpack.c.h.b16 %v425
      %v866 = vunpack.c.l.b16 %v426
      %v867 = vunpack.c.h.b16 %v426
      %v868 = vunpack.c.l.b16 %v427
      %v869 = vunpack.c.h.b16 %v427
      %v870 = vunpack.c.l.b16 %v428
      %v871 = vunpack.c.h.b16 %v428
      %v872 = vunpack.c.l.b16 %v429
      %v873 = vunpack.c.h.b16 %v429
      %v874 = vunpack.c.l.b16 %v430
      %v875 = vunpack.c.h.b16 %v430
      %v876 = vunpack.c.l.b16 %v431
      %v877 = vunpack.c.h.b16 %v431
      %v878 = vunpack.c.l.b16 %v432
      %v879 = vunpack.c.h.b16 %v432
      %v880 = vunpack.c.l.b16 %v433
      %v881 = vunpack.c.h.b16 %v433
      %v882 = vunpack.c.l.b16 %v434
      %v883 = vunpack.c.h.b16 %v434
      %v884 = vunpack.c.l.b16 %v435
      %v885 = vunpack.c.h.b16 %v435
      %v886 = vunpack.c.l.b16 %v436
      %v887 = vunpack.c.h.b16 %v436
      %v888 = vunpack.c.l.b16 %v437
      %v889 = vunpack.c.h.b16 %v437
      %v890 = vunpack.c.l.b16 %v438
      %v891 = vunpack.c.h.b16 %v438
      %v892 = vunpack.c.l.b16 %v439
      %v893 = vunpack.c.h.b16 %v439
      %v894 = vunpack.c.l.b16 %v440
      %v895 = vunpack.c.h.b16 %v440
      %v896 = vunpack.c.l.b16 %v441
      %v897 = vunpack.c.h.b16 %v441
      %v898 = vunpack.c.l.b16 %v442
      %v899 = vunpack.c.h.b16 %v442
      %v900 = vunpack.c.l.b16 %v443
      %v901 = vunpack.c.h.b16 %v443
      %v902 = vunpack.c.l.b16 %v444
      %v903 = vunpack.c.h.b16 %v444
      %v904 = vunpack.c.l.b16 %v445
      %v905 = vunpack.c.h.b16 %v445
      %v906 = vunpack.c.l.b16 %v446
      %v907 = vunpack.c.h.b16 %v446
      %v908 = vunpack.c.l.b16 %v447
      %v909 = vunpack.c.h.b16 %v447
      %v910 = vunpack.c.l.b16 %v448
      %v911 = vunpack.c.h.b16 %v448
      %v912 = vunpack.c.l.b16 %v449
      %v913 = vunpack.c.h.b16 %v449
      %v914 = vunpack.c.l.b16 %v450
      %v915 = vunpack.c.h.b16 %v450
      %v916 = vunpack.c.l.b16 %v451
      %v917 = vunpack.c.h.b16 %v451
      %v918 = vunpack.c.l.b16 %v452
      %v919 = vunpack.c.h.b16 %v452
      %v920 = vunpack.c.l.b16 %v453
      %v921 = vunpack.c.h.b16 %v453
      %v922 = vunpack.c.l.b16 %v454
      %v923 = vunpack.c.h.b16 %v454
      %v924 = vunpack.c.l.b16 %v455
      %v925 = vunpack.c.h.b16 %v455
      %v926 = vunpack.c.l.b16 %v456
      %v927 = vunpack.c.h.b16 %v456
      %v928 = vunpack.c.l.b16 %v457
      %v929 = vunpack.c.h.b16 %v457
      %v930 = vunpack.c.l.b16 %v458
      %v931 = vunpack.c.h.b16 %v458
      %v932 = vunpack.c.l.b16 %v459
      %v933 = vunpack.c.h.b16 %v459
      %v934 = vunpack.c.l.b16 %v460
      %v935 = vunpack.c.h.b16 %v460
      %v936 = vunpack.c.l.b16 %v461
      %v937 = vunpack.c.h.b16 %v461
      %v938 = vunpack.c.l.b16 %v462
      %v939 = vunpack.c.h.b16 %v462
      %v940 = vunpack.c.l.b16 %v463
      %v941 = vunpack.c.h.b16 %v463
      %v942 = vunpack.c.l.b16 %v464
      %v943 = vunpack.c.h.b16 %v464
      %v944 = vunpack.c.l.b16 %v465
      %v945 = vunpack.c.h.b16 %v465
      %v946 = vpack.c.b16 %v636, %v626
      %v947 = vpack.c.b16 %v637, %v627
      %v948 = vpack.c.b16 %v638, %v628
      %v949 = vpack.c.b16 %v639, %v629
      %v950 = vpack.c.b16 %v640, %v630
      %v951 = vpack.c.b16 %v641, %v631
      %v952 = vpack.c.b16 %v642, %v632
      %v953 = vpack.c.b16 %v643, %v633
      %v954 = vpack.c.b16 %v644, %v634
      %v955 = vpack.c.b16 %v645, %v635
      %v956 = vpack.c.b16 %v656, %v646
      %v957 = vpack.c.b16 %v657, %v647
      %v958 = vpack.c.b16 %v658, %v648
      %v959 = vpack.c.b16 %v659, %v649
      %v960 = vpack.c.b16 %v660, %v650
      %v961 = vpack.c.b16 %v661, %v651
      %v962 = vpack.c.b16 %v662, %v652
      %v963 = vpack.c.b16 %v663, %v653
      %v964 = vpack.c.b16 %v664, %v654
      %v965 = vpack.c.b16 %v665, %v655
      %v966 = vpack.c.b16 %v676, %v666
      %v967 = vpack.c.b16 %v677, %v667
      %v968 = vpack.c.b16 %v678, %v668
      %v969 = vpack.c.b16 %v679, %v669
      %v970 = vpack.c.b16 %v680, %v670
      %v971 = vpack.c.b16 %v681, %v671
      %v972 = vpack.c.b16 %v682, %v672
      %v973 = vpack.c.b16 %v683, %v673
      %v974 = vpack.c.b16 %v684, %v674
      %v975 = vpack.c.b16 %v685, %v675
      %v976 = vpack.c.b16 %v696, %v686
      %v977 = vpack.c.b16 %v697, %v687
      %v978 = vpack.c.b16 %v698, %v688
      %v979 = vpack.c.b16 %v699, %v689
      %v980 = vpack.c.b16 %v700, %v690
      %v981 = vpack.c.b16 %v701, %v691
      %v982 = vpack.c.b16 %v702, %v692
      %v983 = vpack.c.b16 %v703, %v693
      %v984 = vpack.c.b16 %v704, %v694
      %v985 = vpack.c.b16 %v705, %v695
      %v986 = vpack.c.b16 %v716, %v706
      %v987 = vpack.c.b16 %v717, %v707
      %v988 = vpack.c.b16 %v718, %v708
      %v989 = vpack.c.b16 %v719, %v709
      %v990 = vpack.c.b16 %v720, %v710
      %v991 = vpack.c.b16 %v721, %v711
      %v992 = vpack.c.b16 %v722, %v712
      %v993 = vpack.c.b16 %v723, %v713
      %v994 = vpack.c.b16 %v724, %v714
      %v995 = vpack.c.b16 %v725, %v715
      %v996 = vpack.c.b16 %v736, %v726
      %v997 = vpack.c.b16 %v737, %v727
      %v998 = vpack.c.b16 %v738, %v728
      %v999 = vpack.c.b16 %v739, %v729
      %v1000 = vpack.c.b16 %v740, %v730
      %v1001 = vpack.c.b16 %v741, %v731
      %v1002 = vpack.c.b16 %v742, %v732
      %v1003 = vpack.c.b16 %v743, %v733
      %v1004 = vpack.c.b16 %v744, %v734
      %v1005 = vpack.c.b16 %v745, %v735
      %v1006 = vpack.c.b16 %v756, %v746
      %v1007 = vpack.c.b16 %v757, %v747
      %v1008 = vpack.c.b16 %v758, %v748
      %v1009 = vpack.c.b16 %v759, %v749
      %v1010 = vpack.c.b16 %v760, %v750
      %v1011 = vpack.c.b16 %v761, %v751
      %v1012 = vpack.c.b16 %v762, %v752
      %v1013 = vpack.c.b16 %v763, %v753
      %v1014 = vpack.c.b16 %v764, %v754
      %v1015 = vpack.c.b16 %v765, %v755
      %v1016 = vpack.c.b16 %v776, %v766
      %v1017 = vpack.c.b16 %v777, %v767
      %v1018 = vpack.c.b16 %v778, %v768
      %v1019 = vpack.c.b16 %v779, %v769
      %v1020 = vpack.c.b16 %v780, %v770
      %v1021 = vpack.c.b16 %v781, %v771
      %v1022 = vpack.c.b16 %v782, %v772
      %v1023 = vpack.c.b16 %v783, %v773
      %v1024 = vpack.c.b16 %v784, %v774
      %v1025 = vpack.c.b16 %v785, %v775
      %v1026 = vpack.c.b16 %v796, %v786
      %v1027 = vpack.c.b16 %v797, %v787
      %v1028 = vpack.c.b16 %v798, %v788
      %v1029 = vpack.c.b16 %v799, %v789
      %v1030 = vpack.c.b16 %v800, %v790
      %v1031 = vpack.c.b16 %v801, %v791
      %v1032 = vpack.c.b16 %v802, %v792
      %v1033 = vpack.c.b16 %v803, %v793
      %v1034 = vpack.c.b16 %v804, %v794
      %v1035 = vpack.c.b16 %v805, %v795
      %v1036 = vpack.c.b16 %v816, %v806
      %v1037 = vpack.c.b16 %v817, %v807
      %v1038 = vpack.c.b16 %v818, %v808
      %v1039 = vpack.c.b16 %v819, %v809
      %v1040 = vpack.c.b16 %v820, %v810
      %v1041 = vpack.c.b16 %v821, %v811
      %v1042 = vpack.c.b16 %v822, %v812
      %v1043 = vpack.c.b16 %v823, %v813
      %v1044 = vpack.c.b16 %v824, %v814
      %v1045 = vpack.c.b16 %v825, %v815
      %v1046 = vpack.c.b16 %v836, %v826
      %v1047 = vpack.c.b16 %v837, %v827
      %v1048 = vpack.c.b16 %v838, %v828
      %v1049 = vpack.c.b16 %v839, %v829
      %v1050 = vpack.c.b16 %v840, %v830
      %v1051 = vpack.c.b16 %v841, %v831
      %v1052 = vpack.c.b16 %v842, %v832
      %v1053 = vpack.c.b16 %v843, %v833
      %v1054 = vpack.c.b16 %v844, %v834
      %v1055 = vpack.c.b16 %v845, %v835
      %v1056 = vpack.c.b16 %v856, %v846
      %v1057 = vpack.c.b16 %v857, %v847
      %v1058 = vpack.c.b16 %v858, %v848
      %v1059 = vpack.c.b16 %v859, %v849
      %v1060 = vpack.c.b16 %v860, %v850
      %v1061 = vpack.c.b16 %v861, %v851
      %v1062 = vpack.c.b16 %v862, %v852
      %v1063 = vpack.c.b16 %v863, %v853
      %v1064 = vpack.c.b16 %v864, %v854
      %v1065 = vpack.c.b16 %v865, %v855
      %v1066 = vpack.c.b16 %v876, %v866
      %v1067 = vpack.c.b16 %v877, %v867
      %v1068 = vpack.c.b16 %v878, %v868
      %v1069 = vpack.c.b16 %v879, %v869
      %v1070 = vpack.c.b16 %v880, %v870
      %v1071 = vpack.c.b16 %v881, %v871
      %v1072 = vpack.c.b16 %v882, %v872
      %v1073 = vpack.c.b16 %v883, %v873
      %v1074 = vpack.c.b16 %v884, %v874
      %v1075 = vpack.c.b16 %v885, %v875
      %v1076 = vpack.c.b16 %v896, %v886
      %v1077 = vpack.c.b16 %v897, %v887
      %v1078 = vpack.c.b16 %v898, %v888
      %v1079 = vpack.c.b16 %v899, %v889
      %v1080 = vpack.c.b16 %v900, %v890
      %v1081 = vpack.c.b16 %v901, %v891
      %v1082 = vpack.c.b16 %v902, %v892
      %v1083 = vpack.c.b16 %v903, %v893
      %v1084 = vpack.c.b16 %v904, %v894
      %v1085 = vpack.c.b16 %v905, %v895
      %v1086 = vpack.c.b16 %v916, %v906
      %v1087 = vpack.c.b16 %v917, %v907
      %v1088 = vpack.c.b16 %v918, %v908
      %v1089 = vpack.c.b16 %v919, %v909
      %v1090 = vpack.c.b16 %v920, %v910
      %v1091 = vpack.c.b16 %v921, %v911
      %v1092 = vpack.c.b16 %v922, %v912
      %v1093 = vpack.c.b16 %v923, %v913
      %v1094 = vpack.c.b16 %v924, %v914
      %v1095 = vpack.c.b16 %v925, %v915
      %v1096 = vpack.c.b16 %v936, %v926
      %v1097 = vpack.c.b16 %v937, %v927
      %v1098 = vpack.c.b16 %v938, %v928
      %v1099 = vpack.c.b16 %v939, %v929
      %v1100 = vpack.c.b16 %v940, %v930
      %v1101 = vpack.c.b16 %v941, %v931
      %v1102 = vpack.c.b16 %v942, %v932
      %v1103 = vpack.c.b16 %v943, %v933
      %v1104 = vpack.c.b16 %v944, %v934
      %v1105 = vpack.c.b16 %v945, %v935
      %1266 = vmatprep.subr.bf16.mxu0 %v947
      %1267 = vmatpush1.bf16.msra.mxu0 %v946
      %1268 = vmatprep.subr.bf16.mxu0 %v957
      %1269 = vmatpush1.bf16.msra.mxu0 %v956
      %1270 = vmatprep.subr.bf16.mxu0 %v967
      %1271 = vmatpush1.bf16.msra.mxu0 %v966
      %1272 = vmatprep.subr.bf16.mxu0 %v977
      %1273 = vmatpush1.bf16.msra.mxu0 %v976
      %1274 = vmatprep.subr.bf16.mxu0 %v987
      %1275 = vmatpush1.bf16.msra.mxu0 %v986
      %1276 = vmatprep.subr.bf16.mxu0 %v997
      %1277 = vmatpush1.bf16.msra.mxu0 %v996
      %1278 = vmatprep.subr.bf16.mxu0 %v1007
      %1279 = vmatpush1.bf16.msra.mxu0 %v1006
      %1280 = vmatprep.subr.bf16.mxu0 %v1017
      %1281 = vmatpush1.bf16.msra.mxu0 %v1016
      %1282 = vmatprep.subr.bf16.mxu0 %v1027
      %1283 = vmatpush1.bf16.msra.mxu0 %v1026
      %1284 = vmatprep.subr.bf16.mxu0 %v1037
      %1285 = vmatpush1.bf16.msra.mxu0 %v1036
      %1286 = vmatprep.subr.bf16.mxu0 %v1047
      %1287 = vmatpush1.bf16.msra.mxu0 %v1046
      %1288 = vmatprep.subr.bf16.mxu0 %v1057
      %1289 = vmatpush1.bf16.msra.mxu0 %v1056
      %1290 = vmatprep.subr.bf16.mxu0 %v1067
      %1291 = vmatpush1.bf16.msra.mxu0 %v1066
      %1292 = vmatprep.subr.bf16.mxu0 %v1077
      %1293 = vmatpush1.bf16.msra.mxu0 %v1076
      %1294 = vmatprep.subr.bf16.mxu0 %v1087
      %1295 = vmatpush1.bf16.msra.mxu0 %v1086
      %1296 = vmatprep.subr.bf16.mxu0 %v1097
      %1297 = vmatpush1.bf16.msra.mxu0 %v1096
      %1298 = vmatprep.mubr.bf16.mxu0 %v305
      %1299 = vmatmul.mubr.bf16.gmra.mrb[0].mxu0 %v304
      %v1300 = vpop.f32.mrb[0].mxu0
      %v1301 = vadd.f32 0.0, %v1300
      %v1302 = vpop.f32.mrb[0].mxu0
      %v1303 = vadd.f32 0.0, %v1302
      %v1304 = vpop.f32.mrb[0].mxu0
      %v1305 = vadd.f32 0.0, %v1304
      %v1306 = vpop.f32.mrb[0].mxu0
      %v1307 = vadd.f32 0.0, %v1306
      %1308 = vdwg.mxu0
      %1309 = vmatprep.subr.bf16.mxu0 %v949
      %1310 = vmatpush1.bf16.msra.mxu0 %v948
      %1311 = vmatprep.subr.bf16.mxu0 %v959
      %1312 = vmatpush1.bf16.msra.mxu0 %v958
      %1313 = vmatprep.subr.bf16.mxu0 %v969
      %1314 = vmatpush1.bf16.msra.mxu0 %v968
      %1315 = vmatprep.subr.bf16.mxu0 %v979
      %1316 = vmatpush1.bf16.msra.mxu0 %v978
      %1317 = vmatprep.subr.bf16.mxu0 %v989
      %1318 = vmatpush1.bf16.msra.mxu0 %v988
      %1319 = vmatprep.subr.bf16.mxu0 %v999
      %1320 = vmatpush1.bf16.msra.mxu0 %v998
      %1321 = vmatprep.subr.bf16.mxu0 %v1009
      %1322 = vmatpush1.bf16.msra.mxu0 %v1008
      %1323 = vmatprep.subr.bf16.mxu0 %v1019
      %1324 = vmatpush1.bf16.msra.mxu0 %v1018
      %1325 = vmatprep.subr.bf16.mxu0 %v1029
      %1326 = vmatpush1.bf16.msra.mxu0 %v1028
      %1327 = vmatprep.subr.bf16.mxu0 %v1039
      %1328 = vmatpush1.bf16.msra.mxu0 %v1038
      %1329 = vmatprep.subr.bf16.mxu0 %v1049
      %1330 = vmatpush1.bf16.msra.mxu0 %v1048
      %1331 = vmatprep.subr.bf16.mxu0 %v1059
      %1332 = vmatpush1.bf16.msra.mxu0 %v1058
      %1333 = vmatprep.subr.bf16.mxu0 %v1069
      %1334 = vmatpush1.bf16.msra.mxu0 %v1068
      %1335 = vmatprep.subr.bf16.mxu0 %v1079
      %1336 = vmatpush1.bf16.msra.mxu0 %v1078
      %1337 = vmatprep.subr.bf16.mxu0 %v1089
      %1338 = vmatpush1.bf16.msra.mxu0 %v1088
      %1339 = vmatprep.subr.bf16.mxu0 %v1099
      %1340 = vmatpush1.bf16.msra.mxu0 %v1098
      %1341 = vmatprep.mubr.bf16.mxu0 %v305
      %1342 = vmatmul.mubr.bf16.gmra.mrb[0].mxu0 %v304
      %v1343 = vpop.f32.mrb[0].mxu0
      %v1344 = vadd.f32 0.0, %v1343
      %v1345 = vpop.f32.mrb[0].mxu0
      %v1346 = vadd.f32 0.0, %v1345
      %v1347 = vpop.f32.mrb[0].mxu0
      %v1348 = vadd.f32 0.0, %v1347
      %v1349 = vpop.f32.mrb[0].mxu0
      %v1350 = vadd.f32 0.0, %v1349
      %1351 = vdwg.mxu0
      %1352 = vmatprep.subr.bf16.mxu0 %v951
      %1353 = vmatpush1.bf16.msra.mxu0 %v950
      %1354 = vmatprep.subr.bf16.mxu0 %v961
      %1355 = vmatpush1.bf16.msra.mxu0 %v960
      %1356 = vmatprep.subr.bf16.mxu0 %v971
      %1357 = vmatpush1.bf16.msra.mxu0 %v970
      %1358 = vmatprep.subr.bf16.mxu0 %v981
      %1359 = vmatpush1.bf16.msra.mxu0 %v980
      %1360 = vmatprep.subr.bf16.mxu0 %v991
      %1361 = vmatpush1.bf16.msra.mxu0 %v990
      %1362 = vmatprep.subr.bf16.mxu0 %v1001
      %1363 = vmatpush1.bf16.msra.mxu0 %v1000
      %1364 = vmatprep.subr.bf16.mxu0 %v1011
      %1365 = vmatpush1.bf16.msra.mxu0 %v1010
      %1366 = vmatprep.subr.bf16.mxu0 %v1021
      %1367 = vmatpush1.bf16.msra.mxu0 %v1020
      %1368 = vmatprep.subr.bf16.mxu0 %v1031
      %1369 = vmatpush1.bf16.msra.mxu0 %v1030
      %1370 = vmatprep.subr.bf16.mxu0 %v1041
      %1371 = vmatpush1.bf16.msra.mxu0 %v1040
      %1372 = vmatprep.subr.bf16.mxu0 %v1051
      %1373 = vmatpush1.bf16.msra.mxu0 %v1050
      %1374 = vmatprep.subr.bf16.mxu0 %v1061
      %1375 = vmatpush1.bf16.msra.mxu0 %v1060
      %1376 = vmatprep.subr.bf16.mxu0 %v1071
      %1377 = vmatpush1.bf16.msra.mxu0 %v1070
      %1378 = vmatprep.subr.bf16.mxu0 %v1081
      %1379 = vmatpush1.bf16.msra.mxu0 %v1080
      %1380 = vmatprep.subr.bf16.mxu0 %v1091
      %1381 = vmatpush1.bf16.msra.mxu0 %v1090
      %1382 = vmatprep.subr.bf16.mxu0 %v1101
      %1383 = vmatpush1.bf16.msra.mxu0 %v1100
      %1384 = vmatprep.mubr.bf16.mxu0 %v305
      %1385 = vmatmul.mubr.bf16.gmra.mrb[0].mxu0 %v304
      %v1386 = vpop.f32.mrb[0].mxu0
      %v1387 = vadd.f32 0.0, %v1386
      %v1388 = vpop.f32.mrb[0].mxu0
      %v1389 = vadd.f32 0.0, %v1388
      %v1390 = vpop.f32.mrb[0].mxu0
      %v1391 = vadd.f32 0.0, %v1390
      %v1392 = vpop.f32.mrb[0].mxu0
      %v1393 = vadd.f32 0.0, %v1392
      %1394 = vdwg.mxu0
      %1395 = vmatprep.subr.bf16.mxu0 %v953
      %1396 = vmatpush1.bf16.msra.mxu0 %v952
      %1397 = vmatprep.subr.bf16.mxu0 %v963
      %1398 = vmatpush1.bf16.msra.mxu0 %v962
      %1399 = vmatprep.subr.bf16.mxu0 %v973
      %1400 = vmatpush1.bf16.msra.mxu0 %v972
      %1401 = vmatprep.subr.bf16.mxu0 %v983
      %1402 = vmatpush1.bf16.msra.mxu0 %v982
      %1403 = vmatprep.subr.bf16.mxu0 %v993
      %1404 = vmatpush1.bf16.msra.mxu0 %v992
      %1405 = vmatprep.subr.bf16.mxu0 %v1003
      %1406 = vmatpush1.bf16.msra.mxu0 %v1002
      %1407 = vmatprep.subr.bf16.mxu0 %v1013
      %1408 = vmatpush1.bf16.msra.mxu0 %v1012
      %1409 = vmatprep.subr.bf16.mxu0 %v1023
      %1410 = vmatpush1.bf16.msra.mxu0 %v1022
      %1411 = vmatprep.subr.bf16.mxu0 %v1033
      %1412 = vmatpush1.bf16.msra.mxu0 %v1032
      %1413 = vmatprep.subr.bf16.mxu0 %v1043
      %1414 = vmatpush1.bf16.msra.mxu0 %v1042
      %1415 = vmatprep.subr.bf16.mxu0 %v1053
      %1416 = vmatpush1.bf16.msra.mxu0 %v1052
      %1417 = vmatprep.subr.bf16.mxu0 %v1063
      %1418 = vmatpush1.bf16.msra.mxu0 %v1062
      %1419 = vmatprep.subr.bf16.mxu0 %v1073
      %1420 = vmatpush1.bf16.msra.mxu0 %v1072
      %1421 = vmatprep.subr.bf16.mxu0 %v1083
      %1422 = vmatpush1.bf16.msra.mxu0 %v1082
      %1423 = vmatprep.subr.bf16.mxu0 %v1093
      %1424 = vmatpush1.bf16.msra.mxu0 %v1092
      %1425 = vmatprep.subr.bf16.mxu0 %v1103
      %1426 = vmatpush1.bf16.msra.mxu0 %v1102
      %1427 = vmatprep.mubr.bf16.mxu0 %v305
      %1428 = vmatmul.mubr.bf16.gmra.mrb[0].mxu0 %v304
      %v1429 = vpop.f32.mrb[0].mxu0
      %v1430 = vadd.f32 0.0, %v1429
      %v1431 = vpop.f32.mrb[0].mxu0
      %v1432 = vadd.f32 0.0, %v1431
      %v1433 = vpop.f32.mrb[0].mxu0
      %v1434 = vadd.f32 0.0, %v1433
      %v1435 = vpop.f32.mrb[0].mxu0
      %v1436 = vadd.f32 0.0, %v1435
      %1437 = vdwg.mxu0
      %1438 = vmatprep.subr.bf16.mxu0 %v955
      %1439 = vmatpush1.bf16.msra.mxu0 %v954
      %1440 = vmatprep.subr.bf16.mxu0 %v965
      %1441 = vmatpush1.bf16.msra.mxu0 %v964
      %1442 = vmatprep.subr.bf16.mxu0 %v975
      %1443 = vmatpush1.bf16.msra.mxu0 %v974
      %1444 = vmatprep.subr.bf16.mxu0 %v985
      %1445 = vmatpush1.bf16.msra.mxu0 %v984
      %1446 = vmatprep.subr.bf16.mxu0 %v995
      %1447 = vmatpush1.bf16.msra.mxu0 %v994
      %1448 = vmatprep.subr.bf16.mxu0 %v1005
      %1449 = vmatpush1.bf16.msra.mxu0 %v1004
      %1450 = vmatprep.subr.bf16.mxu0 %v1015
      %1451 = vmatpush1.bf16.msra.mxu0 %v1014
      %1452 = vmatprep.subr.bf16.mxu0 %v1025
      %1453 = vmatpush1.bf16.msra.mxu0 %v1024
      %1454 = vmatprep.subr.bf16.mxu0 %v1035
      %1455 = vmatpush1.bf16.msra.mxu0 %v1034
      %1456 = vmatprep.subr.bf16.mxu0 %v1045
      %1457 = vmatpush1.bf16.msra.mxu0 %v1044
      %1458 = vmatprep.subr.bf16.mxu0 %v1055
      %1459 = vmatpush1.bf16.msra.mxu0 %v1054
      %1460 = vmatprep.subr.bf16.mxu0 %v1065
      %1461 = vmatpush1.bf16.msra.mxu0 %v1064
      %1462 = vmatprep.subr.bf16.mxu0 %v1075
      %1463 = vmatpush1.bf16.msra.mxu0 %v1074
      %1464 = vmatprep.subr.bf16.mxu0 %v1085
      %1465 = vmatpush1.bf16.msra.mxu0 %v1084
      %1466 = vmatprep.subr.bf16.mxu0 %v1095
      %1467 = vmatpush1.bf16.msra.mxu0 %v1094
      %1468 = vmatprep.subr.bf16.mxu0 %v1105
      %1469 = vmatpush1.bf16.msra.mxu0 %v1104
      %1470 = vmatprep.mubr.bf16.mxu0 %v305
      %1471 = vmatmul.mubr.bf16.gmra.mrb[0].mxu0 %v304
      %v1472 = vpop.f32.mrb[0].mxu0
      %v1473 = vadd.f32 0.0, %v1472
      %v1474 = vpop.f32.mrb[0].mxu0
      %v1475 = vadd.f32 0.0, %v1474
      %v1476 = vpop.f32.mrb[0].mxu0
      %v1477 = vadd.f32 0.0, %v1476
      %v1478 = vpop.f32.mrb[0].mxu0
      %v1479 = vadd.f32 0.0, %v1478
      %1480 = vdwg.mxu0
      %1481 = vst [vmem:[#allocation3] sm:$0xff] %v1301
      %1482 = vst [vmem:[#allocation3 + $0x8] sm:$0xff] %v1303
      %1483 = vst [vmem:[#allocation3 + $0x10] sm:$0xff] %v1344
      %1484 = vst [vmem:[#allocation3 + $0x18] sm:$0xff] %v1346
      %1485 = vst [vmem:[#allocation3 + $0x20] sm:$0xff] %v1387
      %1486 = vst [vmem:[#allocation3 + $0x28] sm:$0xff] %v1389
      %1487 = vst [vmem:[#allocation3 + $0x30] sm:$0xff] %v1430
      %1488 = vst [vmem:[#allocation3 + $0x38] sm:$0xff] %v1432
      %1489 = vst [vmem:[#allocation3 + $0x40] sm:$0xff] %v1473
      %1490 = vst [vmem:[#allocation3 + $0x48] sm:$0xff] %v1475
      %1491 = vst [vmem:[#allocation3 + $0x50] sm:$0xff] %v1305
      %1492 = vst [vmem:[#allocation3 + $0x58] sm:$0xff] %v1307
      %1493 = vst [vmem:[#allocation3 + $0x60] sm:$0xff] %v1348
      %1494 = vst [vmem:[#allocation3 + $0x68] sm:$0xff] %v1350
      %1495 = vst [vmem:[#allocation3 + $0x70] sm:$0xff] %v1391
      %1496 = vst [vmem:[#allocation3 + $0x78] sm:$0xff] %v1393
      %1497 = vst [vmem:[#allocation3 + $0x80] sm:$0xff] %v1434
      %1498 = vst [vmem:[#allocation3 + $0x88] sm:$0xff] %v1436
      %1499 = vst [vmem:[#allocation3 + $0x90] sm:$0xff] %v1477
      %1500 = vst [vmem:[#allocation3 + $0x98] sm:$0xff] %v1479
      %v1501 = vld [vmem:[#allocation2] sm:$0xfe]
      %v1502 = vld [vmem:[#allocation2 + $0x8] sm:$0xfe]
      %v1503 = vld [vmem:[#allocation2 + $0x10] sm:$0xff]
      %v1504 = vld [vmem:[#allocation2 + $0x18] sm:$0xff]
      %v1505 = vld [vmem:[#allocation2 + $0x20] sm:$0x1]
      %v1506 = vld [vmem:[#allocation2 + $0x28] sm:$0x1]
      %v1507 = vpack.c.bf16 %v1503, %v1501
      %v1508 = vpack.c.bf16 %v1504, %v1502
      %v1509 = vpack.c.bf16 %v1505, %v1505
      %v1510 = vpack.c.bf16 %v1506, %v1506
      %v1511 = vld [vmem:[%s2 + $0x500] sm:$0xff]
      %v1512 = vld [vmem:[%s2 + $0x508] sm:$0xff]
      %v1513 = vld [vmem:[%s2 + $0x510] sm:$0xff]
      %v1514 = vld [vmem:[%s2 + $0x518] sm:$0xff]
      %v1515 = vld [vmem:[%s2 + $0x520] sm:$0xff]
      %v1516 = vld [vmem:[%s2 + $0x528] sm:$0xff]
      %v1517 = vld [vmem:[%s2 + $0x530] sm:$0xff]
      %v1518 = vld [vmem:[%s2 + $0x538] sm:$0xff]
      %v1519 = vld [vmem:[%s2 + $0x540] sm:$0xff]
      %v1520 = vld [vmem:[%s2 + $0x548] sm:$0xff]
      %v1521 = vld [vmem:[%s2 + $0x550] sm:$0xff]
      %v1522 = vld [vmem:[%s2 + $0x558] sm:$0xff]
      %v1523 = vld [vmem:[%s2 + $0x560] sm:$0xff]
      %v1524 = vld [vmem:[%s2 + $0x568] sm:$0xff]
      %v1525 = vld [vmem:[%s2 + $0x570] sm:$0xff]
      %v1526 = vld [vmem:[%s2 + $0x578] sm:$0xff]
      %v1527 = vld [vmem:[%s2 + $0x580] sm:$0xff]
      %v1528 = vld [vmem:[%s2 + $0x588] sm:$0xff]
      %v1529 = vld [vmem:[%s2 + $0x590] sm:$0xff]
      %v1530 = vld [vmem:[%s2 + $0x598] sm:$0xff]
      %v1531 = vld [vmem:[%s2 + $0x5a0] sm:$0xff]
      %v1532 = vld [vmem:[%s2 + $0x5a8] sm:$0xff]
      %v1533 = vld [vmem:[%s2 + $0x5b0] sm:$0xff]
      %v1534 = vld [vmem:[%s2 + $0x5b8] sm:$0xff]
      %v1535 = vld [vmem:[%s2 + $0x5c0] sm:$0xff]
      %v1536 = vld [vmem:[%s2 + $0x5c8] sm:$0xff]
      %v1537 = vld [vmem:[%s2 + $0x5d0] sm:$0xff]
      %v1538 = vld [vmem:[%s2 + $0x5d8] sm:$0xff]
      %v1539 = vld [vmem:[%s2 + $0x5e0] sm:$0xff]
      %v1540 = vld [vmem:[%s2 + $0x5e8] sm:$0xff]
      %v1541 = vld [vmem:[%s2 + $0x5f0] sm:$0xff]
      %v1542 = vld [vmem:[%s2 + $0x5f8] sm:$0xff]
      %v1543 = vld [vmem:[%s2 + $0x600] sm:$0xff]
      %v1544 = vld [vmem:[%s2 + $0x608] sm:$0xff]
      %v1545 = vld [vmem:[%s2 + $0x610] sm:$0xff]
      %v1546 = vld [vmem:[%s2 + $0x618] sm:$0xff]
      %v1547 = vld [vmem:[%s2 + $0x620] sm:$0xff]
      %v1548 = vld [vmem:[%s2 + $0x628] sm:$0xff]
      %v1549 = vld [vmem:[%s2 + $0x630] sm:$0xff]
      %v1550 = vld [vmem:[%s2 + $0x638] sm:$0xff]
      %v1551 = vld [vmem:[%s2 + $0x640] sm:$0xff]
      %v1552 = vld [vmem:[%s2 + $0x648] sm:$0xff]
      %v1553 = vld [vmem:[%s2 + $0x650] sm:$0xff]
      %v1554 = vld [vmem:[%s2 + $0x658] sm:$0xff]
      %v1555 = vld [vmem:[%s2 + $0x660] sm:$0xff]
      %v1556 = vld [vmem:[%s2 + $0x668] sm:$0xff]
      %v1557 = vld [vmem:[%s2 + $0x670] sm:$0xff]
      %v1558 = vld [vmem:[%s2 + $0x678] sm:$0xff]
      %v1559 = vld [vmem:[%s2 + $0x680] sm:$0xff]
      %v1560 = vld [vmem:[%s2 + $0x688] sm:$0xff]
      %v1561 = vld [vmem:[%s2 + $0x690] sm:$0xff]
      %v1562 = vld [vmem:[%s2 + $0x698] sm:$0xff]
      %v1563 = vld [vmem:[%s2 + $0x6a0] sm:$0xff]
      %v1564 = vld [vmem:[%s2 + $0x6a8] sm:$0xff]
      %v1565 = vld [vmem:[%s2 + $0x6b0] sm:$0xff]
      %v1566 = vld [vmem:[%s2 + $0x6b8] sm:$0xff]
      %v1567 = vld [vmem:[%s2 + $0x6c0] sm:$0xff]
      %v1568 = vld [vmem:[%s2 + $0x6c8] sm:$0xff]
      %v1569 = vld [vmem:[%s2 + $0x6d0] sm:$0xff]
      %v1570 = vld [vmem:[%s2 + $0x6d8] sm:$0xff]
      %v1571 = vld [vmem:[%s2 + $0x6e0] sm:$0xff]
      %v1572 = vld [vmem:[%s2 + $0x6e8] sm:$0xff]
      %v1573 = vld [vmem:[%s2 + $0x6f0] sm:$0xff]
      %v1574 = vld [vmem:[%s2 + $0x6f8] sm:$0xff]
      %v1575 = vld [vmem:[%s2 + $0x700] sm:$0xff]
      %v1576 = vld [vmem:[%s2 + $0x708] sm:$0xff]
      %v1577 = vld [vmem:[%s2 + $0x710] sm:$0xff]
      %v1578 = vld [vmem:[%s2 + $0x718] sm:$0xff]
      %v1579 = vld [vmem:[%s2 + $0x720] sm:$0xff]
      %v1580 = vld [vmem:[%s2 + $0x728] sm:$0xff]
      %v1581 = vld [vmem:[%s2 + $0x730] sm:$0xff]
      %v1582 = vld [vmem:[%s2 + $0x738] sm:$0xff]
      %v1583 = vld [vmem:[%s2 + $0x740] sm:$0xff]
      %v1584 = vld [vmem:[%s2 + $0x748] sm:$0xff]
      %v1585 = vld [vmem:[%s2 + $0x750] sm:$0xff]
      %v1586 = vld [vmem:[%s2 + $0x758] sm:$0xff]
      %v1587 = vld [vmem:[%s2 + $0x760] sm:$0xff]
      %v1588 = vld [vmem:[%s2 + $0x768] sm:$0xff]
      %v1589 = vld [vmem:[%s2 + $0x770] sm:$0xff]
      %v1590 = vld [vmem:[%s2 + $0x778] sm:$0xff]
      %v1591 = vld [vmem:[%s2 + $0x780] sm:$0xff]
      %v1592 = vld [vmem:[%s2 + $0x788] sm:$0xff]
      %v1593 = vld [vmem:[%s2 + $0x790] sm:$0xff]
      %v1594 = vld [vmem:[%s2 + $0x798] sm:$0xff]
      %v1595 = vld [vmem:[%s2 + $0x7a0] sm:$0xff]
      %v1596 = vld [vmem:[%s2 + $0x7a8] sm:$0xff]
      %v1597 = vld [vmem:[%s2 + $0x7b0] sm:$0xff]
      %v1598 = vld [vmem:[%s2 + $0x7b8] sm:$0xff]
      %v1599 = vld [vmem:[%s2 + $0x7c0] sm:$0xff]
      %v1600 = vld [vmem:[%s2 + $0x7c8] sm:$0xff]
      %v1601 = vld [vmem:[%s2 + $0x7d0] sm:$0xff]
      %v1602 = vld [vmem:[%s2 + $0x7d8] sm:$0xff]
      %v1603 = vld [vmem:[%s2 + $0x7e0] sm:$0xff]
      %v1604 = vld [vmem:[%s2 + $0x7e8] sm:$0xff]
      %v1605 = vld [vmem:[%s2 + $0x7f0] sm:$0xff]
      %v1606 = vld [vmem:[%s2 + $0x7f8] sm:$0xff]
      %v1607 = vld [vmem:[%s2 + $0x800] sm:$0xff]
      %v1608 = vld [vmem:[%s2 + $0x808] sm:$0xff]
      %v1609 = vld [vmem:[%s2 + $0x810] sm:$0xff]
      %v1610 = vld [vmem:[%s2 + $0x818] sm:$0xff]
      %v1611 = vld [vmem:[%s2 + $0x820] sm:$0xff]
      %v1612 = vld [vmem:[%s2 + $0x828] sm:$0xff]
      %v1613 = vld [vmem:[%s2 + $0x830] sm:$0xff]
      %v1614 = vld [vmem:[%s2 + $0x838] sm:$0xff]
      %v1615 = vld [vmem:[%s2 + $0x840] sm:$0xff]
      %v1616 = vld [vmem:[%s2 + $0x848] sm:$0xff]
      %v1617 = vld [vmem:[%s2 + $0x850] sm:$0xff]
      %v1618 = vld [vmem:[%s2 + $0x858] sm:$0xff]
      %v1619 = vld [vmem:[%s2 + $0x860] sm:$0xff]
      %v1620 = vld [vmem:[%s2 + $0x868] sm:$0xff]
      %v1621 = vld [vmem:[%s2 + $0x870] sm:$0xff]
      %v1622 = vld [vmem:[%s2 + $0x878] sm:$0xff]
      %v1623 = vld [vmem:[%s2 + $0x880] sm:$0xff]
      %v1624 = vld [vmem:[%s2 + $0x888] sm:$0xff]
      %v1625 = vld [vmem:[%s2 + $0x890] sm:$0xff]
      %v1626 = vld [vmem:[%s2 + $0x898] sm:$0xff]
      %v1627 = vld [vmem:[%s2 + $0x8a0] sm:$0xff]
      %v1628 = vld [vmem:[%s2 + $0x8a8] sm:$0xff]
      %v1629 = vld [vmem:[%s2 + $0x8b0] sm:$0xff]
      %v1630 = vld [vmem:[%s2 + $0x8b8] sm:$0xff]
      %v1631 = vld [vmem:[%s2 + $0x8c0] sm:$0xff]
      %v1632 = vld [vmem:[%s2 + $0x8c8] sm:$0xff]
      %v1633 = vld [vmem:[%s2 + $0x8d0] sm:$0xff]
      %v1634 = vld [vmem:[%s2 + $0x8d8] sm:$0xff]
      %v1635 = vld [vmem:[%s2 + $0x8e0] sm:$0xff]
      %v1636 = vld [vmem:[%s2 + $0x8e8] sm:$0xff]
      %v1637 = vld [vmem:[%s2 + $0x8f0] sm:$0xff]
      %v1638 = vld [vmem:[%s2 + $0x8f8] sm:$0xff]
      %v1639 = vld [vmem:[%s2 + $0x900] sm:$0xff]
      %v1640 = vld [vmem:[%s2 + $0x908] sm:$0xff]
      %v1641 = vld [vmem:[%s2 + $0x910] sm:$0xff]
      %v1642 = vld [vmem:[%s2 + $0x918] sm:$0xff]
      %v1643 = vld [vmem:[%s2 + $0x920] sm:$0xff]
      %v1644 = vld [vmem:[%s2 + $0x928] sm:$0xff]
      %v1645 = vld [vmem:[%s2 + $0x930] sm:$0xff]
      %v1646 = vld [vmem:[%s2 + $0x938] sm:$0xff]
      %v1647 = vld [vmem:[%s2 + $0x940] sm:$0xff]
      %v1648 = vld [vmem:[%s2 + $0x948] sm:$0xff]
      %v1649 = vld [vmem:[%s2 + $0x950] sm:$0xff]
      %v1650 = vld [vmem:[%s2 + $0x958] sm:$0xff]
      %v1651 = vld [vmem:[%s2 + $0x960] sm:$0xff]
      %v1652 = vld [vmem:[%s2 + $0x968] sm:$0xff]
      %v1653 = vld [vmem:[%s2 + $0x970] sm:$0xff]
      %v1654 = vld [vmem:[%s2 + $0x978] sm:$0xff]
      %v1655 = vld [vmem:[%s2 + $0x980] sm:$0xff]
      %v1656 = vld [vmem:[%s2 + $0x988] sm:$0xff]
      %v1657 = vld [vmem:[%s2 + $0x990] sm:$0xff]
      %v1658 = vld [vmem:[%s2 + $0x998] sm:$0xff]
      %v1659 = vld [vmem:[%s2 + $0x9a0] sm:$0xff]
      %v1660 = vld [vmem:[%s2 + $0x9a8] sm:$0xff]
      %v1661 = vld [vmem:[%s2 + $0x9b0] sm:$0xff]
      %v1662 = vld [vmem:[%s2 + $0x9b8] sm:$0xff]
      %v1663 = vld [vmem:[%s2 + $0x9c0] sm:$0xff]
      %v1664 = vld [vmem:[%s2 + $0x9c8] sm:$0xff]
      %v1665 = vld [vmem:[%s2 + $0x9d0] sm:$0xff]
      %v1666 = vld [vmem:[%s2 + $0x9d8] sm:$0xff]
      %v1667 = vld [vmem:[%s2 + $0x9e0] sm:$0xff]
      %v1668 = vld [vmem:[%s2 + $0x9e8] sm:$0xff]
      %v1669 = vld [vmem:[%s2 + $0x9f0] sm:$0xff]
      %v1670 = vld [vmem:[%s2 + $0x9f8] sm:$0xff]
      %vm1671 = vsmask.f32 7424
      %v1673 = vshrl.u32 %v1507, 16
      %v1675 = vshll.u32 %v1507, 16
      %v1677 = vrot.slane %v1675, 1
      %v1678 = vor.u32 %v1673, %v1677
      %v1680 = vshll.u32 %v1509, 16
      %v1682 = vrot.slane %v1680, 1
      %v1683 = vsel %vm1671, %v1678, %v1682
      %v1685 = vshrl.u32 %v1508, 16
      %v1687 = vshll.u32 %v1508, 16
      %v1689 = vrot.slane %v1687, 1
      %v1690 = vor.u32 %v1685, %v1689
      %v1692 = vshll.u32 %v1510, 16
      %v1694 = vrot.slane %v1692, 1
      %v1695 = vsel %vm1671, %v1690, %v1694
      %v1858 = vunpack.c.l.b16 %v1511
      %v1859 = vunpack.c.h.b16 %v1511
      %v1860 = vunpack.c.l.b16 %v1512
      %v1861 = vunpack.c.h.b16 %v1512
      %v1862 = vunpack.c.l.b16 %v1513
      %v1863 = vunpack.c.h.b16 %v1513
      %v1864 = vunpack.c.l.b16 %v1514
      %v1865 = vunpack.c.h.b16 %v1514
      %v1866 = vunpack.c.l.b16 %v1515
      %v1867 = vunpack.c.h.b16 %v1515
      %v1868 = vunpack.c.l.b16 %v1516
      %v1869 = vunpack.c.h.b16 %v1516
      %v1870 = vunpack.c.l.b16 %v1517
      %v1871 = vunpack.c.h.b16 %v1517
      %v1872 = vunpack.c.l.b16 %v1518
      %v1873 = vunpack.c.h.b16 %v1518
      %v1874 = vunpack.c.l.b16 %v1519
      %v1875 = vunpack.c.h.b16 %v1519
      %v1876 = vunpack.c.l.b16 %v1520
      %v1877 = vunpack.c.h.b16 %v1520
      %v1878 = vunpack.c.l.b16 %v1521
      %v1879 = vunpack.c.h.b16 %v1521
      %v1880 = vunpack.c.l.b16 %v1522
      %v1881 = vunpack.c.h.b16 %v1522
      %v1882 = vunpack.c.l.b16 %v1523
      %v1883 = vunpack.c.h.b16 %v1523
      %v1884 = vunpack.c.l.b16 %v1524
      %v1885 = vunpack.c.h.b16 %v1524
      %v1886 = vunpack.c.l.b16 %v1525
      %v1887 = vunpack.c.h.b16 %v1525
      %v1888 = vunpack.c.l.b16 %v1526
      %v1889 = vunpack.c.h.b16 %v1526
      %v1890 = vunpack.c.l.b16 %v1527
      %v1891 = vunpack.c.h.b16 %v1527
      %v1892 = vunpack.c.l.b16 %v1528
      %v1893 = vunpack.c.h.b16 %v1528
      %v1894 = vunpack.c.l.b16 %v1529
      %v1895 = vunpack.c.h.b16 %v1529
      %v1896 = vunpack.c.l.b16 %v1530
      %v1897 = vunpack.c.h.b16 %v1530
      %v1898 = vunpack.c.l.b16 %v1531
      %v1899 = vunpack.c.h.b16 %v1531
      %v1900 = vunpack.c.l.b16 %v1532
      %v1901 = vunpack.c.h.b16 %v1532
      %v1902 = vunpack.c.l.b16 %v1533
      %v1903 = vunpack.c.h.b16 %v1533
      %v1904 = vunpack.c.l.b16 %v1534
      %v1905 = vunpack.c.h.b16 %v1534
      %v1906 = vunpack.c.l.b16 %v1535
      %v1907 = vunpack.c.h.b16 %v1535
      %v1908 = vunpack.c.l.b16 %v1536
      %v1909 = vunpack.c.h.b16 %v1536
      %v1910 = vunpack.c.l.b16 %v1537
      %v1911 = vunpack.c.h.b16 %v1537
      %v1912 = vunpack.c.l.b16 %v1538
      %v1913 = vunpack.c.h.b16 %v1538
      %v1914 = vunpack.c.l.b16 %v1539
      %v1915 = vunpack.c.h.b16 %v1539
      %v1916 = vunpack.c.l.b16 %v1540
      %v1917 = vunpack.c.h.b16 %v1540
      %v1918 = vunpack.c.l.b16 %v1541
      %v1919 = vunpack.c.h.b16 %v1541
      %v1920 = vunpack.c.l.b16 %v1542
      %v1921 = vunpack.c.h.b16 %v1542
      %v1922 = vunpack.c.l.b16 %v1543
      %v1923 = vunpack.c.h.b16 %v1543
      %v1924 = vunpack.c.l.b16 %v1544
      %v1925 = vunpack.c.h.b16 %v1544
      %v1926 = vunpack.c.l.b16 %v1545
      %v1927 = vunpack.c.h.b16 %v1545
      %v1928 = vunpack.c.l.b16 %v1546
      %v1929 = vunpack.c.h.b16 %v1546
      %v1930 = vunpack.c.l.b16 %v1547
      %v1931 = vunpack.c.h.b16 %v1547
      %v1932 = vunpack.c.l.b16 %v1548
      %v1933 = vunpack.c.h.b16 %v1548
      %v1934 = vunpack.c.l.b16 %v1549
      %v1935 = vunpack.c.h.b16 %v1549
      %v1936 = vunpack.c.l.b16 %v1550
      %v1937 = vunpack.c.h.b16 %v1550
      %v1938 = vunpack.c.l.b16 %v1551
      %v1939 = vunpack.c.h.b16 %v1551
      %v1940 = vunpack.c.l.b16 %v1552
      %v1941 = vunpack.c.h.b16 %v1552
      %v1942 = vunpack.c.l.b16 %v1553
      %v1943 = vunpack.c.h.b16 %v1553
      %v1944 = vunpack.c.l.b16 %v1554
      %v1945 = vunpack.c.h.b16 %v1554
      %v1946 = vunpack.c.l.b16 %v1555
      %v1947 = vunpack.c.h.b16 %v1555
      %v1948 = vunpack.c.l.b16 %v1556
      %v1949 = vunpack.c.h.b16 %v1556
      %v1950 = vunpack.c.l.b16 %v1557
      %v1951 = vunpack.c.h.b16 %v1557
      %v1952 = vunpack.c.l.b16 %v1558
      %v1953 = vunpack.c.h.b16 %v1558
      %v1954 = vunpack.c.l.b16 %v1559
      %v1955 = vunpack.c.h.b16 %v1559
      %v1956 = vunpack.c.l.b16 %v1560
      %v1957 = vunpack.c.h.b16 %v1560
      %v1958 = vunpack.c.l.b16 %v1561
      %v1959 = vunpack.c.h.b16 %v1561
      %v1960 = vunpack.c.l.b16 %v1562
      %v1961 = vunpack.c.h.b16 %v1562
      %v1962 = vunpack.c.l.b16 %v1563
      %v1963 = vunpack.c.h.b16 %v1563
      %v1964 = vunpack.c.l.b16 %v1564
      %v1965 = vunpack.c.h.b16 %v1564
      %v1966 = vunpack.c.l.b16 %v1565
      %v1967 = vunpack.c.h.b16 %v1565
      %v1968 = vunpack.c.l.b16 %v1566
      %v1969 = vunpack.c.h.b16 %v1566
      %v1970 = vunpack.c.l.b16 %v1567
      %v1971 = vunpack.c.h.b16 %v1567
      %v1972 = vunpack.c.l.b16 %v1568
      %v1973 = vunpack.c.h.b16 %v1568
      %v1974 = vunpack.c.l.b16 %v1569
      %v1975 = vunpack.c.h.b16 %v1569
      %v1976 = vunpack.c.l.b16 %v1570
      %v1977 = vunpack.c.h.b16 %v1570
      %v1978 = vunpack.c.l.b16 %v1571
      %v1979 = vunpack.c.h.b16 %v1571
      %v1980 = vunpack.c.l.b16 %v1572
      %v1981 = vunpack.c.h.b16 %v1572
      %v1982 = vunpack.c.l.b16 %v1573
      %v1983 = vunpack.c.h.b16 %v1573
      %v1984 = vunpack.c.l.b16 %v1574
      %v1985 = vunpack.c.h.b16 %v1574
      %v1986 = vunpack.c.l.b16 %v1575
      %v1987 = vunpack.c.h.b16 %v1575
      %v1988 = vunpack.c.l.b16 %v1576
      %v1989 = vunpack.c.h.b16 %v1576
      %v1990 = vunpack.c.l.b16 %v1577
      %v1991 = vunpack.c.h.b16 %v1577
      %v1992 = vunpack.c.l.b16 %v1578
      %v1993 = vunpack.c.h.b16 %v1578
      %v1994 = vunpack.c.l.b16 %v1579
      %v1995 = vunpack.c.h.b16 %v1579
      %v1996 = vunpack.c.l.b16 %v1580
      %v1997 = vunpack.c.h.b16 %v1580
      %v1998 = vunpack.c.l.b16 %v1581
      %v1999 = vunpack.c.h.b16 %v1581
      %v2000 = vunpack.c.l.b16 %v1582
      %v2001 = vunpack.c.h.b16 %v1582
      %v2002 = vunpack.c.l.b16 %v1583
      %v2003 = vunpack.c.h.b16 %v1583
      %v2004 = vunpack.c.l.b16 %v1584
      %v2005 = vunpack.c.h.b16 %v1584
      %v2006 = vunpack.c.l.b16 %v1585
      %v2007 = vunpack.c.h.b16 %v1585
      %v2008 = vunpack.c.l.b16 %v1586
      %v2009 = vunpack.c.h.b16 %v1586
      %v2010 = vunpack.c.l.b16 %v1587
      %v2011 = vunpack.c.h.b16 %v1587
      %v2012 = vunpack.c.l.b16 %v1588
      %v2013 = vunpack.c.h.b16 %v1588
      %v2014 = vunpack.c.l.b16 %v1589
      %v2015 = vunpack.c.h.b16 %v1589
      %v2016 = vunpack.c.l.b16 %v1590
      %v2017 = vunpack.c.h.b16 %v1590
      %v2018 = vunpack.c.l.b16 %v1591
      %v2019 = vunpack.c.h.b16 %v1591
      %v2020 = vunpack.c.l.b16 %v1592
      %v2021 = vunpack.c.h.b16 %v1592
      %v2022 = vunpack.c.l.b16 %v1593
      %v2023 = vunpack.c.h.b16 %v1593
      %v2024 = vunpack.c.l.b16 %v1594
      %v2025 = vunpack.c.h.b16 %v1594
      %v2026 = vunpack.c.l.b16 %v1595
      %v2027 = vunpack.c.h.b16 %v1595
      %v2028 = vunpack.c.l.b16 %v1596
      %v2029 = vunpack.c.h.b16 %v1596
      %v2030 = vunpack.c.l.b16 %v1597
      %v2031 = vunpack.c.h.b16 %v1597
      %v2032 = vunpack.c.l.b16 %v1598
      %v2033 = vunpack.c.h.b16 %v1598
      %v2034 = vunpack.c.l.b16 %v1599
      %v2035 = vunpack.c.h.b16 %v1599
      %v2036 = vunpack.c.l.b16 %v1600
      %v2037 = vunpack.c.h.b16 %v1600
      %v2038 = vunpack.c.l.b16 %v1601
      %v2039 = vunpack.c.h.b16 %v1601
      %v2040 = vunpack.c.l.b16 %v1602
      %v2041 = vunpack.c.h.b16 %v1602
      %v2042 = vunpack.c.l.b16 %v1603
      %v2043 = vunpack.c.h.b16 %v1603
      %v2044 = vunpack.c.l.b16 %v1604
      %v2045 = vunpack.c.h.b16 %v1604
      %v2046 = vunpack.c.l.b16 %v1605
      %v2047 = vunpack.c.h.b16 %v1605
      %v2048 = vunpack.c.l.b16 %v1606
      %v2049 = vunpack.c.h.b16 %v1606
      %v2050 = vunpack.c.l.b16 %v1607
      %v2051 = vunpack.c.h.b16 %v1607
      %v2052 = vunpack.c.l.b16 %v1608
      %v2053 = vunpack.c.h.b16 %v1608
      %v2054 = vunpack.c.l.b16 %v1609
      %v2055 = vunpack.c.h.b16 %v1609
      %v2056 = vunpack.c.l.b16 %v1610
      %v2057 = vunpack.c.h.b16 %v1610
      %v2058 = vunpack.c.l.b16 %v1611
      %v2059 = vunpack.c.h.b16 %v1611
      %v2060 = vunpack.c.l.b16 %v1612
      %v2061 = vunpack.c.h.b16 %v1612
      %v2062 = vunpack.c.l.b16 %v1613
      %v2063 = vunpack.c.h.b16 %v1613
      %v2064 = vunpack.c.l.b16 %v1614
      %v2065 = vunpack.c.h.b16 %v1614
      %v2066 = vunpack.c.l.b16 %v1615
      %v2067 = vunpack.c.h.b16 %v1615
      %v2068 = vunpack.c.l.b16 %v1616
      %v2069 = vunpack.c.h.b16 %v1616
      %v2070 = vunpack.c.l.b16 %v1617
      %v2071 = vunpack.c.h.b16 %v1617
      %v2072 = vunpack.c.l.b16 %v1618
      %v2073 = vunpack.c.h.b16 %v1618
      %v2074 = vunpack.c.l.b16 %v1619
      %v2075 = vunpack.c.h.b16 %v1619
      %v2076 = vunpack.c.l.b16 %v1620
      %v2077 = vunpack.c.h.b16 %v1620
      %v2078 = vunpack.c.l.b16 %v1621
      %v2079 = vunpack.c.h.b16 %v1621
      %v2080 = vunpack.c.l.b16 %v1622
      %v2081 = vunpack.c.h.b16 %v1622
      %v2082 = vunpack.c.l.b16 %v1623
      %v2083 = vunpack.c.h.b16 %v1623
      %v2084 = vunpack.c.l.b16 %v1624
      %v2085 = vunpack.c.h.b16 %v1624
      %v2086 = vunpack.c.l.b16 %v1625
      %v2087 = vunpack.c.h.b16 %v1625
      %v2088 = vunpack.c.l.b16 %v1626
      %v2089 = vunpack.c.h.b16 %v1626
      %v2090 = vunpack.c.l.b16 %v1627
      %v2091 = vunpack.c.h.b16 %v1627
      %v2092 = vunpack.c.l.b16 %v1628
      %v2093 = vunpack.c.h.b16 %v1628
      %v2094 = vunpack.c.l.b16 %v1629
      %v2095 = vunpack.c.h.b16 %v1629
      %v2096 = vunpack.c.l.b16 %v1630
      %v2097 = vunpack.c.h.b16 %v1630
      %v2098 = vunpack.c.l.b16 %v1631
      %v2099 = vunpack.c.h.b16 %v1631
      %v2100 = vunpack.c.l.b16 %v1632
      %v2101 = vunpack.c.h.b16 %v1632
      %v2102 = vunpack.c.l.b16 %v1633
      %v2103 = vunpack.c.h.b16 %v1633
      %v2104 = vunpack.c.l.b16 %v1634
      %v2105 = vunpack.c.h.b16 %v1634
      %v2106 = vunpack.c.l.b16 %v1635
      %v2107 = vunpack.c.h.b16 %v1635
      %v2108 = vunpack.c.l.b16 %v1636
      %v2109 = vunpack.c.h.b16 %v1636
      %v2110 = vunpack.c.l.b16 %v1637
      %v2111 = vunpack.c.h.b16 %v1637
      %v2112 = vunpack.c.l.b16 %v1638
      %v2113 = vunpack.c.h.b16 %v1638
      %v2114 = vunpack.c.l.b16 %v1639
      %v2115 = vunpack.c.h.b16 %v1639
      %v2116 = vunpack.c.l.b16 %v1640
      %v2117 = vunpack.c.h.b16 %v1640
      %v2118 = vunpack.c.l.b16 %v1641
      %v2119 = vunpack.c.h.b16 %v1641
      %v2120 = vunpack.c.l.b16 %v1642
      %v2121 = vunpack.c.h.b16 %v1642
      %v2122 = vunpack.c.l.b16 %v1643
      %v2123 = vunpack.c.h.b16 %v1643
      %v2124 = vunpack.c.l.b16 %v1644
      %v2125 = vunpack.c.h.b16 %v1644
      %v2126 = vunpack.c.l.b16 %v1645
      %v2127 = vunpack.c.h.b16 %v1645
      %v2128 = vunpack.c.l.b16 %v1646
      %v2129 = vunpack.c.h.b16 %v1646
      %v2130 = vunpack.c.l.b16 %v1647
      %v2131 = vunpack.c.h.b16 %v1647
      %v2132 = vunpack.c.l.b16 %v1648
      %v2133 = vunpack.c.h.b16 %v1648
      %v2134 = vunpack.c.l.b16 %v1649
      %v2135 = vunpack.c.h.b16 %v1649
      %v2136 = vunpack.c.l.b16 %v1650
      %v2137 = vunpack.c.h.b16 %v1650
      %v2138 = vunpack.c.l.b16 %v1651
      %v2139 = vunpack.c.h.b16 %v1651
      %v2140 = vunpack.c.l.b16 %v1652
      %v2141 = vunpack.c.h.b16 %v1652
      %v2142 = vunpack.c.l.b16 %v1653
      %v2143 = vunpack.c.h.b16 %v1653
      %v2144 = vunpack.c.l.b16 %v1654
      %v2145 = vunpack.c.h.b16 %v1654
      %v2146 = vunpack.c.l.b16 %v1655
      %v2147 = vunpack.c.h.b16 %v1655
      %v2148 = vunpack.c.l.b16 %v1656
      %v2149 = vunpack.c.h.b16 %v1656
      %v2150 = vunpack.c.l.b16 %v1657
      %v2151 = vunpack.c.h.b16 %v1657
      %v2152 = vunpack.c.l.b16 %v1658
      %v2153 = vunpack.c.h.b16 %v1658
      %v2154 = vunpack.c.l.b16 %v1659
      %v2155 = vunpack.c.h.b16 %v1659
      %v2156 = vunpack.c.l.b16 %v1660
      %v2157 = vunpack.c.h.b16 %v1660
      %v2158 = vunpack.c.l.b16 %v1661
      %v2159 = vunpack.c.h.b16 %v1661
      %v2160 = vunpack.c.l.b16 %v1662
      %v2161 = vunpack.c.h.b16 %v1662
      %v2162 = vunpack.c.l.b16 %v1663
      %v2163 = vunpack.c.h.b16 %v1663
      %v2164 = vunpack.c.l.b16 %v1664
      %v2165 = vunpack.c.h.b16 %v1664
      %v2166 = vunpack.c.l.b16 %v1665
      %v2167 = vunpack.c.h.b16 %v1665
      %v2168 = vunpack.c.l.b16 %v1666
      %v2169 = vunpack.c.h.b16 %v1666
      %v2170 = vunpack.c.l.b16 %v1667
      %v2171 = vunpack.c.h.b16 %v1667
      %v2172 = vunpack.c.l.b16 %v1668
      %v2173 = vunpack.c.h.b16 %v1668
      %v2174 = vunpack.c.l.b16 %v1669
      %v2175 = vunpack.c.h.b16 %v1669
      %v2176 = vunpack.c.l.b16 %v1670
      %v2177 = vunpack.c.h.b16 %v1670
      %v2178 = vpack.c.b16 %v1868, %v1858
      %v2179 = vpack.c.b16 %v1869, %v1859
      %v2180 = vpack.c.b16 %v1870, %v1860
      %v2181 = vpack.c.b16 %v1871, %v1861
      %v2182 = vpack.c.b16 %v1872, %v1862
      %v2183 = vpack.c.b16 %v1873, %v1863
      %v2184 = vpack.c.b16 %v1874, %v1864
      %v2185 = vpack.c.b16 %v1875, %v1865
      %v2186 = vpack.c.b16 %v1876, %v1866
      %v2187 = vpack.c.b16 %v1877, %v1867
      %v2188 = vpack.c.b16 %v1888, %v1878
      %v2189 = vpack.c.b16 %v1889, %v1879
      %v2190 = vpack.c.b16 %v1890, %v1880
      %v2191 = vpack.c.b16 %v1891, %v1881
      %v2192 = vpack.c.b16 %v1892, %v1882
      %v2193 = vpack.c.b16 %v1893, %v1883
      %v2194 = vpack.c.b16 %v1894, %v1884
      %v2195 = vpack.c.b16 %v1895, %v1885
      %v2196 = vpack.c.b16 %v1896, %v1886
      %v2197 = vpack.c.b16 %v1897, %v1887
      %v2198 = vpack.c.b16 %v1908, %v1898
      %v2199 = vpack.c.b16 %v1909, %v1899
      %v2200 = vpack.c.b16 %v1910, %v1900
      %v2201 = vpack.c.b16 %v1911, %v1901
      %v2202 = vpack.c.b16 %v1912, %v1902
      %v2203 = vpack.c.b16 %v1913, %v1903
      %v2204 = vpack.c.b16 %v1914, %v1904
      %v2205 = vpack.c.b16 %v1915, %v1905
      %v2206 = vpack.c.b16 %v1916, %v1906
      %v2207 = vpack.c.b16 %v1917, %v1907
      %v2208 = vpack.c.b16 %v1928, %v1918
      %v2209 = vpack.c.b16 %v1929, %v1919
      %v2210 = vpack.c.b16 %v1930, %v1920
      %v2211 = vpack.c.b16 %v1931, %v1921
      %v2212 = vpack.c.b16 %v1932, %v1922
      %v2213 = vpack.c.b16 %v1933, %v1923
      %v2214 = vpack.c.b16 %v1934, %v1924
      %v2215 = vpack.c.b16 %v1935, %v1925
      %v2216 = vpack.c.b16 %v1936, %v1926
      %v2217 = vpack.c.b16 %v1937, %v1927
      %v2218 = vpack.c.b16 %v1948, %v1938
      %v2219 = vpack.c.b16 %v1949, %v1939
      %v2220 = vpack.c.b16 %v1950, %v1940
      %v2221 = vpack.c.b16 %v1951, %v1941
      %v2222 = vpack.c.b16 %v1952, %v1942
      %v2223 = vpack.c.b16 %v1953, %v1943
      %v2224 = vpack.c.b16 %v1954, %v1944
      %v2225 = vpack.c.b16 %v1955, %v1945
      %v2226 = vpack.c.b16 %v1956, %v1946
      %v2227 = vpack.c.b16 %v1957, %v1947
      %v2228 = vpack.c.b16 %v1968, %v1958
      %v2229 = vpack.c.b16 %v1969, %v1959
      %v2230 = vpack.c.b16 %v1970, %v1960
      %v2231 = vpack.c.b16 %v1971, %v1961
      %v2232 = vpack.c.b16 %v1972, %v1962
      %v2233 = vpack.c.b16 %v1973, %v1963
      %v2234 = vpack.c.b16 %v1974, %v1964
      %v2235 = vpack.c.b16 %v1975, %v1965
      %v2236 = vpack.c.b16 %v1976, %v1966
      %v2237 = vpack.c.b16 %v1977, %v1967
      %v2238 = vpack.c.b16 %v1988, %v1978
      %v2239 = vpack.c.b16 %v1989, %v1979
      %v2240 = vpack.c.b16 %v1990, %v1980
      %v2241 = vpack.c.b16 %v1991, %v1981
      %v2242 = vpack.c.b16 %v1992, %v1982
      %v2243 = vpack.c.b16 %v1993, %v1983
      %v2244 = vpack.c.b16 %v1994, %v1984
      %v2245 = vpack.c.b16 %v1995, %v1985
      %v2246 = vpack.c.b16 %v1996, %v1986
      %v2247 = vpack.c.b16 %v1997, %v1987
      %v2248 = vpack.c.b16 %v2008, %v1998
      %v2249 = vpack.c.b16 %v2009, %v1999
      %v2250 = vpack.c.b16 %v2010, %v2000
      %v2251 = vpack.c.b16 %v2011, %v2001
      %v2252 = vpack.c.b16 %v2012, %v2002
      %v2253 = vpack.c.b16 %v2013, %v2003
      %v2254 = vpack.c.b16 %v2014, %v2004
      %v2255 = vpack.c.b16 %v2015, %v2005
      %v2256 = vpack.c.b16 %v2016, %v2006
      %v2257 = vpack.c.b16 %v2017, %v2007
      %v2258 = vpack.c.b16 %v2028, %v2018
      %v2259 = vpack.c.b16 %v2029, %v2019
      %v2260 = vpack.c.b16 %v2030, %v2020
      %v2261 = vpack.c.b16 %v2031, %v2021
      %v2262 = vpack.c.b16 %v2032, %v2022
      %v2263 = vpack.c.b16 %v2033, %v2023
      %v2264 = vpack.c.b16 %v2034, %v2024
      %v2265 = vpack.c.b16 %v2035, %v2025
      %v2266 = vpack.c.b16 %v2036, %v2026
      %v2267 = vpack.c.b16 %v2037, %v2027
      %v2268 = vpack.c.b16 %v2048, %v2038
      %v2269 = vpack.c.b16 %v2049, %v2039
      %v2270 = vpack.c.b16 %v2050, %v2040
      %v2271 = vpack.c.b16 %v2051, %v2041
      %v2272 = vpack.c.b16 %v2052, %v2042
      %v2273 = vpack.c.b16 %v2053, %v2043
      %v2274 = vpack.c.b16 %v2054, %v2044
      %v2275 = vpack.c.b16 %v2055, %v2045
      %v2276 = vpack.c.b16 %v2056, %v2046
      %v2277 = vpack.c.b16 %v2057, %v2047
      %v2278 = vpack.c.b16 %v2068, %v2058
      %v2279 = vpack.c.b16 %v2069, %v2059
      %v2280 = vpack.c.b16 %v2070, %v2060
      %v2281 = vpack.c.b16 %v2071, %v2061
      %v2282 = vpack.c.b16 %v2072, %v2062
      %v2283 = vpack.c.b16 %v2073, %v2063
      %v2284 = vpack.c.b16 %v2074, %v2064
      %v2285 = vpack.c.b16 %v2075, %v2065
      %v2286 = vpack.c.b16 %v2076, %v2066
      %v2287 = vpack.c.b16 %v2077, %v2067
      %v2288 = vpack.c.b16 %v2088, %v2078
      %v2289 = vpack.c.b16 %v2089, %v2079
      %v2290 = vpack.c.b16 %v2090, %v2080
      %v2291 = vpack.c.b16 %v2091, %v2081
      %v2292 = vpack.c.b16 %v2092, %v2082
      %v2293 = vpack.c.b16 %v2093, %v2083
      %v2294 = vpack.c.b16 %v2094, %v2084
      %v2295 = vpack.c.b16 %v2095, %v2085
      %v2296 = vpack.c.b16 %v2096, %v2086
      %v2297 = vpack.c.b16 %v2097, %v2087
      %v2298 = vpack.c.b16 %v2108, %v2098
      %v2299 = vpack.c.b16 %v2109, %v2099
      %v2300 = vpack.c.b16 %v2110, %v2100
      %v2301 = vpack.c.b16 %v2111, %v2101
      %v2302 = vpack.c.b16 %v2112, %v2102
      %v2303 = vpack.c.b16 %v2113, %v2103
      %v2304 = vpack.c.b16 %v2114, %v2104
      %v2305 = vpack.c.b16 %v2115, %v2105
      %v2306 = vpack.c.b16 %v2116, %v2106
      %v2307 = vpack.c.b16 %v2117, %v2107
      %v2308 = vpack.c.b16 %v2128, %v2118
      %v2309 = vpack.c.b16 %v2129, %v2119
      %v2310 = vpack.c.b16 %v2130, %v2120
      %v2311 = vpack.c.b16 %v2131, %v2121
      %v2312 = vpack.c.b16 %v2132, %v2122
      %v2313 = vpack.c.b16 %v2133, %v2123
      %v2314 = vpack.c.b16 %v2134, %v2124
      %v2315 = vpack.c.b16 %v2135, %v2125
      %v2316 = vpack.c.b16 %v2136, %v2126
      %v2317 = vpack.c.b16 %v2137, %v2127
      %v2318 = vpack.c.b16 %v2148, %v2138
      %v2319 = vpack.c.b16 %v2149, %v2139
      %v2320 = vpack.c.b16 %v2150, %v2140
      %v2321 = vpack.c.b16 %v2151, %v2141
      %v2322 = vpack.c.b16 %v2152, %v2142
      %v2323 = vpack.c.b16 %v2153, %v2143
      %v2324 = vpack.c.b16 %v2154, %v2144
      %v2325 = vpack.c.b16 %v2155, %v2145
      %v2326 = vpack.c.b16 %v2156, %v2146
      %v2327 = vpack.c.b16 %v2157, %v2147
      %v2328 = vpack.c.b16 %v2168, %v2158
      %v2329 = vpack.c.b16 %v2169, %v2159
      %v2330 = vpack.c.b16 %v2170, %v2160
      %v2331 = vpack.c.b16 %v2171, %v2161
      %v2332 = vpack.c.b16 %v2172, %v2162
      %v2333 = vpack.c.b16 %v2173, %v2163
      %v2334 = vpack.c.b16 %v2174, %v2164
      %v2335 = vpack.c.b16 %v2175, %v2165
      %v2336 = vpack.c.b16 %v2176, %v2166
      %v2337 = vpack.c.b16 %v2177, %v2167
      %2498 = vmatprep.subr.bf16.mxu0 %v2179
      %2499 = vmatpush1.bf16.msra.mxu0 %v2178
      %2500 = vmatprep.subr.bf16.mxu0 %v2189
      %2501 = vmatpush1.bf16.msra.mxu0 %v2188
      %2502 = vmatprep.subr.bf16.mxu0 %v2199
      %2503 = vmatpush1.bf16.msra.mxu0 %v2198
      %2504 = vmatprep.subr.bf16.mxu0 %v2209
      %2505 = vmatpush1.bf16.msra.mxu0 %v2208
      %2506 = vmatprep.subr.bf16.mxu0 %v2219
      %2507 = vmatpush1.bf16.msra.mxu0 %v2218
      %2508 = vmatprep.subr.bf16.mxu0 %v2229
      %2509 = vmatpush1.bf16.msra.mxu0 %v2228
      %2510 = vmatprep.subr.bf16.mxu0 %v2239
      %2511 = vmatpush1.bf16.msra.mxu0 %v2238
      %2512 = vmatprep.subr.bf16.mxu0 %v2249
      %2513 = vmatpush1.bf16.msra.mxu0 %v2248
      %2514 = vmatprep.subr.bf16.mxu0 %v2259
      %2515 = vmatpush1.bf16.msra.mxu0 %v2258
      %2516 = vmatprep.subr.bf16.mxu0 %v2269
      %2517 = vmatpush1.bf16.msra.mxu0 %v2268
      %2518 = vmatprep.subr.bf16.mxu0 %v2279
      %2519 = vmatpush1.bf16.msra.mxu0 %v2278
      %2520 = vmatprep.subr.bf16.mxu0 %v2289
      %2521 = vmatpush1.bf16.msra.mxu0 %v2288
      %2522 = vmatprep.subr.bf16.mxu0 %v2299
      %2523 = vmatpush1.bf16.msra.mxu0 %v2298
      %2524 = vmatprep.subr.bf16.mxu0 %v2309
      %2525 = vmatpush1.bf16.msra.mxu0 %v2308
      %2526 = vmatprep.subr.bf16.mxu0 %v2319
      %2527 = vmatpush1.bf16.msra.mxu0 %v2318
      %2528 = vmatprep.subr.bf16.mxu0 %v2329
      %2529 = vmatpush1.bf16.msra.mxu0 %v2328
      %2530 = vmatprep.mubr.bf16.mxu0 %v1695
      %2531 = vmatmul.mubr.bf16.gmra.mrb[0].mxu0 %v1683
      %v2532 = vpop.f32.mrb[0].mxu0
      %v2533 = vadd.f32 0.0, %v2532
      %v2534 = vpop.f32.mrb[0].mxu0
      %v2535 = vadd.f32 0.0, %v2534
      %v2536 = vpop.f32.mrb[0].mxu0
      %v2537 = vadd.f32 0.0, %v2536
      %v2538 = vpop.f32.mrb[0].mxu0
      %v2539 = vadd.f32 0.0, %v2538
      %2540 = vdwg.mxu0
      %2541 = vmatprep.subr.bf16.mxu0 %v2181
      %2542 = vmatpush1.bf16.msra.mxu0 %v2180
      %2543 = vmatprep.subr.bf16.mxu0 %v2191
      %2544 = vmatpush1.bf16.msra.mxu0 %v2190
      %2545 = vmatprep.subr.bf16.mxu0 %v2201
      %2546 = vmatpush1.bf16.msra.mxu0 %v2200
      %2547 = vmatprep.subr.bf16.mxu0 %v2211
      %2548 = vmatpush1.bf16.msra.mxu0 %v2210
      %2549 = vmatprep.subr.bf16.mxu0 %v2221
      %2550 = vmatpush1.bf16.msra.mxu0 %v2220
      %2551 = vmatprep.subr.bf16.mxu0 %v2231
      %2552 = vmatpush1.bf16.msra.mxu0 %v2230
      %2553 = vmatprep.subr.bf16.mxu0 %v2241
      %2554 = vmatpush1.bf16.msra.mxu0 %v2240
      %2555 = vmatprep.subr.bf16.mxu0 %v2251
      %2556 = vmatpush1.bf16.msra.mxu0 %v2250
      %2557 = vmatprep.subr.bf16.mxu0 %v2261
      %2558 = vmatpush1.bf16.msra.mxu0 %v2260
      %2559 = vmatprep.subr.bf16.mxu0 %v2271
      %2560 = vmatpush1.bf16.msra.mxu0 %v2270
      %2561 = vmatprep.subr.bf16.mxu0 %v2281
      %2562 = vmatpush1.bf16.msra.mxu0 %v2280
      %2563 = vmatprep.subr.bf16.mxu0 %v2291
      %2564 = vmatpush1.bf16.msra.mxu0 %v2290
      %2565 = vmatprep.subr.bf16.mxu0 %v2301
      %2566 = vmatpush1.bf16.msra.mxu0 %v2300
      %2567 = vmatprep.subr.bf16.mxu0 %v2311
      %2568 = vmatpush1.bf16.msra.mxu0 %v2310
      %2569 = vmatprep.subr.bf16.mxu0 %v2321
      %2570 = vmatpush1.bf16.msra.mxu0 %v2320
      %2571 = vmatprep.subr.bf16.mxu0 %v2331
      %2572 = vmatpush1.bf16.msra.mxu0 %v2330
      %2573 = vmatprep.mubr.bf16.mxu0 %v1695
      %2574 = vmatmul.mubr.bf16.gmra.mrb[0].mxu0 %v1683
      %v2575 = vpop.f32.mrb[0].mxu0
      %v2576 = vadd.f32 0.0, %v2575
      %v2577 = vpop.f32.mrb[0].mxu0
      %v2578 = vadd.f32 0.0, %v2577
      %v2579 = vpop.f32.mrb[0].mxu0
      %v2580 = vadd.f32 0.0, %v2579
      %v2581 = vpop.f32.mrb[0].mxu0
      %v2582 = vadd.f32 0.0, %v2581
      %2583 = vdwg.mxu0
      %2584 = vmatprep.subr.bf16.mxu0 %v2183
      %2585 = vmatpush1.bf16.msra.mxu0 %v2182
      %2586 = vmatprep.subr.bf16.mxu0 %v2193
      %2587 = vmatpush1.bf16.msra.mxu0 %v2192
      %2588 = vmatprep.subr.bf16.mxu0 %v2203
      %2589 = vmatpush1.bf16.msra.mxu0 %v2202
      %2590 = vmatprep.subr.bf16.mxu0 %v2213
      %2591 = vmatpush1.bf16.msra.mxu0 %v2212
      %2592 = vmatprep.subr.bf16.mxu0 %v2223
      %2593 = vmatpush1.bf16.msra.mxu0 %v2222
      %2594 = vmatprep.subr.bf16.mxu0 %v2233
      %2595 = vmatpush1.bf16.msra.mxu0 %v2232
      %2596 = vmatprep.subr.bf16.mxu0 %v2243
      %2597 = vmatpush1.bf16.msra.mxu0 %v2242
      %2598 = vmatprep.subr.bf16.mxu0 %v2253
      %2599 = vmatpush1.bf16.msra.mxu0 %v2252
      %2600 = vmatprep.subr.bf16.mxu0 %v2263
      %2601 = vmatpush1.bf16.msra.mxu0 %v2262
      %2602 = vmatprep.subr.bf16.mxu0 %v2273
      %2603 = vmatpush1.bf16.msra.mxu0 %v2272
      %2604 = vmatprep.subr.bf16.mxu0 %v2283
      %2605 = vmatpush1.bf16.msra.mxu0 %v2282
      %2606 = vmatprep.subr.bf16.mxu0 %v2293
      %2607 = vmatpush1.bf16.msra.mxu0 %v2292
      %2608 = vmatprep.subr.bf16.mxu0 %v2303
      %2609 = vmatpush1.bf16.msra.mxu0 %v2302
      %2610 = vmatprep.subr.bf16.mxu0 %v2313
      %2611 = vmatpush1.bf16.msra.mxu0 %v2312
      %2612 = vmatprep.subr.bf16.mxu0 %v2323
      %2613 = vmatpush1.bf16.msra.mxu0 %v2322
      %2614 = vmatprep.subr.bf16.mxu0 %v2333
      %2615 = vmatpush1.bf16.msra.mxu0 %v2332
      %2616 = vmatprep.mubr.bf16.mxu0 %v1695
      %2617 = vmatmul.mubr.bf16.gmra.mrb[0].mxu0 %v1683
      %v2618 = vpop.f32.mrb[0].mxu0
      %v2619 = vadd.f32 0.0, %v2618
      %v2620 = vpop.f32.mrb[0].mxu0
      %v2621 = vadd.f32 0.0, %v2620
      %v2622 = vpop.f32.mrb[0].mxu0
      %v2623 = vadd.f32 0.0, %v2622
      %v2624 = vpop.f32.mrb[0].mxu0
      %v2625 = vadd.f32 0.0, %v2624
      %2626 = vdwg.mxu0
      %2627 = vmatprep.subr.bf16.mxu0 %v2185
      %2628 = vmatpush1.bf16.msra.mxu0 %v2184
      %2629 = vmatprep.subr.bf16.mxu0 %v2195
      %2630 = vmatpush1.bf16.msra.mxu0 %v2194
      %2631 = vmatprep.subr.bf16.mxu0 %v2205
      %2632 = vmatpush1.bf16.msra.mxu0 %v2204
      %2633 = vmatprep.subr.bf16.mxu0 %v2215
      %2634 = vmatpush1.bf16.msra.mxu0 %v2214
      %2635 = vmatprep.subr.bf16.mxu0 %v2225
      %2636 = vmatpush1.bf16.msra.mxu0 %v2224
      %2637 = vmatprep.subr.bf16.mxu0 %v2235
      %2638 = vmatpush1.bf16.msra.mxu0 %v2234
      %2639 = vmatprep.subr.bf16.mxu0 %v2245
      %2640 = vmatpush1.bf16.msra.mxu0 %v2244
      %2641 = vmatprep.subr.bf16.mxu0 %v2255
      %2642 = vmatpush1.bf16.msra.mxu0 %v2254
      %2643 = vmatprep.subr.bf16.mxu0 %v2265
      %2644 = vmatpush1.bf16.msra.mxu0 %v2264
      %2645 = vmatprep.subr.bf16.mxu0 %v2275
      %2646 = vmatpush1.bf16.msra.mxu0 %v2274
      %2647 = vmatprep.subr.bf16.mxu0 %v2285
      %2648 = vmatpush1.bf16.msra.mxu0 %v2284
      %2649 = vmatprep.subr.bf16.mxu0 %v2295
      %2650 = vmatpush1.bf16.msra.mxu0 %v2294
      %2651 = vmatprep.subr.bf16.mxu0 %v2305
      %2652 = vmatpush1.bf16.msra.mxu0 %v2304
      %2653 = vmatprep.subr.bf16.mxu0 %v2315
      %2654 = vmatpush1.bf16.msra.mxu0 %v2314
      %2655 = vmatprep.subr.bf16.mxu0 %v2325
      %2656 = vmatpush1.bf16.msra.mxu0 %v2324
      %2657 = vmatprep.subr.bf16.mxu0 %v2335
      %2658 = vmatpush1.bf16.msra.mxu0 %v2334
      %2659 = vmatprep.mubr.bf16.mxu0 %v1695
      %2660 = vmatmul.mubr.bf16.gmra.mrb[0].mxu0 %v1683
      %v2661 = vpop.f32.mrb[0].mxu0
      %v2662 = vadd.f32 0.0, %v2661
      %v2663 = vpop.f32.mrb[0].mxu0
      %v2664 = vadd.f32 0.0, %v2663
      %v2665 = vpop.f32.mrb[0].mxu0
      %v2666 = vadd.f32 0.0, %v2665
      %v2667 = vpop.f32.mrb[0].mxu0
      %v2668 = vadd.f32 0.0, %v2667
      %2669 = vdwg.mxu0
      %2670 = vmatprep.subr.bf16.mxu0 %v2187
      %2671 = vmatpush1.bf16.msra.mxu0 %v2186
      %2672 = vmatprep.subr.bf16.mxu0 %v2197
      %2673 = vmatpush1.bf16.msra.mxu0 %v2196
      %2674 = vmatprep.subr.bf16.mxu0 %v2207
      %2675 = vmatpush1.bf16.msra.mxu0 %v2206
      %2676 = vmatprep.subr.bf16.mxu0 %v2217
      %2677 = vmatpush1.bf16.msra.mxu0 %v2216
      %2678 = vmatprep.subr.bf16.mxu0 %v2227
      %2679 = vmatpush1.bf16.msra.mxu0 %v2226
      %2680 = vmatprep.subr.bf16.mxu0 %v2237
      %2681 = vmatpush1.bf16.msra.mxu0 %v2236
      %2682 = vmatprep.subr.bf16.mxu0 %v2247
      %2683 = vmatpush1.bf16.msra.mxu0 %v2246
      %2684 = vmatprep.subr.bf16.mxu0 %v2257
      %2685 = vmatpush1.bf16.msra.mxu0 %v2256
      %2686 = vmatprep.subr.bf16.mxu0 %v2267
      %2687 = vmatpush1.bf16.msra.mxu0 %v2266
      %2688 = vmatprep.subr.bf16.mxu0 %v2277
      %2689 = vmatpush1.bf16.msra.mxu0 %v2276
      %2690 = vmatprep.subr.bf16.mxu0 %v2287
      %2691 = vmatpush1.bf16.msra.mxu0 %v2286
      %2692 = vmatprep.subr.bf16.mxu0 %v2297
      %2693 = vmatpush1.bf16.msra.mxu0 %v2296
      %2694 = vmatprep.subr.bf16.mxu0 %v2307
      %2695 = vmatpush1.bf16.msra.mxu0 %v2306
      %2696 = vmatprep.subr.bf16.mxu0 %v2317
      %2697 = vmatpush1.bf16.msra.mxu0 %v2316
      %2698 = vmatprep.subr.bf16.mxu0 %v2327
      %2699 = vmatpush1.bf16.msra.mxu0 %v2326
      %2700 = vmatprep.subr.bf16.mxu0 %v2337
      %2701 = vmatpush1.bf16.msra.mxu0 %v2336
      %2702 = vmatprep.mubr.bf16.mxu0 %v1695
      %2703 = vmatmul.mubr.bf16.gmra.mrb[0].mxu0 %v1683
      %v2704 = vpop.f32.mrb[0].mxu0
      %v2705 = vadd.f32 0.0, %v2704
      %v2706 = vpop.f32.mrb[0].mxu0
      %v2707 = vadd.f32 0.0, %v2706
      %v2708 = vpop.f32.mrb[0].mxu0
      %v2709 = vadd.f32 0.0, %v2708
      %v2710 = vpop.f32.mrb[0].mxu0
      %v2711 = vadd.f32 0.0, %v2710
      %2712 = vdwg.mxu0
      %v2713 = vld [vmem:[#allocation3] sm:$0xff]
      %v2714 = vld [vmem:[#allocation3 + $0x8] sm:$0xff]
      %v2715 = vld [vmem:[#allocation3 + $0x10] sm:$0xff]
      %v2716 = vld [vmem:[#allocation3 + $0x18] sm:$0xff]
      %v2717 = vld [vmem:[#allocation3 + $0x20] sm:$0xff]
      %v2718 = vld [vmem:[#allocation3 + $0x28] sm:$0xff]
      %v2719 = vld [vmem:[#allocation3 + $0x30] sm:$0xff]
      %v2720 = vld [vmem:[#allocation3 + $0x38] sm:$0xff]
      %v2721 = vld [vmem:[#allocation3 + $0x40] sm:$0xff]
      %v2722 = vld [vmem:[#allocation3 + $0x48] sm:$0xff]
      %v2723 = vld [vmem:[#allocation3 + $0x50] sm:$0xff]
      %v2724 = vld [vmem:[#allocation3 + $0x58] sm:$0xff]
      %v2725 = vld [vmem:[#allocation3 + $0x60] sm:$0xff]
      %v2726 = vld [vmem:[#allocation3 + $0x68] sm:$0xff]
      %v2727 = vld [vmem:[#allocation3 + $0x70] sm:$0xff]
      %v2728 = vld [vmem:[#allocation3 + $0x78] sm:$0xff]
      %v2729 = vld [vmem:[#allocation3 + $0x80] sm:$0xff]
      %v2730 = vld [vmem:[#allocation3 + $0x88] sm:$0xff]
      %v2731 = vld [vmem:[#allocation3 + $0x90] sm:$0xff]
      %v2732 = vld [vmem:[#allocation3 + $0x98] sm:$0xff]
      %v2733 = vadd.f32 %v2713, %v2533
      %v2734 = vadd.f32 %v2714, %v2535
      %v2735 = vadd.f32 %v2715, %v2576
      %v2736 = vadd.f32 %v2716, %v2578
      %v2737 = vadd.f32 %v2717, %v2619
      %v2738 = vadd.f32 %v2718, %v2621
      %v2739 = vadd.f32 %v2719, %v2662
      %v2740 = vadd.f32 %v2720, %v2664
      %v2741 = vadd.f32 %v2721, %v2705
      %v2742 = vadd.f32 %v2722, %v2707
      %v2743 = vadd.f32 %v2723, %v2537
      %v2744 = vadd.f32 %v2724, %v2539
      %v2745 = vadd.f32 %v2725, %v2580
      %v2746 = vadd.f32 %v2726, %v2582
      %v2747 = vadd.f32 %v2727, %v2623
      %v2748 = vadd.f32 %v2728, %v2625
      %v2749 = vadd.f32 %v2729, %v2666
      %v2750 = vadd.f32 %v2730, %v2668
      %v2751 = vadd.f32 %v2731, %v2709
      %v2752 = vadd.f32 %v2732, %v2711
      %2753 = vst [vmem:[#allocation3] sm:$0xff] %v2733
      %2754 = vst [vmem:[#allocation3 + $0x8] sm:$0xff] %v2734
      %2755 = vst [vmem:[#allocation3 + $0x10] sm:$0xff] %v2735
      %2756 = vst [vmem:[#allocation3 + $0x18] sm:$0xff] %v2736
      %2757 = vst [vmem:[#allocation3 + $0x20] sm:$0xff] %v2737
      %2758 = vst [vmem:[#allocation3 + $0x28] sm:$0xff] %v2738
      %2759 = vst [vmem:[#allocation3 + $0x30] sm:$0xff] %v2739
      %2760 = vst [vmem:[#allocation3 + $0x38] sm:$0xff] %v2740
      %2761 = vst [vmem:[#allocation3 + $0x40] sm:$0xff] %v2741
      %2762 = vst [vmem:[#allocation3 + $0x48] sm:$0xff] %v2742
      %2763 = vst [vmem:[#allocation3 + $0x50] sm:$0xff] %v2743
      %2764 = vst [vmem:[#allocation3 + $0x58] sm:$0xff] %v2744
      %2765 = vst [vmem:[#allocation3 + $0x60] sm:$0xff] %v2745
      %2766 = vst [vmem:[#allocation3 + $0x68] sm:$0xff] %v2746
      %2767 = vst [vmem:[#allocation3 + $0x70] sm:$0xff] %v2747
      %2768 = vst [vmem:[#allocation3 + $0x78] sm:$0xff] %v2748
      %2769 = vst [vmem:[#allocation3 + $0x80] sm:$0xff] %v2749
      %2770 = vst [vmem:[#allocation3 + $0x88] sm:$0xff] %v2750
      %2771 = vst [vmem:[#allocation3 + $0x90] sm:$0xff] %v2751
      %2772 = vst [vmem:[#allocation3 + $0x98] sm:$0xff] %v2752
      %v2773 = vld [vmem:[#allocation2] sm:$0xfc]
      %v2774 = vld [vmem:[#allocation2 + $0x8] sm:$0xfc]
      %v2775 = vld [vmem:[#allocation2 + $0x10] sm:$0xff]
      %v2776 = vld [vmem:[#allocation2 + $0x18] sm:$0xff]
      %v2777 = vld [vmem:[#allocation2 + $0x20] sm:$0x3]
      %v2778 = vld [vmem:[#allocation2 + $0x28] sm:$0x3]
      %v2779 = vpack.c.bf16 %v2775, %v2773
      %v2780 = vpack.c.bf16 %v2776, %v2774
      %v2781 = vpack.c.bf16 %v2777, %v2777
      %v2782 = vpack.c.bf16 %v2778, %v2778
      %v2783 = vld [vmem:[%s2 + $0xa00] sm:$0xff]
      %v2784 = vld [vmem:[%s2 + $0xa08] sm:$0xff]
      %v2785 = vld [vmem:[%s2 + $0xa10] sm:$0xff]
      %v2786 = vld [vmem:[%s2 + $0xa18] sm:$0xff]
      %v2787 = vld [vmem:[%s2 + $0xa20] sm:$0xff]
      %v2788 = vld [vmem:[%s2 + $0xa28] sm:$0xff]
      %v2789 = vld [vmem:[%s2 + $0xa30] sm:$0xff]
      %v2790 = vld [vmem:[%s2 + $0xa38] sm:$0xff]
      %v2791 = vld [vmem:[%s2 + $0xa40] sm:$0xff]
      %v2792 = vld [vmem:[%s2 + $0xa48] sm:$0xff]
      %v2793 = vld [vmem:[%s2 + $0xa50] sm:$0xff]
      %v2794 = vld [vmem:[%s2 + $0xa58] sm:$0xff]
      %v2795 = vld [vmem:[%s2 + $0xa60] sm:$0xff]
      %v2796 = vld [vmem:[%s2 + $0xa68] sm:$0xff]
      %v2797 = vld [vmem:[%s2 + $0xa70] sm:$0xff]
      %v2798 = vld [vmem:[%s2 + $0xa78] sm:$0xff]
      %v2799 = vld [vmem:[%s2 + $0xa80] sm:$0xff]
      %v2800 = vld [vmem:[%s2 + $0xa88] sm:$0xff]
      %v2801 = vld [vmem:[%s2 + $0xa90] sm:$0xff]
      %v2802 = vld [vmem:[%s2 + $0xa98] sm:$0xff]
      %v2803 = vld [vmem:[%s2 + $0xaa0] sm:$0xff]
      %v2804 = vld [vmem:[%s2 + $0xaa8] sm:$0xff]
      %v2805 = vld [vmem:[%s2 + $0xab0] sm:$0xff]
      %v2806 = vld [vmem:[%s2 + $0xab8] sm:$0xff]
      %v2807 = vld [vmem:[%s2 + $0xac0] sm:$0xff]
      %v2808 = vld [vmem:[%s2 + $0xac8] sm:$0xff]
      %v2809 = vld [vmem:[%s2 + $0xad0] sm:$0xff]
      %v2810 = vld [vmem:[%s2 + $0xad8] sm:$0xff]
      %v2811 = vld [vmem:[%s2 + $0xae0] sm:$0xff]
      %v2812 = vld [vmem:[%s2 + $0xae8] sm:$0xff]
      %v2813 = vld [vmem:[%s2 + $0xaf0] sm:$0xff]
      %v2814 = vld [vmem:[%s2 + $0xaf8] sm:$0xff]
      %v2815 = vld [vmem:[%s2 + $0xb00] sm:$0xff]
      %v2816 = vld [vmem:[%s2 + $0xb08] sm:$0xff]
      %v2817 = vld [vmem:[%s2 + $0xb10] sm:$0xff]
      %v2818 = vld [vmem:[%s2 + $0xb18] sm:$0xff]
      %v2819 = vld [vmem:[%s2 + $0xb20] sm:$0xff]
      %v2820 = vld [vmem:[%s2 + $0xb28] sm:$0xff]
      %v2821 = vld [vmem:[%s2 + $0xb30] sm:$0xff]
      %v2822 = vld [vmem:[%s2 + $0xb38] sm:$0xff]
      %v2823 = vld [vmem:[%s2 + $0xb40] sm:$0xff]
      %v2824 = vld [vmem:[%s2 + $0xb48] sm:$0xff]
      %v2825 = vld [vmem:[%s2 + $0xb50] sm:$0xff]
      %v2826 = vld [vmem:[%s2 + $0xb58] sm:$0xff]
      %v2827 = vld [vmem:[%s2 + $0xb60] sm:$0xff]
      %v2828 = vld [vmem:[%s2 + $0xb68] sm:$0xff]
      %v2829 = vld [vmem:[%s2 + $0xb70] sm:$0xff]
      %v2830 = vld [vmem:[%s2 + $0xb78] sm:$0xff]
      %v2831 = vld [vmem:[%s2 + $0xb80] sm:$0xff]
      %v2832 = vld [vmem:[%s2 + $0xb88] sm:$0xff]
      %v2833 = vld [vmem:[%s2 + $0xb90] sm:$0xff]
      %v2834 = vld [vmem:[%s2 + $0xb98] sm:$0xff]
      %v2835 = vld [vmem:[%s2 + $0xba0] sm:$0xff]
      %v2836 = vld [vmem:[%s2 + $0xba8] sm:$0xff]
      %v2837 = vld [vmem:[%s2 + $0xbb0] sm:$0xff]
      %v2838 = vld [vmem:[%s2 + $0xbb8] sm:$0xff]
      %v2839 = vld [vmem:[%s2 + $0xbc0] sm:$0xff]
      %v2840 = vld [vmem:[%s2 + $0xbc8] sm:$0xff]
      %v2841 = vld [vmem:[%s2 + $0xbd0] sm:$0xff]
      %v2842 = vld [vmem:[%s2 + $0xbd8] sm:$0xff]
      %v2843 = vld [vmem:[%s2 + $0xbe0] sm:$0xff]
      %v2844 = vld [vmem:[%s2 + $0xbe8] sm:$0xff]
      %v2845 = vld [vmem:[%s2 + $0xbf0] sm:$0xff]
      %v2846 = vld [vmem:[%s2 + $0xbf8] sm:$0xff]
      %v2847 = vld [vmem:[%s2 + $0xc00] sm:$0xff]
      %v2848 = vld [vmem:[%s2 + $0xc08] sm:$0xff]
      %v2849 = vld [vmem:[%s2 + $0xc10] sm:$0xff]
      %v2850 = vld [vmem:[%s2 + $0xc18] sm:$0xff]
      %v2851 = vld [vmem:[%s2 + $0xc20] sm:$0xff]
      %v2852 = vld [vmem:[%s2 + $0xc28] sm:$0xff]
      %v2853 = vld [vmem:[%s2 + $0xc30] sm:$0xff]
      %v2854 = vld [vmem:[%s2 + $0xc38] sm:$0xff]
      %v2855 = vld [vmem:[%s2 + $0xc40] sm:$0xff]
      %v2856 = vld [vmem:[%s2 + $0xc48] sm:$0xff]
      %v2857 = vld [vmem:[%s2 + $0xc50] sm:$0xff]
      %v2858 = vld [vmem:[%s2 + $0xc58] sm:$0xff]
      %v2859 = vld [vmem:[%s2 + $0xc60] sm:$0xff]
      %v2860 = vld [vmem:[%s2 + $0xc68] sm:$0xff]
      %v2861 = vld [vmem:[%s2 + $0xc70] sm:$0xff]
      %v2862 = vld [vmem:[%s2 + $0xc78] sm:$0xff]
      %v2863 = vld [vmem:[%s2 + $0xc80] sm:$0xff]
      %v2864 = vld [vmem:[%s2 + $0xc88] sm:$0xff]
      %v2865 = vld [vmem:[%s2 + $0xc90] sm:$0xff]
      %v2866 = vld [vmem:[%s2 + $0xc98] sm:$0xff]
      %v2867 = vld [vmem:[%s2 + $0xca0] sm:$0xff]
      %v2868 = vld [vmem:[%s2 + $0xca8] sm:$0xff]
      %v2869 = vld [vmem:[%s2 + $0xcb0] sm:$0xff]
      %v2870 = vld [vmem:[%s2 + $0xcb8] sm:$0xff]
      %v2871 = vld [vmem:[%s2 + $0xcc0] sm:$0xff]
      %v2872 = vld [vmem:[%s2 + $0xcc8] sm:$0xff]
      %v2873 = vld [vmem:[%s2 + $0xcd0] sm:$0xff]
      %v2874 = vld [vmem:[%s2 + $0xcd8] sm:$0xff]
      %v2875 = vld [vmem:[%s2 + $0xce0] sm:$0xff]
      %v2876 = vld [vmem:[%s2 + $0xce8] sm:$0xff]
      %v2877 = vld [vmem:[%s2 + $0xcf0] sm:$0xff]
      %v2878 = vld [vmem:[%s2 + $0xcf8] sm:$0xff]
      %v2879 = vld [vmem:[%s2 + $0xd00] sm:$0xff]
      %v2880 = vld [vmem:[%s2 + $0xd08] sm:$0xff]
      %v2881 = vld [vmem:[%s2 + $0xd10] sm:$0xff]
      %v2882 = vld [vmem:[%s2 + $0xd18] sm:$0xff]
      %v2883 = vld [vmem:[%s2 + $0xd20] sm:$0xff]
      %v2884 = vld [vmem:[%s2 + $0xd28] sm:$0xff]
      %v2885 = vld [vmem:[%s2 + $0xd30] sm:$0xff]
      %v2886 = vld [vmem:[%s2 + $0xd38] sm:$0xff]
      %v2887 = vld [vmem:[%s2 + $0xd40] sm:$0xff]
      %v2888 = vld [vmem:[%s2 + $0xd48] sm:$0xff]
      %v2889 = vld [vmem:[%s2 + $0xd50] sm:$0xff]
      %v2890 = vld [vmem:[%s2 + $0xd58] sm:$0xff]
      %v2891 = vld [vmem:[%s2 + $0xd60] sm:$0xff]
      %v2892 = vld [vmem:[%s2 + $0xd68] sm:$0xff]
      %v2893 = vld [vmem:[%s2 + $0xd70] sm:$0xff]
      %v2894 = vld [vmem:[%s2 + $0xd78] sm:$0xff]
      %v2895 = vld [vmem:[%s2 + $0xd80] sm:$0xff]
      %v2896 = vld [vmem:[%s2 + $0xd88] sm:$0xff]
      %v2897 = vld [vmem:[%s2 + $0xd90] sm:$0xff]
      %v2898 = vld [vmem:[%s2 + $0xd98] sm:$0xff]
      %v2899 = vld [vmem:[%s2 + $0xda0] sm:$0xff]
      %v2900 = vld [vmem:[%s2 + $0xda8] sm:$0xff]
      %v2901 = vld [vmem:[%s2 + $0xdb0] sm:$0xff]
      %v2902 = vld [vmem:[%s2 + $0xdb8] sm:$0xff]
      %v2903 = vld [vmem:[%s2 + $0xdc0] sm:$0xff]
      %v2904 = vld [vmem:[%s2 + $0xdc8] sm:$0xff]
      %v2905 = vld [vmem:[%s2 + $0xdd0] sm:$0xff]
      %v2906 = vld [vmem:[%s2 + $0xdd8] sm:$0xff]
      %v2907 = vld [vmem:[%s2 + $0xde0] sm:$0xff]
      %v2908 = vld [vmem:[%s2 + $0xde8] sm:$0xff]
      %v2909 = vld [vmem:[%s2 + $0xdf0] sm:$0xff]
      %v2910 = vld [vmem:[%s2 + $0xdf8] sm:$0xff]
      %v2911 = vld [vmem:[%s2 + $0xe00] sm:$0xff]
      %v2912 = vld [vmem:[%s2 + $0xe08] sm:$0xff]
      %v2913 = vld [vmem:[%s2 + $0xe10] sm:$0xff]
      %v2914 = vld [vmem:[%s2 + $0xe18] sm:$0xff]
      %v2915 = vld [vmem:[%s2 + $0xe20] sm:$0xff]
      %v2916 = vld [vmem:[%s2 + $0xe28] sm:$0xff]
      %v2917 = vld [vmem:[%s2 + $0xe30] sm:$0xff]
      %v2918 = vld [vmem:[%s2 + $0xe38] sm:$0xff]
      %v2919 = vld [vmem:[%s2 + $0xe40] sm:$0xff]
      %v2920 = vld [vmem:[%s2 + $0xe48] sm:$0xff]
      %v2921 = vld [vmem:[%s2 + $0xe50] sm:$0xff]
      %v2922 = vld [vmem:[%s2 + $0xe58] sm:$0xff]
      %v2923 = vld [vmem:[%s2 + $0xe60] sm:$0xff]
      %v2924 = vld [vmem:[%s2 + $0xe68] sm:$0xff]
      %v2925 = vld [vmem:[%s2 + $0xe70] sm:$0xff]
      %v2926 = vld [vmem:[%s2 + $0xe78] sm:$0xff]
      %v2927 = vld [vmem:[%s2 + $0xe80] sm:$0xff]
      %v2928 = vld [vmem:[%s2 + $0xe88] sm:$0xff]
      %v2929 = vld [vmem:[%s2 + $0xe90] sm:$0xff]
      %v2930 = vld [vmem:[%s2 + $0xe98] sm:$0xff]
      %v2931 = vld [vmem:[%s2 + $0xea0] sm:$0xff]
      %v2932 = vld [vmem:[%s2 + $0xea8] sm:$0xff]
      %v2933 = vld [vmem:[%s2 + $0xeb0] sm:$0xff]
      %v2934 = vld [vmem:[%s2 + $0xeb8] sm:$0xff]
      %v2935 = vld [vmem:[%s2 + $0xec0] sm:$0xff]
      %v2936 = vld [vmem:[%s2 + $0xec8] sm:$0xff]
      %v2937 = vld [vmem:[%s2 + $0xed0] sm:$0xff]
      %v2938 = vld [vmem:[%s2 + $0xed8] sm:$0xff]
      %v2939 = vld [vmem:[%s2 + $0xee0] sm:$0xff]
      %v2940 = vld [vmem:[%s2 + $0xee8] sm:$0xff]
      %v2941 = vld [vmem:[%s2 + $0xef0] sm:$0xff]
      %v2942 = vld [vmem:[%s2 + $0xef8] sm:$0xff]
      %vm2947 = vcmask 1046528
      %v2948 = vrot.slane %v2779, 1
      %v2949 = vrot.slane %v2781, 1
      %v2950 = vsel %vm2947, %v2948, %v2949
      %v2951 = vrot.slane %v2780, 1
      %v2952 = vrot.slane %v2782, 1
      %v2953 = vsel %vm2947, %v2951, %v2952
      %v3116 = vunpack.c.l.b16 %v2783
      %v3117 = vunpack.c.h.b16 %v2783
      %v3118 = vunpack.c.l.b16 %v2784
      %v3119 = vunpack.c.h.b16 %v2784
      %v3120 = vunpack.c.l.b16 %v2785
      %v3121 = vunpack.c.h.b16 %v2785
      %v3122 = vunpack.c.l.b16 %v2786
      %v3123 = vunpack.c.h.b16 %v2786
      %v3124 = vunpack.c.l.b16 %v2787
      %v3125 = vunpack.c.h.b16 %v2787
      %v3126 = vunpack.c.l.b16 %v2788
      %v3127 = vunpack.c.h.b16 %v2788
      %v3128 = vunpack.c.l.b16 %v2789
      %v3129 = vunpack.c.h.b16 %v2789
      %v3130 = vunpack.c.l.b16 %v2790
      %v3131 = vunpack.c.h.b16 %v2790
      %v3132 = vunpack.c.l.b16 %v2791
      %v3133 = vunpack.c.h.b16 %v2791
      %v3134 = vunpack.c.l.b16 %v2792
      %v3135 = vunpack.c.h.b16 %v2792
      %v3136 = vunpack.c.l.b16 %v2793
      %v3137 = vunpack.c.h.b16 %v2793
      %v3138 = vunpack.c.l.b16 %v2794
      %v3139 = vunpack.c.h.b16 %v2794
      %v3140 = vunpack.c.l.b16 %v2795
      %v3141 = vunpack.c.h.b16 %v2795
      %v3142 = vunpack.c.l.b16 %v2796
      %v3143 = vunpack.c.h.b16 %v2796
      %v3144 = vunpack.c.l.b16 %v2797
      %v3145 = vunpack.c.h.b16 %v2797
      %v3146 = vunpack.c.l.b16 %v2798
      %v3147 = vunpack.c.h.b16 %v2798
      %v3148 = vunpack.c.l.b16 %v2799
      %v3149 = vunpack.c.h.b16 %v2799
      %v3150 = vunpack.c.l.b16 %v2800
      %v3151 = vunpack.c.h.b16 %v2800
      %v3152 = vunpack.c.l.b16 %v2801
      %v3153 = vunpack.c.h.b16 %v2801
      %v3154 = vunpack.c.l.b16 %v2802
      %v3155 = vunpack.c.h.b16 %v2802
      %v3156 = vunpack.c.l.b16 %v2803
      %v3157 = vunpack.c.h.b16 %v2803
      %v3158 = vunpack.c.l.b16 %v2804
      %v3159 = vunpack.c.h.b16 %v2804
      %v3160 = vunpack.c.l.b16 %v2805
      %v3161 = vunpack.c.h.b16 %v2805
      %v3162 = vunpack.c.l.b16 %v2806
      %v3163 = vunpack.c.h.b16 %v2806
      %v3164 = vunpack.c.l.b16 %v2807
      %v3165 = vunpack.c.h.b16 %v2807
      %v3166 = vunpack.c.l.b16 %v2808
      %v3167 = vunpack.c.h.b16 %v2808
      %v3168 = vunpack.c.l.b16 %v2809
      %v3169 = vunpack.c.h.b16 %v2809
      %v3170 = vunpack.c.l.b16 %v2810
      %v3171 = vunpack.c.h.b16 %v2810
      %v3172 = vunpack.c.l.b16 %v2811
      %v3173 = vunpack.c.h.b16 %v2811
      %v3174 = vunpack.c.l.b16 %v2812
      %v3175 = vunpack.c.h.b16 %v2812
      %v3176 = vunpack.c.l.b16 %v2813
      %v3177 = vunpack.c.h.b16 %v2813
      %v3178 = vunpack.c.l.b16 %v2814
      %v3179 = vunpack.c.h.b16 %v2814
      %v3180 = vunpack.c.l.b16 %v2815
      %v3181 = vunpack.c.h.b16 %v2815
      %v3182 = vunpack.c.l.b16 %v2816
      %v3183 = vunpack.c.h.b16 %v2816
      %v3184 = vunpack.c.l.b16 %v2817
      %v3185 = vunpack.c.h.b16 %v2817
      %v3186 = vunpack.c.l.b16 %v2818
      %v3187 = vunpack.c.h.b16 %v2818
      %v3188 = vunpack.c.l.b16 %v2819
      %v3189 = vunpack.c.h.b16 %v2819
      %v3190 = vunpack.c.l.b16 %v2820
      %v3191 = vunpack.c.h.b16 %v2820
      %v3192 = vunpack.c.l.b16 %v2821
      %v3193 = vunpack.c.h.b16 %v2821
      %v3194 = vunpack.c.l.b16 %v2822
      %v3195 = vunpack.c.h.b16 %v2822
      %v3196 = vunpack.c.l.b16 %v2823
      %v3197 = vunpack.c.h.b16 %v2823
      %v3198 = vunpack.c.l.b16 %v2824
      %v3199 = vunpack.c.h.b16 %v2824
      %v3200 = vunpack.c.l.b16 %v2825
      %v3201 = vunpack.c.h.b16 %v2825
      %v3202 = vunpack.c.l.b16 %v2826
      %v3203 = vunpack.c.h.b16 %v2826
      %v3204 = vunpack.c.l.b16 %v2827
      %v3205 = vunpack.c.h.b16 %v2827
      %v3206 = vunpack.c.l.b16 %v2828
      %v3207 = vunpack.c.h.b16 %v2828
      %v3208 = vunpack.c.l.b16 %v2829
      %v3209 = vunpack.c.h.b16 %v2829
      %v3210 = vunpack.c.l.b16 %v2830
      %v3211 = vunpack.c.h.b16 %v2830
      %v3212 = vunpack.c.l.b16 %v2831
      %v3213 = vunpack.c.h.b16 %v2831
      %v3214 = vunpack.c.l.b16 %v2832
      %v3215 = vunpack.c.h.b16 %v2832
      %v3216 = vunpack.c.l.b16 %v2833
      %v3217 = vunpack.c.h.b16 %v2833
      %v3218 = vunpack.c.l.b16 %v2834
      %v3219 = vunpack.c.h.b16 %v2834
      %v3220 = vunpack.c.l.b16 %v2835
      %v3221 = vunpack.c.h.b16 %v2835
      %v3222 = vunpack.c.l.b16 %v2836
      %v3223 = vunpack.c.h.b16 %v2836
      %v3224 = vunpack.c.l.b16 %v2837
      %v3225 = vunpack.c.h.b16 %v2837
      %v3226 = vunpack.c.l.b16 %v2838
      %v3227 = vunpack.c.h.b16 %v2838
      %v3228 = vunpack.c.l.b16 %v2839
      %v3229 = vunpack.c.h.b16 %v2839
      %v3230 = vunpack.c.l.b16 %v2840
      %v3231 = vunpack.c.h.b16 %v2840
      %v3232 = vunpack.c.l.b16 %v2841
      %v3233 = vunpack.c.h.b16 %v2841
      %v3234 = vunpack.c.l.b16 %v2842
      %v3235 = vunpack.c.h.b16 %v2842
      %v3236 = vunpack.c.l.b16 %v2843
      %v3237 = vunpack.c.h.b16 %v2843
      %v3238 = vunpack.c.l.b16 %v2844
      %v3239 = vunpack.c.h.b16 %v2844
      %v3240 = vunpack.c.l.b16 %v2845
      %v3241 = vunpack.c.h.b16 %v2845
      %v3242 = vunpack.c.l.b16 %v2846
      %v3243 = vunpack.c.h.b16 %v2846
      %v3244 = vunpack.c.l.b16 %v2847
      %v3245 = vunpack.c.h.b16 %v2847
      %v3246 = vunpack.c.l.b16 %v2848
      %v3247 = vunpack.c.h.b16 %v2848
      %v3248 = vunpack.c.l.b16 %v2849
      %v3249 = vunpack.c.h.b16 %v2849
      %v3250 = vunpack.c.l.b16 %v2850
      %v3251 = vunpack.c.h.b16 %v2850
      %v3252 = vunpack.c.l.b16 %v2851
      %v3253 = vunpack.c.h.b16 %v2851
      %v3254 = vunpack.c.l.b16 %v2852
      %v3255 = vunpack.c.h.b16 %v2852
      %v3256 = vunpack.c.l.b16 %v2853
      %v3257 = vunpack.c.h.b16 %v2853
      %v3258 = vunpack.c.l.b16 %v2854
      %v3259 = vunpack.c.h.b16 %v2854
      %v3260 = vunpack.c.l.b16 %v2855
      %v3261 = vunpack.c.h.b16 %v2855
      %v3262 = vunpack.c.l.b16 %v2856
      %v3263 = vunpack.c.h.b16 %v2856
      %v3264 = vunpack.c.l.b16 %v2857
      %v3265 = vunpack.c.h.b16 %v2857
      %v3266 = vunpack.c.l.b16 %v2858
      %v3267 = vunpack.c.h.b16 %v2858
      %v3268 = vunpack.c.l.b16 %v2859
      %v3269 = vunpack.c.h.b16 %v2859
      %v3270 = vunpack.c.l.b16 %v2860
      %v3271 = vunpack.c.h.b16 %v2860
      %v3272 = vunpack.c.l.b16 %v2861
      %v3273 = vunpack.c.h.b16 %v2861
      %v3274 = vunpack.c.l.b16 %v2862
      %v3275 = vunpack.c.h.b16 %v2862
      %v3276 = vunpack.c.l.b16 %v2863
      %v3277 = vunpack.c.h.b16 %v2863
      %v3278 = vunpack.c.l.b16 %v2864
      %v3279 = vunpack.c.h.b16 %v2864
      %v3280 = vunpack.c.l.b16 %v2865
      %v3281 = vunpack.c.h.b16 %v2865
      %v3282 = vunpack.c.l.b16 %v2866
      %v3283 = vunpack.c.h.b16 %v2866
      %v3284 = vunpack.c.l.b16 %v2867
      %v3285 = vunpack.c.h.b16 %v2867
      %v3286 = vunpack.c.l.b16 %v2868
      %v3287 = vunpack.c.h.b16 %v2868
      %v3288 = vunpack.c.l.b16 %v2869
      %v3289 = vunpack.c.h.b16 %v2869
      %v3290 = vunpack.c.l.b16 %v2870
      %v3291 = vunpack.c.h.b16 %v2870
      %v3292 = vunpack.c.l.b16 %v2871
      %v3293 = vunpack.c.h.b16 %v2871
      %v3294 = vunpack.c.l.b16 %v2872
      %v3295 = vunpack.c.h.b16 %v2872
      %v3296 = vunpack.c.l.b16 %v2873
      %v3297 = vunpack.c.h.b16 %v2873
      %v3298 = vunpack.c.l.b16 %v2874
      %v3299 = vunpack.c.h.b16 %v2874
      %v3300 = vunpack.c.l.b16 %v2875
      %v3301 = vunpack.c.h.b16 %v2875
      %v3302 = vunpack.c.l.b16 %v2876
      %v3303 = vunpack.c.h.b16 %v2876
      %v3304 = vunpack.c.l.b16 %v2877
      %v3305 = vunpack.c.h.b16 %v2877
      %v3306 = vunpack.c.l.b16 %v2878
      %v3307 = vunpack.c.h.b16 %v2878
      %v3308 = vunpack.c.l.b16 %v2879
      %v3309 = vunpack.c.h.b16 %v2879
      %v3310 = vunpack.c.l.b16 %v2880
      %v3311 = vunpack.c.h.b16 %v2880
      %v3312 = vunpack.c.l.b16 %v2881
      %v3313 = vunpack.c.h.b16 %v2881
      %v3314 = vunpack.c.l.b16 %v2882
      %v3315 = vunpack.c.h.b16 %v2882
      %v3316 = vunpack.c.l.b16 %v2883
      %v3317 = vunpack.c.h.b16 %v2883
      %v3318 = vunpack.c.l.b16 %v2884
      %v3319 = vunpack.c.h.b16 %v2884
      %v3320 = vunpack.c.l.b16 %v2885
      %v3321 = vunpack.c.h.b16 %v2885
      %v3322 = vunpack.c.l.b16 %v2886
      %v3323 = vunpack.c.h.b16 %v2886
      %v3324 = vunpack.c.l.b16 %v2887
      %v3325 = vunpack.c.h.b16 %v2887
      %v3326 = vunpack.c.l.b16 %v2888
      %v3327 = vunpack.c.h.b16 %v2888
      %v3328 = vunpack.c.l.b16 %v2889
      %v3329 = vunpack.c.h.b16 %v2889
      %v3330 = vunpack.c.l.b16 %v2890
      %v3331 = vunpack.c.h.b16 %v2890
      %v3332 = vunpack.c.l.b16 %v2891
      %v3333 = vunpack.c.h.b16 %v2891
      %v3334 = vunpack.c.l.b16 %v2892
      %v3335 = vunpack.c.h.b16 %v2892
      %v3336 = vunpack.c.l.b16 %v2893
      %v3337 = vunpack.c.h.b16 %v2893
      %v3338 = vunpack.c.l.b16 %v2894
      %v3339 = vunpack.c.h.b16 %v2894
      %v3340 = vunpack.c.l.b16 %v2895
      %v3341 = vunpack.c.h.b16 %v2895
      %v3342 = vunpack.c.l.b16 %v2896
      %v3343 = vunpack.c.h.b16 %v2896
      %v3344 = vunpack.c.l.b16 %v2897
      %v3345 = vunpack.c.h.b16 %v2897
      %v3346 = vunpack.c.l.b16 %v2898
      %v3347 = vunpack.c.h.b16 %v2898
      %v3348 = vunpack.c.l.b16 %v2899
      %v3349 = vunpack.c.h.b16 %v2899
      %v3350 = vunpack.c.l.b16 %v2900
      %v3351 = vunpack.c.h.b16 %v2900
      %v3352 = vunpack.c.l.b16 %v2901
      %v3353 = vunpack.c.h.b16 %v2901
      %v3354 = vunpack.c.l.b16 %v2902
      %v3355 = vunpack.c.h.b16 %v2902
      %v3356 = vunpack.c.l.b16 %v2903
      %v3357 = vunpack.c.h.b16 %v2903
      %v3358 = vunpack.c.l.b16 %v2904
      %v3359 = vunpack.c.h.b16 %v2904
      %v3360 = vunpack.c.l.b16 %v2905
      %v3361 = vunpack.c.h.b16 %v2905
      %v3362 = vunpack.c.l.b16 %v2906
      %v3363 = vunpack.c.h.b16 %v2906
      %v3364 = vunpack.c.l.b16 %v2907
      %v3365 = vunpack.c.h.b16 %v2907
      %v3366 = vunpack.c.l.b16 %v2908
      %v3367 = vunpack.c.h.b16 %v2908
      %v3368 = vunpack.c.l.b16 %v2909
      %v3369 = vunpack.c.h.b16 %v2909
      %v3370 = vunpack.c.l.b16 %v2910
      %v3371 = vunpack.c.h.b16 %v2910
      %v3372 = vunpack.c.l.b16 %v2911
      %v3373 = vunpack.c.h.b16 %v2911
      %v3374 = vunpack.c.l.b16 %v2912
      %v3375 = vunpack.c.h.b16 %v2912
      %v3376 = vunpack.c.l.b16 %v2913
      %v3377 = vunpack.c.h.b16 %v2913
      %v3378 = vunpack.c.l.b16 %v2914
      %v3379 = vunpack.c.h.b16 %v2914
      %v3380 = vunpack.c.l.b16 %v2915
      %v3381 = vunpack.c.h.b16 %v2915
      %v3382 = vunpack.c.l.b16 %v2916
      %v3383 = vunpack.c.h.b16 %v2916
      %v3384 = vunpack.c.l.b16 %v2917
      %v3385 = vunpack.c.h.b16 %v2917
      %v3386 = vunpack.c.l.b16 %v2918
      %v3387 = vunpack.c.h.b16 %v2918
      %v3388 = vunpack.c.l.b16 %v2919
      %v3389 = vunpack.c.h.b16 %v2919
      %v3390 = vunpack.c.l.b16 %v2920
      %v3391 = vunpack.c.h.b16 %v2920
      %v3392 = vunpack.c.l.b16 %v2921
      %v3393 = vunpack.c.h.b16 %v2921
      %v3394 = vunpack.c.l.b16 %v2922
      %v3395 = vunpack.c.h.b16 %v2922
      %v3396 = vunpack.c.l.b16 %v2923
      %v3397 = vunpack.c.h.b16 %v2923
      %v3398 = vunpack.c.l.b16 %v2924
      %v3399 = vunpack.c.h.b16 %v2924
      %v3400 = vunpack.c.l.b16 %v2925
      %v3401 = vunpack.c.h.b16 %v2925
      %v3402 = vunpack.c.l.b16 %v2926
      %v3403 = vunpack.c.h.b16 %v2926
      %v3404 = vunpack.c.l.b16 %v2927
      %v3405 = vunpack.c.h.b16 %v2927
      %v3406 = vunpack.c.l.b16 %v2928
      %v3407 = vunpack.c.h.b16 %v2928
      %v3408 = vunpack.c.l.b16 %v2929
      %v3409 = vunpack.c.h.b16 %v2929
      %v3410 = vunpack.c.l.b16 %v2930
      %v3411 = vunpack.c.h.b16 %v2930
      %v3412 = vunpack.c.l.b16 %v2931
      %v3413 = vunpack.c.h.b16 %v2931
      %v3414 = vunpack.c.l.b16 %v2932
      %v3415 = vunpack.c.h.b16 %v2932
      %v3416 = vunpack.c.l.b16 %v2933
      %v3417 = vunpack.c.h.b16 %v2933
      %v3418 = vunpack.c.l.b16 %v2934
      %v3419 = vunpack.c.h.b16 %v2934
      %v3420 = vunpack.c.l.b16 %v2935
      %v3421 = vunpack.c.h.b16 %v2935
      %v3422 = vunpack.c.l.b16 %v2936
      %v3423 = vunpack.c.h.b16 %v2936
      %v3424 = vunpack.c.l.b16 %v2937
      %v3425 = vunpack.c.h.b16 %v2937
      %v3426 = vunpack.c.l.b16 %v2938
      %v3427 = vunpack.c.h.b16 %v2938
      %v3428 = vunpack.c.l.b16 %v2939
      %v3429 = vunpack.c.h.b16 %v2939
      %v3430 = vunpack.c.l.b16 %v2940
      %v3431 = vunpack.c.h.b16 %v2940
      %v3432 = vunpack.c.l.b16 %v2941
      %v3433 = vunpack.c.h.b16 %v2941
      %v3434 = vunpack.c.l.b16 %v2942
      %v3435 = vunpack.c.h.b16 %v2942
      %v3436 = vpack.c.b16 %v3126, %v3116
      %v3437 = vpack.c.b16 %v3127, %v3117
      %v3438 = vpack.c.b16 %v3128, %v3118
      %v3439 = vpack.c.b16 %v3129, %v3119
      %v3440 = vpack.c.b16 %v3130, %v3120
      %v3441 = vpack.c.b16 %v3131, %v3121
      %v3442 = vpack.c.b16 %v3132, %v3122
      %v3443 = vpack.c.b16 %v3133, %v3123
      %v3444 = vpack.c.b16 %v3134, %v3124
      %v3445 = vpack.c.b16 %v3135, %v3125
      %v3446 = vpack.c.b16 %v3146, %v3136
      %v3447 = vpack.c.b16 %v3147, %v3137
      %v3448 = vpack.c.b16 %v3148, %v3138
      %v3449 = vpack.c.b16 %v3149, %v3139
      %v3450 = vpack.c.b16 %v3150, %v3140
      %v3451 = vpack.c.b16 %v3151, %v3141
      %v3452 = vpack.c.b16 %v3152, %v3142
      %v3453 = vpack.c.b16 %v3153, %v3143
      %v3454 = vpack.c.b16 %v3154, %v3144
      %v3455 = vpack.c.b16 %v3155, %v3145
      %v3456 = vpack.c.b16 %v3166, %v3156
      %v3457 = vpack.c.b16 %v3167, %v3157
      %v3458 = vpack.c.b16 %v3168, %v3158
      %v3459 = vpack.c.b16 %v3169, %v3159
      %v3460 = vpack.c.b16 %v3170, %v3160
      %v3461 = vpack.c.b16 %v3171, %v3161
      %v3462 = vpack.c.b16 %v3172, %v3162
      %v3463 = vpack.c.b16 %v3173, %v3163
      %v3464 = vpack.c.b16 %v3174, %v3164
      %v3465 = vpack.c.b16 %v3175, %v3165
      %v3466 = vpack.c.b16 %v3186, %v3176
      %v3467 = vpack.c.b16 %v3187, %v3177
      %v3468 = vpack.c.b16 %v3188, %v3178
      %v3469 = vpack.c.b16 %v3189, %v3179
      %v3470 = vpack.c.b16 %v3190, %v3180
      %v3471 = vpack.c.b16 %v3191, %v3181
      %v3472 = vpack.c.b16 %v3192, %v3182
      %v3473 = vpack.c.b16 %v3193, %v3183
      %v3474 = vpack.c.b16 %v3194, %v3184
      %v3475 = vpack.c.b16 %v3195, %v3185
      %v3476 = vpack.c.b16 %v3206, %v3196
      %v3477 = vpack.c.b16 %v3207, %v3197
      %v3478 = vpack.c.b16 %v3208, %v3198
      %v3479 = vpack.c.b16 %v3209, %v3199
      %v3480 = vpack.c.b16 %v3210, %v3200
      %v3481 = vpack.c.b16 %v3211, %v3201
      %v3482 = vpack.c.b16 %v3212, %v3202
      %v3483 = vpack.c.b16 %v3213, %v3203
      %v3484 = vpack.c.b16 %v3214, %v3204
      %v3485 = vpack.c.b16 %v3215, %v3205
      %v3486 = vpack.c.b16 %v3226, %v3216
      %v3487 = vpack.c.b16 %v3227, %v3217
      %v3488 = vpack.c.b16 %v3228, %v3218
      %v3489 = vpack.c.b16 %v3229, %v3219
      %v3490 = vpack.c.b16 %v3230, %v3220
      %v3491 = vpack.c.b16 %v3231, %v3221
      %v3492 = vpack.c.b16 %v3232, %v3222
      %v3493 = vpack.c.b16 %v3233, %v3223
      %v3494 = vpack.c.b16 %v3234, %v3224
      %v3495 = vpack.c.b16 %v3235, %v3225
      %v3496 = vpack.c.b16 %v3246, %v3236
      %v3497 = vpack.c.b16 %v3247, %v3237
      %v3498 = vpack.c.b16 %v3248, %v3238
      %v3499 = vpack.c.b16 %v3249, %v3239
      %v3500 = vpack.c.b16 %v3250, %v3240
      %v3501 = vpack.c.b16 %v3251, %v3241
      %v3502 = vpack.c.b16 %v3252, %v3242
      %v3503 = vpack.c.b16 %v3253, %v3243
      %v3504 = vpack.c.b16 %v3254, %v3244
      %v3505 = vpack.c.b16 %v3255, %v3245
      %v3506 = vpack.c.b16 %v3266, %v3256
      %v3507 = vpack.c.b16 %v3267, %v3257
      %v3508 = vpack.c.b16 %v3268, %v3258
      %v3509 = vpack.c.b16 %v3269, %v3259
      %v3510 = vpack.c.b16 %v3270, %v3260
      %v3511 = vpack.c.b16 %v3271, %v3261
      %v3512 = vpack.c.b16 %v3272, %v3262
      %v3513 = vpack.c.b16 %v3273, %v3263
      %v3514 = vpack.c.b16 %v3274, %v3264
      %v3515 = vpack.c.b16 %v3275, %v3265
      %v3516 = vpack.c.b16 %v3286, %v3276
      %v3517 = vpack.c.b16 %v3287, %v3277
      %v3518 = vpack.c.b16 %v3288, %v3278
      %v3519 = vpack.c.b16 %v3289, %v3279
      %v3520 = vpack.c.b16 %v3290, %v3280
      %v3521 = vpack.c.b16 %v3291, %v3281
      %v3522 = vpack.c.b16 %v3292, %v3282
      %v3523 = vpack.c.b16 %v3293, %v3283
      %v3524 = vpack.c.b16 %v3294, %v3284
      %v3525 = vpack.c.b16 %v3295, %v3285
      %v3526 = vpack.c.b16 %v3306, %v3296
      %v3527 = vpack.c.b16 %v3307, %v3297
      %v3528 = vpack.c.b16 %v3308, %v3298
      %v3529 = vpack.c.b16 %v3309, %v3299
      %v3530 = vpack.c.b16 %v3310, %v3300
      %v3531 = vpack.c.b16 %v3311, %v3301
      %v3532 = vpack.c.b16 %v3312, %v3302
      %v3533 = vpack.c.b16 %v3313, %v3303
      %v3534 = vpack.c.b16 %v3314, %v3304
      %v3535 = vpack.c.b16 %v3315, %v3305
      %v3536 = vpack.c.b16 %v3326, %v3316
      %v3537 = vpack.c.b16 %v3327, %v3317
      %v3538 = vpack.c.b16 %v3328, %v3318
      %v3539 = vpack.c.b16 %v3329, %v3319
      %v3540 = vpack.c.b16 %v3330, %v3320
      %v3541 = vpack.c.b16 %v3331, %v3321
      %v3542 = vpack.c.b16 %v3332, %v3322
      %v3543 = vpack.c.b16 %v3333, %v3323
      %v3544 = vpack.c.b16 %v3334, %v3324
      %v3545 = vpack.c.b16 %v3335, %v3325
      %v3546 = vpack.c.b16 %v3346, %v3336
      %v3547 = vpack.c.b16 %v3347, %v3337
      %v3548 = vpack.c.b16 %v3348, %v3338
      %v3549 = vpack.c.b16 %v3349, %v3339
      %v3550 = vpack.c.b16 %v3350, %v3340
      %v3551 = vpack.c.b16 %v3351, %v3341
      %v3552 = vpack.c.b16 %v3352, %v3342
      %v3553 = vpack.c.b16 %v3353, %v3343
      %v3554 = vpack.c.b16 %v3354, %v3344
      %v3555 = vpack.c.b16 %v3355, %v3345
      %v3556 = vpack.c.b16 %v3366, %v3356
      %v3557 = vpack.c.b16 %v3367, %v3357
      %v3558 = vpack.c.b16 %v3368, %v3358
      %v3559 = vpack.c.b16 %v3369, %v3359
      %v3560 = vpack.c.b16 %v3370, %v3360
      %v3561 = vpack.c.b16 %v3371, %v3361
      %v3562 = vpack.c.b16 %v3372, %v3362
      %v3563 = vpack.c.b16 %v3373, %v3363
      %v3564 = vpack.c.b16 %v3374, %v3364
      %v3565 = vpack.c.b16 %v3375, %v3365
      %v3566 = vpack.c.b16 %v3386, %v3376
      %v3567 = vpack.c.b16 %v3387, %v3377
      %v3568 = vpack.c.b16 %v3388, %v3378
      %v3569 = vpack.c.b16 %v3389, %v3379
      %v3570 = vpack.c.b16 %v3390, %v3380
      %v3571 = vpack.c.b16 %v3391, %v3381
      %v3572 = vpack.c.b16 %v3392, %v3382
      %v3573 = vpack.c.b16 %v3393, %v3383
      %v3574 = vpack.c.b16 %v3394, %v3384
      %v3575 = vpack.c.b16 %v3395, %v3385
      %v3576 = vpack.c.b16 %v3406, %v3396
      %v3577 = vpack.c.b16 %v3407, %v3397
      %v3578 = vpack.c.b16 %v3408, %v3398
      %v3579 = vpack.c.b16 %v3409, %v3399
      %v3580 = vpack.c.b16 %v3410, %v3400
      %v3581 = vpack.c.b16 %v3411, %v3401
      %v3582 = vpack.c.b16 %v3412, %v3402
      %v3583 = vpack.c.b16 %v3413, %v3403
      %v3584 = vpack.c.b16 %v3414, %v3404
      %v3585 = vpack.c.b16 %v3415, %v3405
      %v3586 = vpack.c.b16 %v3426, %v3416
      %v3587 = vpack.c.b16 %v3427, %v3417
      %v3588 = vpack.c.b16 %v3428, %v3418
      %v3589 = vpack.c.b16 %v3429, %v3419
      %v3590 = vpack.c.b16 %v3430, %v3420
      %v3591 = vpack.c.b16 %v3431, %v3421
      %v3592 = vpack.c.b16 %v3432, %v3422
      %v3593 = vpack.c.b16 %v3433, %v3423
      %v3594 = vpack.c.b16 %v3434, %v3424
      %v3595 = vpack.c.b16 %v3435, %v3425
      %3756 = vmatprep.subr.bf16.mxu0 %v3437
      %3757 = vmatpush1.bf16.msra.mxu0 %v3436
      %3758 = vmatprep.subr.bf16.mxu0 %v3447
      %3759 = vmatpush1.bf16.msra.mxu0 %v3446
      %3760 = vmatprep.subr.bf16.mxu0 %v3457
      %3761 = vmatpush1.bf16.msra.mxu0 %v3456
      %3762 = vmatprep.subr.bf16.mxu0 %v3467
      %3763 = vmatpush1.bf16.msra.mxu0 %v3466
      %3764 = vmatprep.subr.bf16.mxu0 %v3477
      %3765 = vmatpush1.bf16.msra.mxu0 %v3476
      %3766 = vmatprep.subr.bf16.mxu0 %v3487
      %3767 = vmatpush1.bf16.msra.mxu0 %v3486
      %3768 = vmatprep.subr.bf16.mxu0 %v3497
      %3769 = vmatpush1.bf16.msra.mxu0 %v3496
      %3770 = vmatprep.subr.bf16.mxu0 %v3507
      %3771 = vmatpush1.bf16.msra.mxu0 %v3506
      %3772 = vmatprep.subr.bf16.mxu0 %v3517
      %3773 = vmatpush1.bf16.msra.mxu0 %v3516
      %3774 = vmatprep.subr.bf16.mxu0 %v3527
      %3775 = vmatpush1.bf16.msra.mxu0 %v3526
      %3776 = vmatprep.subr.bf16.mxu0 %v3537
      %3777 = vmatpush1.bf16.msra.mxu0 %v3536
      %3778 = vmatprep.subr.bf16.mxu0 %v3547
      %3779 = vmatpush1.bf16.msra.mxu0 %v3546
      %3780 = vmatprep.subr.bf16.mxu0 %v3557
      %3781 = vmatpush1.bf16.msra.mxu0 %v3556
      %3782 = vmatprep.subr.bf16.mxu0 %v3567
      %3783 = vmatpush1.bf16.msra.mxu0 %v3566
      %3784 = vmatprep.subr.bf16.mxu0 %v3577
      %3785 = vmatpush1.bf16.msra.mxu0 %v3576
      %3786 = vmatprep.subr.bf16.mxu0 %v3587
      %3787 = vmatpush1.bf16.msra.mxu0 %v3586
      %3788 = vmatprep.mubr.bf16.mxu0 %v2953
      %3789 = vmatmul.mubr.bf16.gmra.mrb[0].mxu0 %v2950
      %v3790 = vpop.f32.mrb[0].mxu0
      %v3791 = vadd.f32 0.0, %v3790
      %v3792 = vpop.f32.mrb[0].mxu0
      %v3793 = vadd.f32 0.0, %v3792
      %v3794 = vpop.f32.mrb[0].mxu0
      %v3795 = vadd.f32 0.0, %v3794
      %v3796 = vpop.f32.mrb[0].mxu0
      %v3797 = vadd.f32 0.0, %v3796
      %3798 = vdwg.mxu0
      %3799 = vmatprep.subr.bf16.mxu0 %v3439
      %3800 = vmatpush1.bf16.msra.mxu0 %v3438
      %3801 = vmatprep.subr.bf16.mxu0 %v3449
      %3802 = vmatpush1.bf16.msra.mxu0 %v3448
      %3803 = vmatprep.subr.bf16.mxu0 %v3459
      %3804 = vmatpush1.bf16.msra.mxu0 %v3458
      %3805 = vmatprep.subr.bf16.mxu0 %v3469
      %3806 = vmatpush1.bf16.msra.mxu0 %v3468
      %3807 = vmatprep.subr.bf16.mxu0 %v3479
      %3808 = vmatpush1.bf16.msra.mxu0 %v3478
      %3809 = vmatprep.subr.bf16.mxu0 %v3489
      %3810 = vmatpush1.bf16.msra.mxu0 %v3488
      %3811 = vmatprep.subr.bf16.mxu0 %v3499
      %3812 = vmatpush1.bf16.msra.mxu0 %v3498
      %3813 = vmatprep.subr.bf16.mxu0 %v3509
      %3814 = vmatpush1.bf16.msra.mxu0 %v3508
      %3815 = vmatprep.subr.bf16.mxu0 %v3519
      %3816 = vmatpush1.bf16.msra.mxu0 %v3518
      %3817 = vmatprep.subr.bf16.mxu0 %v3529
      %3818 = vmatpush1.bf16.msra.mxu0 %v3528
      %3819 = vmatprep.subr.bf16.mxu0 %v3539
      %3820 = vmatpush1.bf16.msra.mxu0 %v3538
      %3821 = vmatprep.subr.bf16.mxu0 %v3549
      %3822 = vmatpush1.bf16.msra.mxu0 %v3548
      %3823 = vmatprep.subr.bf16.mxu0 %v3559
      %3824 = vmatpush1.bf16.msra.mxu0 %v3558
      %3825 = vmatprep.subr.bf16.mxu0 %v3569
      %3826 = vmatpush1.bf16.msra.mxu0 %v3568
      %3827 = vmatprep.subr.bf16.mxu0 %v3579
      %3828 = vmatpush1.bf16.msra.mxu0 %v3578
      %3829 = vmatprep.subr.bf16.mxu0 %v3589
      %3830 = vmatpush1.bf16.msra.mxu0 %v3588
      %3831 = vmatprep.mubr.bf16.mxu0 %v2953
      %3832 = vmatmul.mubr.bf16.gmra.mrb[0].mxu0 %v2950
      %v3833 = vpop.f32.mrb[0].mxu0
      %v3834 = vadd.f32 0.0, %v3833
      %v3835 = vpop.f32.mrb[0].mxu0
      %v3836 = vadd.f32 0.0, %v3835
      %v3837 = vpop.f32.mrb[0].mxu0
      %v3838 = vadd.f32 0.0, %v3837
      %v3839 = vpop.f32.mrb[0].mxu0
      %v3840 = vadd.f32 0.0, %v3839
      %3841 = vdwg.mxu0
      %3842 = vmatprep.subr.bf16.mxu0 %v3441
      %3843 = vmatpush1.bf16.msra.mxu0 %v3440
      %3844 = vmatprep.subr.bf16.mxu0 %v3451
      %3845 = vmatpush1.bf16.msra.mxu0 %v3450
      %3846 = vmatprep.subr.bf16.mxu0 %v3461
      %3847 = vmatpush1.bf16.msra.mxu0 %v3460
      %3848 = vmatprep.subr.bf16.mxu0 %v3471
      %3849 = vmatpush1.bf16.msra.mxu0 %v3470
      %3850 = vmatprep.subr.bf16.mxu0 %v3481
      %3851 = vmatpush1.bf16.msra.mxu0 %v3480
      %3852 = vmatprep.subr.bf16.mxu0 %v3491
      %3853 = vmatpush1.bf16.msra.mxu0 %v3490
      %3854 = vmatprep.subr.bf16.mxu0 %v3501
      %3855 = vmatpush1.bf16.msra.mxu0 %v3500
      %3856 = vmatprep.subr.bf16.mxu0 %v3511
      %3857 = vmatpush1.bf16.msra.mxu0 %v3510
      %3858 = vmatprep.subr.bf16.mxu0 %v3521
      %3859 = vmatpush1.bf16.msra.mxu0 %v3520
      %3860 = vmatprep.subr.bf16.mxu0 %v3531
      %3861 = vmatpush1.bf16.msra.mxu0 %v3530
      %3862 = vmatprep.subr.bf16.mxu0 %v3541
      %3863 = vmatpush1.bf16.msra.mxu0 %v3540
      %3864 = vmatprep.subr.bf16.mxu0 %v3551
      %3865 = vmatpush1.bf16.msra.mxu0 %v3550
      %3866 = vmatprep.subr.bf16.mxu0 %v3561
      %3867 = vmatpush1.bf16.msra.mxu0 %v3560
      %3868 = vmatprep.subr.bf16.mxu0 %v3571
      %3869 = vmatpush1.bf16.msra.mxu0 %v3570
      %3870 = vmatprep.subr.bf16.mxu0 %v3581
      %3871 = vmatpush1.bf16.msra.mxu0 %v3580
      %3872 = vmatprep.subr.bf16.mxu0 %v3591
      %3873 = vmatpush1.bf16.msra.mxu0 %v3590
      %3874 = vmatprep.mubr.bf16.mxu0 %v2953
      %3875 = vmatmul.mubr.bf16.gmra.mrb[0].mxu0 %v2950
      %v3876 = vpop.f32.mrb[0].mxu0
      %v3877 = vadd.f32 0.0, %v3876
      %v3878 = vpop.f32.mrb[0].mxu0
      %v3879 = vadd.f32 0.0, %v3878
      %v3880 = vpop.f32.mrb[0].mxu0
      %v3881 = vadd.f32 0.0, %v3880
      %v3882 = vpop.f32.mrb[0].mxu0
      %v3883 = vadd.f32 0.0, %v3882
      %3884 = vdwg.mxu0
      %3885 = vmatprep.subr.bf16.mxu0 %v3443
      %3886 = vmatpush1.bf16.msra.mxu0 %v3442
      %3887 = vmatprep.subr.bf16.mxu0 %v3453
      %3888 = vmatpush1.bf16.msra.mxu0 %v3452
      %3889 = vmatprep.subr.bf16.mxu0 %v3463
      %3890 = vmatpush1.bf16.msra.mxu0 %v3462
      %3891 = vmatprep.subr.bf16.mxu0 %v3473
      %3892 = vmatpush1.bf16.msra.mxu0 %v3472
      %3893 = vmatprep.subr.bf16.mxu0 %v3483
      %3894 = vmatpush1.bf16.msra.mxu0 %v3482
      %3895 = vmatprep.subr.bf16.mxu0 %v3493
      %3896 = vmatpush1.bf16.msra.mxu0 %v3492
      %3897 = vmatprep.subr.bf16.mxu0 %v3503
      %3898 = vmatpush1.bf16.msra.mxu0 %v3502
      %3899 = vmatprep.subr.bf16.mxu0 %v3513
      %3900 = vmatpush1.bf16.msra.mxu0 %v3512
      %3901 = vmatprep.subr.bf16.mxu0 %v3523
      %3902 = vmatpush1.bf16.msra.mxu0 %v3522
      %3903 = vmatprep.subr.bf16.mxu0 %v3533
      %3904 = vmatpush1.bf16.msra.mxu0 %v3532
      %3905 = vmatprep.subr.bf16.mxu0 %v3543
      %3906 = vmatpush1.bf16.msra.mxu0 %v3542
      %3907 = vmatprep.subr.bf16.mxu0 %v3553
      %3908 = vmatpush1.bf16.msra.mxu0 %v3552
      %3909 = vmatprep.subr.bf16.mxu0 %v3563
      %3910 = vmatpush1.bf16.msra.mxu0 %v3562
      %3911 = vmatprep.subr.bf16.mxu0 %v3573
      %3912 = vmatpush1.bf16.msra.mxu0 %v3572
      %3913 = vmatprep.subr.bf16.mxu0 %v3583
      %3914 = vmatpush1.bf16.msra.mxu0 %v3582
      %3915 = vmatprep.subr.bf16.mxu0 %v3593
      %3916 = vmatpush1.bf16.msra.mxu0 %v3592
      %3917 = vmatprep.mubr.bf16.mxu0 %v2953
      %3918 = vmatmul.mubr.bf16.gmra.mrb[0].mxu0 %v2950
      %v3919 = vpop.f32.mrb[0].mxu0
      %v3920 = vadd.f32 0.0, %v3919
      %v3921 = vpop.f32.mrb[0].mxu0
      %v3922 = vadd.f32 0.0, %v3921
      %v3923 = vpop.f32.mrb[0].mxu0
      %v3924 = vadd.f32 0.0, %v3923
      %v3925 = vpop.f32.mrb[0].mxu0
      %v3926 = vadd.f32 0.0, %v3925
      %3927 = vdwg.mxu0
      %3928 = vmatprep.subr.bf16.mxu0 %v3445
      %3929 = vmatpush1.bf16.msra.mxu0 %v3444
      %3930 = vmatprep.subr.bf16.mxu0 %v3455
      %3931 = vmatpush1.bf16.msra.mxu0 %v3454
      %3932 = vmatprep.subr.bf16.mxu0 %v3465
      %3933 = vmatpush1.bf16.msra.mxu0 %v3464
      %3934 = vmatprep.subr.bf16.mxu0 %v3475
      %3935 = vmatpush1.bf16.msra.mxu0 %v3474
      %3936 = vmatprep.subr.bf16.mxu0 %v3485
      %3937 = vmatpush1.bf16.msra.mxu0 %v3484
      %3938 = vmatprep.subr.bf16.mxu0 %v3495
      %3939 = vmatpush1.bf16.msra.mxu0 %v3494
      %3940 = vmatprep.subr.bf16.mxu0 %v3505
      %3941 = vmatpush1.bf16.msra.mxu0 %v3504
      %3942 = vmatprep.subr.bf16.mxu0 %v3515
      %3943 = vmatpush1.bf16.msra.mxu0 %v3514
      %3944 = vmatprep.subr.bf16.mxu0 %v3525
      %3945 = vmatpush1.bf16.msra.mxu0 %v3524
      %3946 = vmatprep.subr.bf16.mxu0 %v3535
      %3947 = vmatpush1.bf16.msra.mxu0 %v3534
      %3948 = vmatprep.subr.bf16.mxu0 %v3545
      %3949 = vmatpush1.bf16.msra.mxu0 %v3544
      %3950 = vmatprep.subr.bf16.mxu0 %v3555
      %3951 = vmatpush1.bf16.msra.mxu0 %v3554
      %3952 = vmatprep.subr.bf16.mxu0 %v3565
      %3953 = vmatpush1.bf16.msra.mxu0 %v3564
      %3954 = vmatprep.subr.bf16.mxu0 %v3575
      %3955 = vmatpush1.bf16.msra.mxu0 %v3574
      %3956 = vmatprep.subr.bf16.mxu0 %v3585
      %3957 = vmatpush1.bf16.msra.mxu0 %v3584
      %3958 = vmatprep.subr.bf16.mxu0 %v3595
      %3959 = vmatpush1.bf16.msra.mxu0 %v3594
      %3960 = vmatprep.mubr.bf16.mxu0 %v2953
      %3961 = vmatmul.mubr.bf16.gmra.mrb[0].mxu0 %v2950
      %v3962 = vpop.f32.mrb[0].mxu0
      %v3963 = vadd.f32 0.0, %v3962
      %v3964 = vpop.f32.mrb[0].mxu0
      %v3965 = vadd.f32 0.0, %v3964
      %v3966 = vpop.f32.mrb[0].mxu0
      %v3967 = vadd.f32 0.0, %v3966
      %v3968 = vpop.f32.mrb[0].mxu0
      %v3969 = vadd.f32 0.0, %v3968
      %3970 = vdwg.mxu0
      %v3971 = vld [vmem:[#allocation3] sm:$0xff]
      %v3972 = vld [vmem:[#allocation3 + $0x8] sm:$0xff]
      %v3973 = vld [vmem:[#allocation3 + $0x10] sm:$0xff]
      %v3974 = vld [vmem:[#allocation3 + $0x18] sm:$0xff]
      %v3975 = vld [vmem:[#allocation3 + $0x20] sm:$0xff]
      %v3976 = vld [vmem:[#allocation3 + $0x28] sm:$0xff]
      %v3977 = vld [vmem:[#allocation3 + $0x30] sm:$0xff]
      %v3978 = vld [vmem:[#allocation3 + $0x38] sm:$0xff]
      %v3979 = vld [vmem:[#allocation3 + $0x40] sm:$0xff]
      %v3980 = vld [vmem:[#allocation3 + $0x48] sm:$0xff]
      %v3981 = vld [vmem:[#allocation3 + $0x50] sm:$0xff]
      %v3982 = vld [vmem:[#allocation3 + $0x58] sm:$0xff]
      %v3983 = vld [vmem:[#allocation3 + $0x60] sm:$0xff]
      %v3984 = vld [vmem:[#allocation3 + $0x68] sm:$0xff]
      %v3985 = vld [vmem:[#allocation3 + $0x70] sm:$0xff]
      %v3986 = vld [vmem:[#allocation3 + $0x78] sm:$0xff]
      %v3987 = vld [vmem:[#allocation3 + $0x80] sm:$0xff]
      %v3988 = vld [vmem:[#allocation3 + $0x88] sm:$0xff]
      %v3989 = vld [vmem:[#allocation3 + $0x90] sm:$0xff]
      %v3990 = vld [vmem:[#allocation3 + $0x98] sm:$0xff]
      %v3991 = vadd.f32 %v3971, %v3791
      %v3992 = vadd.f32 %v3972, %v3793
      %v3993 = vadd.f32 %v3973, %v3834
      %v3994 = vadd.f32 %v3974, %v3836
      %v3995 = vadd.f32 %v3975, %v3877
      %v3996 = vadd.f32 %v3976, %v3879
      %v3997 = vadd.f32 %v3977, %v3920
      %v3998 = vadd.f32 %v3978, %v3922
      %v3999 = vadd.f32 %v3979, %v3963
      %v4000 = vadd.f32 %v3980, %v3965
      %v4001 = vadd.f32 %v3981, %v3795
      %v4002 = vadd.f32 %v3982, %v3797
      %v4003 = vadd.f32 %v3983, %v3838
      %v4004 = vadd.f32 %v3984, %v3840
      %v4005 = vadd.f32 %v3985, %v3881
      %v4006 = vadd.f32 %v3986, %v3883
      %v4007 = vadd.f32 %v3987, %v3924
      %v4008 = vadd.f32 %v3988, %v3926
      %v4009 = vadd.f32 %v3989, %v3967
      %v4010 = vadd.f32 %v3990, %v3969
      %4011 = vst [vmem:[#allocation3] sm:$0xff] %v3991
      %4012 = vst [vmem:[#allocation3 + $0x8] sm:$0xff] %v3992
      %4013 = vst [vmem:[#allocation3 + $0x10] sm:$0xff] %v3993
      %4014 = vst [vmem:[#allocation3 + $0x18] sm:$0xff] %v3994
      %4015 = vst [vmem:[#allocation3 + $0x20] sm:$0xff] %v3995
      %4016 = vst [vmem:[#allocation3 + $0x28] sm:$0xff] %v3996
      %4017 = vst [vmem:[#allocation3 + $0x30] sm:$0xff] %v3997
      %4018 = vst [vmem:[#allocation3 + $0x38] sm:$0xff] %v3998
      %4019 = vst [vmem:[#allocation3 + $0x40] sm:$0xff] %v3999
      %4020 = vst [vmem:[#allocation3 + $0x48] sm:$0xff] %v4000
      %4021 = vst [vmem:[#allocation3 + $0x50] sm:$0xff] %v4001
      %4022 = vst [vmem:[#allocation3 + $0x58] sm:$0xff] %v4002
      %4023 = vst [vmem:[#allocation3 + $0x60] sm:$0xff] %v4003
      %4024 = vst [vmem:[#allocation3 + $0x68] sm:$0xff] %v4004
      %4025 = vst [vmem:[#allocation3 + $0x70] sm:$0xff] %v4005
      %4026 = vst [vmem:[#allocation3 + $0x78] sm:$0xff] %v4006
      %4027 = vst [vmem:[#allocation3 + $0x80] sm:$0xff] %v4007
      %4028 = vst [vmem:[#allocation3 + $0x88] sm:$0xff] %v4008
      %4029 = vst [vmem:[#allocation3 + $0x90] sm:$0xff] %v4009
      %4030 = vst [vmem:[#allocation3 + $0x98] sm:$0xff] %v4010
      %v4031 = vld [vmem:[#allocation2] sm:$0xf8]
      %v4032 = vld [vmem:[#allocation2 + $0x8] sm:$0xf8]
      %v4033 = vld [vmem:[#allocation2 + $0x10] sm:$0xff]
      %v4034 = vld [vmem:[#allocation2 + $0x18] sm:$0xff]
      %v4035 = vld [vmem:[#allocation2 + $0x20] sm:$0x7]
      %v4036 = vld [vmem:[#allocation2 + $0x28] sm:$0x7]
      %v4037 = vpack.c.bf16 %v4033, %v4031
      %v4038 = vpack.c.bf16 %v4034, %v4032
      %v4039 = vpack.c.bf16 %v4035, %v4035
      %v4040 = vpack.c.bf16 %v4036, %v4036
      %v4041 = vld [vmem:[%s2 + $0xf00] sm:$0xff]
      %v4042 = vld [vmem:[%s2 + $0xf08] sm:$0xff]
      %v4043 = vld [vmem:[%s2 + $0xf10] sm:$0xff]
      %v4044 = vld [vmem:[%s2 + $0xf18] sm:$0xff]
      %v4045 = vld [vmem:[%s2 + $0xf20] sm:$0xff]
      %v4046 = vld [vmem:[%s2 + $0xf28] sm:$0xff]
      %v4047 = vld [vmem:[%s2 + $0xf30] sm:$0xff]
      %v4048 = vld [vmem:[%s2 + $0xf38] sm:$0xff]
      %v4049 = vld [vmem:[%s2 + $0xf40] sm:$0xff]
      %v4050 = vld [vmem:[%s2 + $0xf48] sm:$0xff]
      %v4051 = vld [vmem:[%s2 + $0xf50] sm:$0xff]
      %v4052 = vld [vmem:[%s2 + $0xf58] sm:$0xff]
      %v4053 = vld [vmem:[%s2 + $0xf60] sm:$0xff]
      %v4054 = vld [vmem:[%s2 + $0xf68] sm:$0xff]
      %v4055 = vld [vmem:[%s2 + $0xf70] sm:$0xff]
      %v4056 = vld [vmem:[%s2 + $0xf78] sm:$0xff]
      %v4057 = vld [vmem:[%s2 + $0xf80] sm:$0xff]
      %v4058 = vld [vmem:[%s2 + $0xf88] sm:$0xff]
      %v4059 = vld [vmem:[%s2 + $0xf90] sm:$0xff]
      %v4060 = vld [vmem:[%s2 + $0xf98] sm:$0xff]
      %v4061 = vld [vmem:[%s2 + $0xfa0] sm:$0xff]
      %v4062 = vld [vmem:[%s2 + $0xfa8] sm:$0xff]
      %v4063 = vld [vmem:[%s2 + $0xfb0] sm:$0xff]
      %v4064 = vld [vmem:[%s2 + $0xfb8] sm:$0xff]
      %v4065 = vld [vmem:[%s2 + $0xfc0] sm:$0xff]
      %v4066 = vld [vmem:[%s2 + $0xfc8] sm:$0xff]
      %v4067 = vld [vmem:[%s2 + $0xfd0] sm:$0xff]
      %v4068 = vld [vmem:[%s2 + $0xfd8] sm:$0xff]
      %v4069 = vld [vmem:[%s2 + $0xfe0] sm:$0xff]
      %v4070 = vld [vmem:[%s2 + $0xfe8] sm:$0xff]
      %v4071 = vld [vmem:[%s2 + $0xff0] sm:$0xff]
      %v4072 = vld [vmem:[%s2 + $0xff8] sm:$0xff]
      %v4073 = vld [vmem:[%s2 + $0x1000] sm:$0xff]
      %v4074 = vld [vmem:[%s2 + $0x1008] sm:$0xff]
      %v4075 = vld [vmem:[%s2 + $0x1010] sm:$0xff]
      %v4076 = vld [vmem:[%s2 + $0x1018] sm:$0xff]
      %v4077 = vld [vmem:[%s2 + $0x1020] sm:$0xff]
      %v4078 = vld [vmem:[%s2 + $0x1028] sm:$0xff]
      %v4079 = vld [vmem:[%s2 + $0x1030] sm:$0xff]
      %v4080 = vld [vmem:[%s2 + $0x1038] sm:$0xff]
      %v4081 = vld [vmem:[%s2 + $0x1040] sm:$0xff]
      %v4082 = vld [vmem:[%s2 + $0x1048] sm:$0xff]
      %v4083 = vld [vmem:[%s2 + $0x1050] sm:$0xff]
      %v4084 = vld [vmem:[%s2 + $0x1058] sm:$0xff]
      %v4085 = vld [vmem:[%s2 + $0x1060] sm:$0xff]
      %v4086 = vld [vmem:[%s2 + $0x1068] sm:$0xff]
      %v4087 = vld [vmem:[%s2 + $0x1070] sm:$0xff]
      %v4088 = vld [vmem:[%s2 + $0x1078] sm:$0xff]
      %v4089 = vld [vmem:[%s2 + $0x1080] sm:$0xff]
      %v4090 = vld [vmem:[%s2 + $0x1088] sm:$0xff]
      %v4091 = vld [vmem:[%s2 + $0x1090] sm:$0xff]
      %v4092 = vld [vmem:[%s2 + $0x1098] sm:$0xff]
      %v4093 = vld [vmem:[%s2 + $0x10a0] sm:$0xff]
      %v4094 = vld [vmem:[%s2 + $0x10a8] sm:$0xff]
      %v4095 = vld [vmem:[%s2 + $0x10b0] sm:$0xff]
      %v4096 = vld [vmem:[%s2 + $0x10b8] sm:$0xff]
      %v4097 = vld [vmem:[%s2 + $0x10c0] sm:$0xff]
      %v4098 = vld [vmem:[%s2 + $0x10c8] sm:$0xff]
      %v4099 = vld [vmem:[%s2 + $0x10d0] sm:$0xff]
      %v4100 = vld [vmem:[%s2 + $0x10d8] sm:$0xff]
      %v4101 = vld [vmem:[%s2 + $0x10e0] sm:$0xff]
      %v4102 = vld [vmem:[%s2 + $0x10e8] sm:$0xff]
      %v4103 = vld [vmem:[%s2 + $0x10f0] sm:$0xff]
      %v4104 = vld [vmem:[%s2 + $0x10f8] sm:$0xff]
      %v4105 = vld [vmem:[%s2 + $0x1100] sm:$0xff]
      %v4106 = vld [vmem:[%s2 + $0x1108] sm:$0xff]
      %v4107 = vld [vmem:[%s2 + $0x1110] sm:$0xff]
      %v4108 = vld [vmem:[%s2 + $0x1118] sm:$0xff]
      %v4109 = vld [vmem:[%s2 + $0x1120] sm:$0xff]
      %v4110 = vld [vmem:[%s2 + $0x1128] sm:$0xff]
      %v4111 = vld [vmem:[%s2 + $0x1130] sm:$0xff]
      %v4112 = vld [vmem:[%s2 + $0x1138] sm:$0xff]
      %v4113 = vld [vmem:[%s2 + $0x1140] sm:$0xff]
      %v4114 = vld [vmem:[%s2 + $0x1148] sm:$0xff]
      %v4115 = vld [vmem:[%s2 + $0x1150] sm:$0xff]
      %v4116 = vld [vmem:[%s2 + $0x1158] sm:$0xff]
      %v4117 = vld [vmem:[%s2 + $0x1160] sm:$0xff]
      %v4118 = vld [vmem:[%s2 + $0x1168] sm:$0xff]
      %v4119 = vld [vmem:[%s2 + $0x1170] sm:$0xff]
      %v4120 = vld [vmem:[%s2 + $0x1178] sm:$0xff]
      %v4121 = vld [vmem:[%s2 + $0x1180] sm:$0xff]
      %v4122 = vld [vmem:[%s2 + $0x1188] sm:$0xff]
      %v4123 = vld [vmem:[%s2 + $0x1190] sm:$0xff]
      %v4124 = vld [vmem:[%s2 + $0x1198] sm:$0xff]
      %v4125 = vld [vmem:[%s2 + $0x11a0] sm:$0xff]
      %v4126 = vld [vmem:[%s2 + $0x11a8] sm:$0xff]
      %v4127 = vld [vmem:[%s2 + $0x11b0] sm:$0xff]
      %v4128 = vld [vmem:[%s2 + $0x11b8] sm:$0xff]
      %v4129 = vld [vmem:[%s2 + $0x11c0] sm:$0xff]
      %v4130 = vld [vmem:[%s2 + $0x11c8] sm:$0xff]
      %v4131 = vld [vmem:[%s2 + $0x11d0] sm:$0xff]
      %v4132 = vld [vmem:[%s2 + $0x11d8] sm:$0xff]
      %v4133 = vld [vmem:[%s2 + $0x11e0] sm:$0xff]
      %v4134 = vld [vmem:[%s2 + $0x11e8] sm:$0xff]
      %v4135 = vld [vmem:[%s2 + $0x11f0] sm:$0xff]
      %v4136 = vld [vmem:[%s2 + $0x11f8] sm:$0xff]
      %v4137 = vld [vmem:[%s2 + $0x1200] sm:$0xff]
      %v4138 = vld [vmem:[%s2 + $0x1208] sm:$0xff]
      %v4139 = vld [vmem:[%s2 + $0x1210] sm:$0xff]
      %v4140 = vld [vmem:[%s2 + $0x1218] sm:$0xff]
      %v4141 = vld [vmem:[%s2 + $0x1220] sm:$0xff]
      %v4142 = vld [vmem:[%s2 + $0x1228] sm:$0xff]
      %v4143 = vld [vmem:[%s2 + $0x1230] sm:$0xff]
      %v4144 = vld [vmem:[%s2 + $0x1238] sm:$0xff]
      %v4145 = vld [vmem:[%s2 + $0x1240] sm:$0xff]
      %v4146 = vld [vmem:[%s2 + $0x1248] sm:$0xff]
      %v4147 = vld [vmem:[%s2 + $0x1250] sm:$0xff]
      %v4148 = vld [vmem:[%s2 + $0x1258] sm:$0xff]
      %v4149 = vld [vmem:[%s2 + $0x1260] sm:$0xff]
      %v4150 = vld [vmem:[%s2 + $0x1268] sm:$0xff]
      %v4151 = vld [vmem:[%s2 + $0x1270] sm:$0xff]
      %v4152 = vld [vmem:[%s2 + $0x1278] sm:$0xff]
      %v4153 = vld [vmem:[%s2 + $0x1280] sm:$0xff]
      %v4154 = vld [vmem:[%s2 + $0x1288] sm:$0xff]
      %v4155 = vld [vmem:[%s2 + $0x1290] sm:$0xff]
      %v4156 = vld [vmem:[%s2 + $0x1298] sm:$0xff]
      %v4157 = vld [vmem:[%s2 + $0x12a0] sm:$0xff]
      %v4158 = vld [vmem:[%s2 + $0x12a8] sm:$0xff]
      %v4159 = vld [vmem:[%s2 + $0x12b0] sm:$0xff]
      %v4160 = vld [vmem:[%s2 + $0x12b8] sm:$0xff]
      %v4161 = vld [vmem:[%s2 + $0x12c0] sm:$0xff]
      %v4162 = vld [vmem:[%s2 + $0x12c8] sm:$0xff]
      %v4163 = vld [vmem:[%s2 + $0x12d0] sm:$0xff]
      %v4164 = vld [vmem:[%s2 + $0x12d8] sm:$0xff]
      %v4165 = vld [vmem:[%s2 + $0x12e0] sm:$0xff]
      %v4166 = vld [vmem:[%s2 + $0x12e8] sm:$0xff]
      %v4167 = vld [vmem:[%s2 + $0x12f0] sm:$0xff]
      %v4168 = vld [vmem:[%s2 + $0x12f8] sm:$0xff]
      %v4169 = vld [vmem:[%s2 + $0x1300] sm:$0xff]
      %v4170 = vld [vmem:[%s2 + $0x1308] sm:$0xff]
      %v4171 = vld [vmem:[%s2 + $0x1310] sm:$0xff]
      %v4172 = vld [vmem:[%s2 + $0x1318] sm:$0xff]
      %v4173 = vld [vmem:[%s2 + $0x1320] sm:$0xff]
      %v4174 = vld [vmem:[%s2 + $0x1328] sm:$0xff]
      %v4175 = vld [vmem:[%s2 + $0x1330] sm:$0xff]
      %v4176 = vld [vmem:[%s2 + $0x1338] sm:$0xff]
      %v4177 = vld [vmem:[%s2 + $0x1340] sm:$0xff]
      %v4178 = vld [vmem:[%s2 + $0x1348] sm:$0xff]
      %v4179 = vld [vmem:[%s2 + $0x1350] sm:$0xff]
      %v4180 = vld [vmem:[%s2 + $0x1358] sm:$0xff]
      %v4181 = vld [vmem:[%s2 + $0x1360] sm:$0xff]
      %v4182 = vld [vmem:[%s2 + $0x1368] sm:$0xff]
      %v4183 = vld [vmem:[%s2 + $0x1370] sm:$0xff]
      %v4184 = vld [vmem:[%s2 + $0x1378] sm:$0xff]
      %v4185 = vld [vmem:[%s2 + $0x1380] sm:$0xff]
      %v4186 = vld [vmem:[%s2 + $0x1388] sm:$0xff]
      %v4187 = vld [vmem:[%s2 + $0x1390] sm:$0xff]
      %v4188 = vld [vmem:[%s2 + $0x1398] sm:$0xff]
      %v4189 = vld [vmem:[%s2 + $0x13a0] sm:$0xff]
      %v4190 = vld [vmem:[%s2 + $0x13a8] sm:$0xff]
      %v4191 = vld [vmem:[%s2 + $0x13b0] sm:$0xff]
      %v4192 = vld [vmem:[%s2 + $0x13b8] sm:$0xff]
      %v4193 = vld [vmem:[%s2 + $0x13c0] sm:$0xff]
      %v4194 = vld [vmem:[%s2 + $0x13c8] sm:$0xff]
      %v4195 = vld [vmem:[%s2 + $0x13d0] sm:$0xff]
      %v4196 = vld [vmem:[%s2 + $0x13d8] sm:$0xff]
      %v4197 = vld [vmem:[%s2 + $0x13e0] sm:$0xff]
      %v4198 = vld [vmem:[%s2 + $0x13e8] sm:$0xff]
      %v4199 = vld [vmem:[%s2 + $0x13f0] sm:$0xff]
      %v4200 = vld [vmem:[%s2 + $0x13f8] sm:$0xff]
      %vm4201 = vsmask.f32 6400
      %v4203 = vshrl.u32 %v4037, 16
      %v4205 = vrot.slane %v4203, 1
      %v4206 = vshll.u32 %v4037, 16
      %v4208 = vrot.slane %v4206, 2
      %v4209 = vor.u32 %v4205, %v4208
      %v4211 = vshrl.u32 %v4039, 16
      %v4213 = vrot.slane %v4211, 1
      %v4214 = vshll.u32 %v4039, 16
      %v4216 = vrot.slane %v4214, 2
      %v4217 = vor.u32 %v4213, %v4216
      %v4218 = vsel %vm4201, %v4209, %v4217
      %v4220 = vshrl.u32 %v4038, 16
      %v4222 = vrot.slane %v4220, 1
      %v4223 = vshll.u32 %v4038, 16
      %v4225 = vrot.slane %v4223, 2
      %v4226 = vor.u32 %v4222, %v4225
      %v4228 = vshrl.u32 %v4040, 16
      %v4230 = vrot.slane %v4228, 1
      %v4231 = vshll.u32 %v4040, 16
      %v4233 = vrot.slane %v4231, 2
      %v4234 = vor.u32 %v4230, %v4233
      %v4235 = vsel %vm4201, %v4226, %v4234
      %v4398 = vunpack.c.l.b16 %v4041
      %v4399 = vunpack.c.h.b16 %v4041
      %v4400 = vunpack.c.l.b16 %v4042
      %v4401 = vunpack.c.h.b16 %v4042
      %v4402 = vunpack.c.l.b16 %v4043
      %v4403 = vunpack.c.h.b16 %v4043
      %v4404 = vunpack.c.l.b16 %v4044
      %v4405 = vunpack.c.h.b16 %v4044
      %v4406 = vunpack.c.l.b16 %v4045
      %v4407 = vunpack.c.h.b16 %v4045
      %v4408 = vunpack.c.l.b16 %v4046
      %v4409 = vunpack.c.h.b16 %v4046
      %v4410 = vunpack.c.l.b16 %v4047
      %v4411 = vunpack.c.h.b16 %v4047
      %v4412 = vunpack.c.l.b16 %v4048
      %v4413 = vunpack.c.h.b16 %v4048
      %v4414 = vunpack.c.l.b16 %v4049
      %v4415 = vunpack.c.h.b16 %v4049
      %v4416 = vunpack.c.l.b16 %v4050
      %v4417 = vunpack.c.h.b16 %v4050
      %v4418 = vunpack.c.l.b16 %v4051
      %v4419 = vunpack.c.h.b16 %v4051
      %v4420 = vunpack.c.l.b16 %v4052
      %v4421 = vunpack.c.h.b16 %v4052
      %v4422 = vunpack.c.l.b16 %v4053
      %v4423 = vunpack.c.h.b16 %v4053
      %v4424 = vunpack.c.l.b16 %v4054
      %v4425 = vunpack.c.h.b16 %v4054
      %v4426 = vunpack.c.l.b16 %v4055
      %v4427 = vunpack.c.h.b16 %v4055
      %v4428 = vunpack.c.l.b16 %v4056
      %v4429 = vunpack.c.h.b16 %v4056
      %v4430 = vunpack.c.l.b16 %v4057
      %v4431 = vunpack.c.h.b16 %v4057
      %v4432 = vunpack.c.l.b16 %v4058
      %v4433 = vunpack.c.h.b16 %v4058
      %v4434 = vunpack.c.l.b16 %v4059
      %v4435 = vunpack.c.h.b16 %v4059
      %v4436 = vunpack.c.l.b16 %v4060
      %v4437 = vunpack.c.h.b16 %v4060
      %v4438 = vunpack.c.l.b16 %v4061
      %v4439 = vunpack.c.h.b16 %v4061
      %v4440 = vunpack.c.l.b16 %v4062
      %v4441 = vunpack.c.h.b16 %v4062
      %v4442 = vunpack.c.l.b16 %v4063
      %v4443 = vunpack.c.h.b16 %v4063
      %v4444 = vunpack.c.l.b16 %v4064
      %v4445 = vunpack.c.h.b16 %v4064
      %v4446 = vunpack.c.l.b16 %v4065
      %v4447 = vunpack.c.h.b16 %v4065
      %v4448 = vunpack.c.l.b16 %v4066
      %v4449 = vunpack.c.h.b16 %v4066
      %v4450 = vunpack.c.l.b16 %v4067
      %v4451 = vunpack.c.h.b16 %v4067
      %v4452 = vunpack.c.l.b16 %v4068
      %v4453 = vunpack.c.h.b16 %v4068
      %v4454 = vunpack.c.l.b16 %v4069
      %v4455 = vunpack.c.h.b16 %v4069
      %v4456 = vunpack.c.l.b16 %v4070
      %v4457 = vunpack.c.h.b16 %v4070
      %v4458 = vunpack.c.l.b16 %v4071
      %v4459 = vunpack.c.h.b16 %v4071
      %v4460 = vunpack.c.l.b16 %v4072
      %v4461 = vunpack.c.h.b16 %v4072
      %v4462 = vunpack.c.l.b16 %v4073
      %v4463 = vunpack.c.h.b16 %v4073
      %v4464 = vunpack.c.l.b16 %v4074
      %v4465 = vunpack.c.h.b16 %v4074
      %v4466 = vunpack.c.l.b16 %v4075
      %v4467 = vunpack.c.h.b16 %v4075
      %v4468 = vunpack.c.l.b16 %v4076
      %v4469 = vunpack.c.h.b16 %v4076
      %v4470 = vunpack.c.l.b16 %v4077
      %v4471 = vunpack.c.h.b16 %v4077
      %v4472 = vunpack.c.l.b16 %v4078
      %v4473 = vunpack.c.h.b16 %v4078
      %v4474 = vunpack.c.l.b16 %v4079
      %v4475 = vunpack.c.h.b16 %v4079
      %v4476 = vunpack.c.l.b16 %v4080
      %v4477 = vunpack.c.h.b16 %v4080
      %v4478 = vunpack.c.l.b16 %v4081
      %v4479 = vunpack.c.h.b16 %v4081
      %v4480 = vunpack.c.l.b16 %v4082
      %v4481 = vunpack.c.h.b16 %v4082
      %v4482 = vunpack.c.l.b16 %v4083
      %v4483 = vunpack.c.h.b16 %v4083
      %v4484 = vunpack.c.l.b16 %v4084
      %v4485 = vunpack.c.h.b16 %v4084
      %v4486 = vunpack.c.l.b16 %v4085
      %v4487 = vunpack.c.h.b16 %v4085
      %v4488 = vunpack.c.l.b16 %v4086
      %v4489 = vunpack.c.h.b16 %v4086
      %v4490 = vunpack.c.l.b16 %v4087
      %v4491 = vunpack.c.h.b16 %v4087
      %v4492 = vunpack.c.l.b16 %v4088
      %v4493 = vunpack.c.h.b16 %v4088
      %v4494 = vunpack.c.l.b16 %v4089
      %v4495 = vunpack.c.h.b16 %v4089
      %v4496 = vunpack.c.l.b16 %v4090
      %v4497 = vunpack.c.h.b16 %v4090
      %v4498 = vunpack.c.l.b16 %v4091
      %v4499 = vunpack.c.h.b16 %v4091
      %v4500 = vunpack.c.l.b16 %v4092
      %v4501 = vunpack.c.h.b16 %v4092
      %v4502 = vunpack.c.l.b16 %v4093
      %v4503 = vunpack.c.h.b16 %v4093
      %v4504 = vunpack.c.l.b16 %v4094
      %v4505 = vunpack.c.h.b16 %v4094
      %v4506 = vunpack.c.l.b16 %v4095
      %v4507 = vunpack.c.h.b16 %v4095
      %v4508 = vunpack.c.l.b16 %v4096
      %v4509 = vunpack.c.h.b16 %v4096
      %v4510 = vunpack.c.l.b16 %v4097
      %v4511 = vunpack.c.h.b16 %v4097
      %v4512 = vunpack.c.l.b16 %v4098
      %v4513 = vunpack.c.h.b16 %v4098
      %v4514 = vunpack.c.l.b16 %v4099
      %v4515 = vunpack.c.h.b16 %v4099
      %v4516 = vunpack.c.l.b16 %v4100
      %v4517 = vunpack.c.h.b16 %v4100
      %v4518 = vunpack.c.l.b16 %v4101
      %v4519 = vunpack.c.h.b16 %v4101
      %v4520 = vunpack.c.l.b16 %v4102
      %v4521 = vunpack.c.h.b16 %v4102
      %v4522 = vunpack.c.l.b16 %v4103
      %v4523 = vunpack.c.h.b16 %v4103
      %v4524 = vunpack.c.l.b16 %v4104
      %v4525 = vunpack.c.h.b16 %v4104
      %v4526 = vunpack.c.l.b16 %v4105
      %v4527 = vunpack.c.h.b16 %v4105
      %v4528 = vunpack.c.l.b16 %v4106
      %v4529 = vunpack.c.h.b16 %v4106
      %v4530 = vunpack.c.l.b16 %v4107
      %v4531 = vunpack.c.h.b16 %v4107
      %v4532 = vunpack.c.l.b16 %v4108
      %v4533 = vunpack.c.h.b16 %v4108
      %v4534 = vunpack.c.l.b16 %v4109
      %v4535 = vunpack.c.h.b16 %v4109
      %v4536 = vunpack.c.l.b16 %v4110
      %v4537 = vunpack.c.h.b16 %v4110
      %v4538 = vunpack.c.l.b16 %v4111
      %v4539 = vunpack.c.h.b16 %v4111
      %v4540 = vunpack.c.l.b16 %v4112
      %v4541 = vunpack.c.h.b16 %v4112
      %v4542 = vunpack.c.l.b16 %v4113
      %v4543 = vunpack.c.h.b16 %v4113
      %v4544 = vunpack.c.l.b16 %v4114
      %v4545 = vunpack.c.h.b16 %v4114
      %v4546 = vunpack.c.l.b16 %v4115
      %v4547 = vunpack.c.h.b16 %v4115
      %v4548 = vunpack.c.l.b16 %v4116
      %v4549 = vunpack.c.h.b16 %v4116
      %v4550 = vunpack.c.l.b16 %v4117
      %v4551 = vunpack.c.h.b16 %v4117
      %v4552 = vunpack.c.l.b16 %v4118
      %v4553 = vunpack.c.h.b16 %v4118
      %v4554 = vunpack.c.l.b16 %v4119
      %v4555 = vunpack.c.h.b16 %v4119
      %v4556 = vunpack.c.l.b16 %v4120
      %v4557 = vunpack.c.h.b16 %v4120
      %v4558 = vunpack.c.l.b16 %v4121
      %v4559 = vunpack.c.h.b16 %v4121
      %v4560 = vunpack.c.l.b16 %v4122
      %v4561 = vunpack.c.h.b16 %v4122
      %v4562 = vunpack.c.l.b16 %v4123
      %v4563 = vunpack.c.h.b16 %v4123
      %v4564 = vunpack.c.l.b16 %v4124
      %v4565 = vunpack.c.h.b16 %v4124
      %v4566 = vunpack.c.l.b16 %v4125
      %v4567 = vunpack.c.h.b16 %v4125
      %v4568 = vunpack.c.l.b16 %v4126
      %v4569 = vunpack.c.h.b16 %v4126
      %v4570 = vunpack.c.l.b16 %v4127
      %v4571 = vunpack.c.h.b16 %v4127
      %v4572 = vunpack.c.l.b16 %v4128
      %v4573 = vunpack.c.h.b16 %v4128
      %v4574 = vunpack.c.l.b16 %v4129
      %v4575 = vunpack.c.h.b16 %v4129
      %v4576 = vunpack.c.l.b16 %v4130
      %v4577 = vunpack.c.h.b16 %v4130
      %v4578 = vunpack.c.l.b16 %v4131
      %v4579 = vunpack.c.h.b16 %v4131
      %v4580 = vunpack.c.l.b16 %v4132
      %v4581 = vunpack.c.h.b16 %v4132
      %v4582 = vunpack.c.l.b16 %v4133
      %v4583 = vunpack.c.h.b16 %v4133
      %v4584 = vunpack.c.l.b16 %v4134
      %v4585 = vunpack.c.h.b16 %v4134
      %v4586 = vunpack.c.l.b16 %v4135
      %v4587 = vunpack.c.h.b16 %v4135
      %v4588 = vunpack.c.l.b16 %v4136
      %v4589 = vunpack.c.h.b16 %v4136
      %v4590 = vunpack.c.l.b16 %v4137
      %v4591 = vunpack.c.h.b16 %v4137
      %v4592 = vunpack.c.l.b16 %v4138
      %v4593 = vunpack.c.h.b16 %v4138
      %v4594 = vunpack.c.l.b16 %v4139
      %v4595 = vunpack.c.h.b16 %v4139
      %v4596 = vunpack.c.l.b16 %v4140
      %v4597 = vunpack.c.h.b16 %v4140
      %v4598 = vunpack.c.l.b16 %v4141
      %v4599 = vunpack.c.h.b16 %v4141
      %v4600 = vunpack.c.l.b16 %v4142
      %v4601 = vunpack.c.h.b16 %v4142
      %v4602 = vunpack.c.l.b16 %v4143
      %v4603 = vunpack.c.h.b16 %v4143
      %v4604 = vunpack.c.l.b16 %v4144
      %v4605 = vunpack.c.h.b16 %v4144
      %v4606 = vunpack.c.l.b16 %v4145
      %v4607 = vunpack.c.h.b16 %v4145
      %v4608 = vunpack.c.l.b16 %v4146
      %v4609 = vunpack.c.h.b16 %v4146
      %v4610 = vunpack.c.l.b16 %v4147
      %v4611 = vunpack.c.h.b16 %v4147
      %v4612 = vunpack.c.l.b16 %v4148
      %v4613 = vunpack.c.h.b16 %v4148
      %v4614 = vunpack.c.l.b16 %v4149
      %v4615 = vunpack.c.h.b16 %v4149
      %v4616 = vunpack.c.l.b16 %v4150
      %v4617 = vunpack.c.h.b16 %v4150
      %v4618 = vunpack.c.l.b16 %v4151
      %v4619 = vunpack.c.h.b16 %v4151
      %v4620 = vunpack.c.l.b16 %v4152
      %v4621 = vunpack.c.h.b16 %v4152
      %v4622 = vunpack.c.l.b16 %v4153
      %v4623 = vunpack.c.h.b16 %v4153
      %v4624 = vunpack.c.l.b16 %v4154
      %v4625 = vunpack.c.h.b16 %v4154
      %v4626 = vunpack.c.l.b16 %v4155
      %v4627 = vunpack.c.h.b16 %v4155
      %v4628 = vunpack.c.l.b16 %v4156
      %v4629 = vunpack.c.h.b16 %v4156
      %v4630 = vunpack.c.l.b16 %v4157
      %v4631 = vunpack.c.h.b16 %v4157
      %v4632 = vunpack.c.l.b16 %v4158
      %v4633 = vunpack.c.h.b16 %v4158
      %v4634 = vunpack.c.l.b16 %v4159
      %v4635 = vunpack.c.h.b16 %v4159
      %v4636 = vunpack.c.l.b16 %v4160
      %v4637 = vunpack.c.h.b16 %v4160
      %v4638 = vunpack.c.l.b16 %v4161
      %v4639 = vunpack.c.h.b16 %v4161
      %v4640 = vunpack.c.l.b16 %v4162
      %v4641 = vunpack.c.h.b16 %v4162
      %v4642 = vunpack.c.l.b16 %v4163
      %v4643 = vunpack.c.h.b16 %v4163
      %v4644 = vunpack.c.l.b16 %v4164
      %v4645 = vunpack.c.h.b16 %v4164
      %v4646 = vunpack.c.l.b16 %v4165
      %v4647 = vunpack.c.h.b16 %v4165
      %v4648 = vunpack.c.l.b16 %v4166
      %v4649 = vunpack.c.h.b16 %v4166
      %v4650 = vunpack.c.l.b16 %v4167
      %v4651 = vunpack.c.h.b16 %v4167
      %v4652 = vunpack.c.l.b16 %v4168
      %v4653 = vunpack.c.h.b16 %v4168
      %v4654 = vunpack.c.l.b16 %v4169
      %v4655 = vunpack.c.h.b16 %v4169
      %v4656 = vunpack.c.l.b16 %v4170
      %v4657 = vunpack.c.h.b16 %v4170
      %v4658 = vunpack.c.l.b16 %v4171
      %v4659 = vunpack.c.h.b16 %v4171
      %v4660 = vunpack.c.l.b16 %v4172
      %v4661 = vunpack.c.h.b16 %v4172
      %v4662 = vunpack.c.l.b16 %v4173
      %v4663 = vunpack.c.h.b16 %v4173
      %v4664 = vunpack.c.l.b16 %v4174
      %v4665 = vunpack.c.h.b16 %v4174
      %v4666 = vunpack.c.l.b16 %v4175
      %v4667 = vunpack.c.h.b16 %v4175
      %v4668 = vunpack.c.l.b16 %v4176
      %v4669 = vunpack.c.h.b16 %v4176
      %v4670 = vunpack.c.l.b16 %v4177
      %v4671 = vunpack.c.h.b16 %v4177
      %v4672 = vunpack.c.l.b16 %v4178
      %v4673 = vunpack.c.h.b16 %v4178
      %v4674 = vunpack.c.l.b16 %v4179
      %v4675 = vunpack.c.h.b16 %v4179
      %v4676 = vunpack.c.l.b16 %v4180
      %v4677 = vunpack.c.h.b16 %v4180
      %v4678 = vunpack.c.l.b16 %v4181
      %v4679 = vunpack.c.h.b16 %v4181
      %v4680 = vunpack.c.l.b16 %v4182
      %v4681 = vunpack.c.h.b16 %v4182
      %v4682 = vunpack.c.l.b16 %v4183
      %v4683 = vunpack.c.h.b16 %v4183
      %v4684 = vunpack.c.l.b16 %v4184
      %v4685 = vunpack.c.h.b16 %v4184
      %v4686 = vunpack.c.l.b16 %v4185
      %v4687 = vunpack.c.h.b16 %v4185
      %v4688 = vunpack.c.l.b16 %v4186
      %v4689 = vunpack.c.h.b16 %v4186
      %v4690 = vunpack.c.l.b16 %v4187
      %v4691 = vunpack.c.h.b16 %v4187
      %v4692 = vunpack.c.l.b16 %v4188
      %v4693 = vunpack.c.h.b16 %v4188
      %v4694 = vunpack.c.l.b16 %v4189
      %v4695 = vunpack.c.h.b16 %v4189
      %v4696 = vunpack.c.l.b16 %v4190
      %v4697 = vunpack.c.h.b16 %v4190
      %v4698 = vunpack.c.l.b16 %v4191
      %v4699 = vunpack.c.h.b16 %v4191
      %v4700 = vunpack.c.l.b16 %v4192
      %v4701 = vunpack.c.h.b16 %v4192
      %v4702 = vunpack.c.l.b16 %v4193
      %v4703 = vunpack.c.h.b16 %v4193
      %v4704 = vunpack.c.l.b16 %v4194
      %v4705 = vunpack.c.h.b16 %v4194
      %v4706 = vunpack.c.l.b16 %v4195
      %v4707 = vunpack.c.h.b16 %v4195
      %v4708 = vunpack.c.l.b16 %v4196
      %v4709 = vunpack.c.h.b16 %v4196
      %v4710 = vunpack.c.l.b16 %v4197
      %v4711 = vunpack.c.h.b16 %v4197
      %v4712 = vunpack.c.l.b16 %v4198
      %v4713 = vunpack.c.h.b16 %v4198
      %v4714 = vunpack.c.l.b16 %v4199
      %v4715 = vunpack.c.h.b16 %v4199
      %v4716 = vunpack.c.l.b16 %v4200
      %v4717 = vunpack.c.h.b16 %v4200
      %v4718 = vpack.c.b16 %v4408, %v4398
      %v4719 = vpack.c.b16 %v4409, %v4399
      %v4720 = vpack.c.b16 %v4410, %v4400
      %v4721 = vpack.c.b16 %v4411, %v4401
      %v4722 = vpack.c.b16 %v4412, %v4402
      %v4723 = vpack.c.b16 %v4413, %v4403
      %v4724 = vpack.c.b16 %v4414, %v4404
      %v4725 = vpack.c.b16 %v4415, %v4405
      %v4726 = vpack.c.b16 %v4416, %v4406
      %v4727 = vpack.c.b16 %v4417, %v4407
      %v4728 = vpack.c.b16 %v4428, %v4418
      %v4729 = vpack.c.b16 %v4429, %v4419
      %v4730 = vpack.c.b16 %v4430, %v4420
      %v4731 = vpack.c.b16 %v4431, %v4421
      %v4732 = vpack.c.b16 %v4432, %v4422
      %v4733 = vpack.c.b16 %v4433, %v4423
      %v4734 = vpack.c.b16 %v4434, %v4424
      %v4735 = vpack.c.b16 %v4435, %v4425
      %v4736 = vpack.c.b16 %v4436, %v4426
      %v4737 = vpack.c.b16 %v4437, %v4427
      %v4738 = vpack.c.b16 %v4448, %v4438
      %v4739 = vpack.c.b16 %v4449, %v4439
      %v4740 = vpack.c.b16 %v4450, %v4440
      %v4741 = vpack.c.b16 %v4451, %v4441
      %v4742 = vpack.c.b16 %v4452, %v4442
      %v4743 = vpack.c.b16 %v4453, %v4443
      %v4744 = vpack.c.b16 %v4454, %v4444
      %v4745 = vpack.c.b16 %v4455, %v4445
      %v4746 = vpack.c.b16 %v4456, %v4446
      %v4747 = vpack.c.b16 %v4457, %v4447
      %v4748 = vpack.c.b16 %v4468, %v4458
      %v4749 = vpack.c.b16 %v4469, %v4459
      %v4750 = vpack.c.b16 %v4470, %v4460
      %v4751 = vpack.c.b16 %v4471, %v4461
      %v4752 = vpack.c.b16 %v4472, %v4462
      %v4753 = vpack.c.b16 %v4473, %v4463
      %v4754 = vpack.c.b16 %v4474, %v4464
      %v4755 = vpack.c.b16 %v4475, %v4465
      %v4756 = vpack.c.b16 %v4476, %v4466
      %v4757 = vpack.c.b16 %v4477, %v4467
      %v4758 = vpack.c.b16 %v4488, %v4478
      %v4759 = vpack.c.b16 %v4489, %v4479
      %v4760 = vpack.c.b16 %v4490, %v4480
      %v4761 = vpack.c.b16 %v4491, %v4481
      %v4762 = vpack.c.b16 %v4492, %v4482
      %v4763 = vpack.c.b16 %v4493, %v4483
      %v4764 = vpack.c.b16 %v4494, %v4484
      %v4765 = vpack.c.b16 %v4495, %v4485
      %v4766 = vpack.c.b16 %v4496, %v4486
      %v4767 = vpack.c.b16 %v4497, %v4487
      %v4768 = vpack.c.b16 %v4508, %v4498
      %v4769 = vpack.c.b16 %v4509, %v4499
      %v4770 = vpack.c.b16 %v4510, %v4500
      %v4771 = vpack.c.b16 %v4511, %v4501
      %v4772 = vpack.c.b16 %v4512, %v4502
      %v4773 = vpack.c.b16 %v4513, %v4503
      %v4774 = vpack.c.b16 %v4514, %v4504
      %v4775 = vpack.c.b16 %v4515, %v4505
      %v4776 = vpack.c.b16 %v4516, %v4506
      %v4777 = vpack.c.b16 %v4517, %v4507
      %v4778 = vpack.c.b16 %v4528, %v4518
      %v4779 = vpack.c.b16 %v4529, %v4519
      %v4780 = vpack.c.b16 %v4530, %v4520
      %v4781 = vpack.c.b16 %v4531, %v4521
      %v4782 = vpack.c.b16 %v4532, %v4522
      %v4783 = vpack.c.b16 %v4533, %v4523
      %v4784 = vpack.c.b16 %v4534, %v4524
      %v4785 = vpack.c.b16 %v4535, %v4525
      %v4786 = vpack.c.b16 %v4536, %v4526
      %v4787 = vpack.c.b16 %v4537, %v4527
      %v4788 = vpack.c.b16 %v4548, %v4538
      %v4789 = vpack.c.b16 %v4549, %v4539
      %v4790 = vpack.c.b16 %v4550, %v4540
      %v4791 = vpack.c.b16 %v4551, %v4541
      %v4792 = vpack.c.b16 %v4552, %v4542
      %v4793 = vpack.c.b16 %v4553, %v4543
      %v4794 = vpack.c.b16 %v4554, %v4544
      %v4795 = vpack.c.b16 %v4555, %v4545
      %v4796 = vpack.c.b16 %v4556, %v4546
      %v4797 = vpack.c.b16 %v4557, %v4547
      %v4798 = vpack.c.b16 %v4568, %v4558
      %v4799 = vpack.c.b16 %v4569, %v4559
      %v4800 = vpack.c.b16 %v4570, %v4560
      %v4801 = vpack.c.b16 %v4571, %v4561
      %v4802 = vpack.c.b16 %v4572, %v4562
      %v4803 = vpack.c.b16 %v4573, %v4563
      %v4804 = vpack.c.b16 %v4574, %v4564
      %v4805 = vpack.c.b16 %v4575, %v4565
      %v4806 = vpack.c.b16 %v4576, %v4566
      %v4807 = vpack.c.b16 %v4577, %v4567
      %v4808 = vpack.c.b16 %v4588, %v4578
      %v4809 = vpack.c.b16 %v4589, %v4579
      %v4810 = vpack.c.b16 %v4590, %v4580
      %v4811 = vpack.c.b16 %v4591, %v4581
      %v4812 = vpack.c.b16 %v4592, %v4582
      %v4813 = vpack.c.b16 %v4593, %v4583
      %v4814 = vpack.c.b16 %v4594, %v4584
      %v4815 = vpack.c.b16 %v4595, %v4585
      %v4816 = vpack.c.b16 %v4596, %v4586
      %v4817 = vpack.c.b16 %v4597, %v4587
      %v4818 = vpack.c.b16 %v4608, %v4598
      %v4819 = vpack.c.b16 %v4609, %v4599
      %v4820 = vpack.c.b16 %v4610, %v4600
      %v4821 = vpack.c.b16 %v4611, %v4601
      %v4822 = vpack.c.b16 %v4612, %v4602
      %v4823 = vpack.c.b16 %v4613, %v4603
      %v4824 = vpack.c.b16 %v4614, %v4604
      %v4825 = vpack.c.b16 %v4615, %v4605
      %v4826 = vpack.c.b16 %v4616, %v4606
      %v4827 = vpack.c.b16 %v4617, %v4607
      %v4828 = vpack.c.b16 %v4628, %v4618
      %v4829 = vpack.c.b16 %v4629, %v4619
      %v4830 = vpack.c.b16 %v4630, %v4620
      %v4831 = vpack.c.b16 %v4631, %v4621
      %v4832 = vpack.c.b16 %v4632, %v4622
      %v4833 = vpack.c.b16 %v4633, %v4623
      %v4834 = vpack.c.b16 %v4634, %v4624
      %v4835 = vpack.c.b16 %v4635, %v4625
      %v4836 = vpack.c.b16 %v4636, %v4626
      %v4837 = vpack.c.b16 %v4637, %v4627
      %v4838 = vpack.c.b16 %v4648, %v4638
      %v4839 = vpack.c.b16 %v4649, %v4639
      %v4840 = vpack.c.b16 %v4650, %v4640
      %v4841 = vpack.c.b16 %v4651, %v4641
      %v4842 = vpack.c.b16 %v4652, %v4642
      %v4843 = vpack.c.b16 %v4653, %v4643
      %v4844 = vpack.c.b16 %v4654, %v4644
      %v4845 = vpack.c.b16 %v4655, %v4645
      %v4846 = vpack.c.b16 %v4656, %v4646
      %v4847 = vpack.c.b16 %v4657, %v4647
      %v4848 = vpack.c.b16 %v4668, %v4658
      %v4849 = vpack.c.b16 %v4669, %v4659
      %v4850 = vpack.c.b16 %v4670, %v4660
      %v4851 = vpack.c.b16 %v4671, %v4661
      %v4852 = vpack.c.b16 %v4672, %v4662
      %v4853 = vpack.c.b16 %v4673, %v4663
      %v4854 = vpack.c.b16 %v4674, %v4664
      %v4855 = vpack.c.b16 %v4675, %v4665
      %v4856 = vpack.c.b16 %v4676, %v4666
      %v4857 = vpack.c.b16 %v4677, %v4667
      %v4858 = vpack.c.b16 %v4688, %v4678
      %v4859 = vpack.c.b16 %v4689, %v4679
      %v4860 = vpack.c.b16 %v4690, %v4680
      %v4861 = vpack.c.b16 %v4691, %v4681
      %v4862 = vpack.c.b16 %v4692, %v4682
      %v4863 = vpack.c.b16 %v4693, %v4683
      %v4864 = vpack.c.b16 %v4694, %v4684
      %v4865 = vpack.c.b16 %v4695, %v4685
      %v4866 = vpack.c.b16 %v4696, %v4686
      %v4867 = vpack.c.b16 %v4697, %v4687
      %v4868 = vpack.c.b16 %v4708, %v4698
      %v4869 = vpack.c.b16 %v4709, %v4699
      %v4870 = vpack.c.b16 %v4710, %v4700
      %v4871 = vpack.c.b16 %v4711, %v4701
      %v4872 = vpack.c.b16 %v4712, %v4702
      %v4873 = vpack.c.b16 %v4713, %v4703
      %v4874 = vpack.c.b16 %v4714, %v4704
      %v4875 = vpack.c.b16 %v4715, %v4705
      %v4876 = vpack.c.b16 %v4716, %v4706
      %v4877 = vpack.c.b16 %v4717, %v4707
      %5038 = vmatprep.subr.bf16.mxu0 %v4719
      %5039 = vmatpush1.bf16.msra.mxu0 %v4718
      %5040 = vmatprep.subr.bf16.mxu0 %v4729
      %5041 = vmatpush1.bf16.msra.mxu0 %v4728
      %5042 = vmatprep.subr.bf16.mxu0 %v4739
      %5043 = vmatpush1.bf16.msra.mxu0 %v4738
      %5044 = vmatprep.subr.bf16.mxu0 %v4749
      %5045 = vmatpush1.bf16.msra.mxu0 %v4748
      %5046 = vmatprep.subr.bf16.mxu0 %v4759
      %5047 = vmatpush1.bf16.msra.mxu0 %v4758
      %5048 = vmatprep.subr.bf16.mxu0 %v4769
      %5049 = vmatpush1.bf16.msra.mxu0 %v4768
      %5050 = vmatprep.subr.bf16.mxu0 %v4779
      %5051 = vmatpush1.bf16.msra.mxu0 %v4778
      %5052 = vmatprep.subr.bf16.mxu0 %v4789
      %5053 = vmatpush1.bf16.msra.mxu0 %v4788
      %5054 = vmatprep.subr.bf16.mxu0 %v4799
      %5055 = vmatpush1.bf16.msra.mxu0 %v4798
      %5056 = vmatprep.subr.bf16.mxu0 %v4809
      %5057 = vmatpush1.bf16.msra.mxu0 %v4808
      %5058 = vmatprep.subr.bf16.mxu0 %v4819
      %5059 = vmatpush1.bf16.msra.mxu0 %v4818
      %5060 = vmatprep.subr.bf16.mxu0 %v4829
      %5061 = vmatpush1.bf16.msra.mxu0 %v4828
      %5062 = vmatprep.subr.bf16.mxu0 %v4839
      %5063 = vmatpush1.bf16.msra.mxu0 %v4838
      %5064 = vmatprep.subr.bf16.mxu0 %v4849
      %5065 = vmatpush1.bf16.msra.mxu0 %v4848
      %5066 = vmatprep.subr.bf16.mxu0 %v4859
      %5067 = vmatpush1.bf16.msra.mxu0 %v4858
      %5068 = vmatprep.subr.bf16.mxu0 %v4869
      %5069 = vmatpush1.bf16.msra.mxu0 %v4868
      %5070 = vmatprep.mubr.bf16.mxu0 %v4235
      %5071 = vmatmul.mubr.bf16.gmra.mrb[0].mxu0 %v4218
      %v5072 = vpop.f32.mrb[0].mxu0
      %v5073 = vadd.f32 0.0, %v5072
      %v5074 = vpop.f32.mrb[0].mxu0
      %v5075 = vadd.f32 0.0, %v5074
      %v5076 = vpop.f32.mrb[0].mxu0
      %v5077 = vadd.f32 0.0, %v5076
      %v5078 = vpop.f32.mrb[0].mxu0
      %v5079 = vadd.f32 0.0, %v5078
      %5080 = vdwg.mxu0
      %5081 = vmatprep.subr.bf16.mxu0 %v4721
      %5082 = vmatpush1.bf16.msra.mxu0 %v4720
      %5083 = vmatprep.subr.bf16.mxu0 %v4731
      %5084 = vmatpush1.bf16.msra.mxu0 %v4730
      %5085 = vmatprep.subr.bf16.mxu0 %v4741
      %5086 = vmatpush1.bf16.msra.mxu0 %v4740
      %5087 = vmatprep.subr.bf16.mxu0 %v4751
      %5088 = vmatpush1.bf16.msra.mxu0 %v4750
      %5089 = vmatprep.subr.bf16.mxu0 %v4761
      %5090 = vmatpush1.bf16.msra.mxu0 %v4760
      %5091 = vmatprep.subr.bf16.mxu0 %v4771
      %5092 = vmatpush1.bf16.msra.mxu0 %v4770
      %5093 = vmatprep.subr.bf16.mxu0 %v4781
      %5094 = vmatpush1.bf16.msra.mxu0 %v4780
      %5095 = vmatprep.subr.bf16.mxu0 %v4791
      %5096 = vmatpush1.bf16.msra.mxu0 %v4790
      %5097 = vmatprep.subr.bf16.mxu0 %v4801
      %5098 = vmatpush1.bf16.msra.mxu0 %v4800
      %5099 = vmatprep.subr.bf16.mxu0 %v4811
      %5100 = vmatpush1.bf16.msra.mxu0 %v4810
      %5101 = vmatprep.subr.bf16.mxu0 %v4821
      %5102 = vmatpush1.bf16.msra.mxu0 %v4820
      %5103 = vmatprep.subr.bf16.mxu0 %v4831
      %5104 = vmatpush1.bf16.msra.mxu0 %v4830
      %5105 = vmatprep.subr.bf16.mxu0 %v4841
      %5106 = vmatpush1.bf16.msra.mxu0 %v4840
      %5107 = vmatprep.subr.bf16.mxu0 %v4851
      %5108 = vmatpush1.bf16.msra.mxu0 %v4850
      %5109 = vmatprep.subr.bf16.mxu0 %v4861
      %5110 = vmatpush1.bf16.msra.mxu0 %v4860
      %5111 = vmatprep.subr.bf16.mxu0 %v4871
      %5112 = vmatpush1.bf16.msra.mxu0 %v4870
      %5113 = vmatprep.mubr.bf16.mxu0 %v4235
      %5114 = vmatmul.mubr.bf16.gmra.mrb[0].mxu0 %v4218
      %v5115 = vpop.f32.mrb[0].mxu0
      %v5116 = vadd.f32 0.0, %v5115
      %v5117 = vpop.f32.mrb[0].mxu0
      %v5118 = vadd.f32 0.0, %v5117
      %v5119 = vpop.f32.mrb[0].mxu0
      %v5120 = vadd.f32 0.0, %v5119
      %v5121 = vpop.f32.mrb[0].mxu0
      %v5122 = vadd.f32 0.0, %v5121
      %5123 = vdwg.mxu0
      %5124 = vmatprep.subr.bf16.mxu0 %v4723
      %5125 = vmatpush1.bf16.msra.mxu0 %v4722
      %5126 = vmatprep.subr.bf16.mxu0 %v4733
      %5127 = vmatpush1.bf16.msra.mxu0 %v4732
      %5128 = vmatprep.subr.bf16.mxu0 %v4743
      %5129 = vmatpush1.bf16.msra.mxu0 %v4742
      %5130 = vmatprep.subr.bf16.mxu0 %v4753
      %5131 = vmatpush1.bf16.msra.mxu0 %v4752
      %5132 = vmatprep.subr.bf16.mxu0 %v4763
      %5133 = vmatpush1.bf16.msra.mxu0 %v4762
      %5134 = vmatprep.subr.bf16.mxu0 %v4773
      %5135 = vmatpush1.bf16.msra.mxu0 %v4772
      %5136 = vmatprep.subr.bf16.mxu0 %v4783
      %5137 = vmatpush1.bf16.msra.mxu0 %v4782
      %5138 = vmatprep.subr.bf16.mxu0 %v4793
      %5139 = vmatpush1.bf16.msra.mxu0 %v4792
      %5140 = vmatprep.subr.bf16.mxu0 %v4803
      %5141 = vmatpush1.bf16.msra.mxu0 %v4802
      %5142 = vmatprep.subr.bf16.mxu0 %v4813
      %5143 = vmatpush1.bf16.msra.mxu0 %v4812
      %5144 = vmatprep.subr.bf16.mxu0 %v4823
      %5145 = vmatpush1.bf16.msra.mxu0 %v4822
      %5146 = vmatprep.subr.bf16.mxu0 %v4833
      %5147 = vmatpush1.bf16.msra.mxu0 %v4832
      %5148 = vmatprep.subr.bf16.mxu0 %v4843
      %5149 = vmatpush1.bf16.msra.mxu0 %v4842
      %5150 = vmatprep.subr.bf16.mxu0 %v4853
      %5151 = vmatpush1.bf16.msra.mxu0 %v4852
      %5152 = vmatprep.subr.bf16.mxu0 %v4863
      %5153 = vmatpush1.bf16.msra.mxu0 %v4862
      %5154 = vmatprep.subr.bf16.mxu0 %v4873
      %5155 = vmatpush1.bf16.msra.mxu0 %v4872
      %5156 = vmatprep.mubr.bf16.mxu0 %v4235
      %5157 = vmatmul.mubr.bf16.gmra.mrb[0].mxu0 %v4218
      %v5158 = vpop.f32.mrb[0].mxu0
      %v5159 = vadd.f32 0.0, %v5158
      %v5160 = vpop.f32.mrb[0].mxu0
      %v5161 = vadd.f32 0.0, %v5160
      %v5162 = vpop.f32.mrb[0].mxu0
      %v5163 = vadd.f32 0.0, %v5162
      %v5164 = vpop.f32.mrb[0].mxu0
      %v5165 = vadd.f32 0.0, %v5164
      %5166 = vdwg.mxu0
      %5167 = vmatprep.subr.bf16.mxu0 %v4725
      %5168 = vmatpush1.bf16.msra.mxu0 %v4724
      %5169 = vmatprep.subr.bf16.mxu0 %v4735
      %5170 = vmatpush1.bf16.msra.mxu0 %v4734
      %5171 = vmatprep.subr.bf16.mxu0 %v4745
      %5172 = vmatpush1.bf16.msra.mxu0 %v4744
      %5173 = vmatprep.subr.bf16.mxu0 %v4755
      %5174 = vmatpush1.bf16.msra.mxu0 %v4754
      %5175 = vmatprep.subr.bf16.mxu0 %v4765
      %5176 = vmatpush1.bf16.msra.mxu0 %v4764
      %5177 = vmatprep.subr.bf16.mxu0 %v4775
      %5178 = vmatpush1.bf16.msra.mxu0 %v4774
      %5179 = vmatprep.subr.bf16.mxu0 %v4785
      %5180 = vmatpush1.bf16.msra.mxu0 %v4784
      %5181 = vmatprep.subr.bf16.mxu0 %v4795
      %5182 = vmatpush1.bf16.msra.mxu0 %v4794
      %5183 = vmatprep.subr.bf16.mxu0 %v4805
      %5184 = vmatpush1.bf16.msra.mxu0 %v4804
      %5185 = vmatprep.subr.bf16.mxu0 %v4815
      %5186 = vmatpush1.bf16.msra.mxu0 %v4814
      %5187 = vmatprep.subr.bf16.mxu0 %v4825
      %5188 = vmatpush1.bf16.msra.mxu0 %v4824
      %5189 = vmatprep.subr.bf16.mxu0 %v4835
      %5190 = vmatpush1.bf16.msra.mxu0 %v4834
      %5191 = vmatprep.subr.bf16.mxu0 %v4845
      %5192 = vmatpush1.bf16.msra.mxu0 %v4844
      %5193 = vmatprep.subr.bf16.mxu0 %v4855
      %5194 = vmatpush1.bf16.msra.mxu0 %v4854
      %5195 = vmatprep.subr.bf16.mxu0 %v4865
      %5196 = vmatpush1.bf16.msra.mxu0 %v4864
      %5197 = vmatprep.subr.bf16.mxu0 %v4875
      %5198 = vmatpush1.bf16.msra.mxu0 %v4874
      %5199 = vmatprep.mubr.bf16.mxu0 %v4235
      %5200 = vmatmul.mubr.bf16.gmra.mrb[0].mxu0 %v4218
      %v5201 = vpop.f32.mrb[0].mxu0
      %v5202 = vadd.f32 0.0, %v5201
      %v5203 = vpop.f32.mrb[0].mxu0
      %v5204 = vadd.f32 0.0, %v5203
      %v5205 = vpop.f32.mrb[0].mxu0
      %v5206 = vadd.f32 0.0, %v5205
      %v5207 = vpop.f32.mrb[0].mxu0
      %v5208 = vadd.f32 0.0, %v5207
      %5209 = vdwg.mxu0
      %5210 = vmatprep.subr.bf16.mxu0 %v4727
      %5211 = vmatpush1.bf16.msra.mxu0 %v4726
      %5212 = vmatprep.subr.bf16.mxu0 %v4737
      %5213 = vmatpush1.bf16.msra.mxu0 %v4736
      %5214 = vmatprep.subr.bf16.mxu0 %v4747
      %5215 = vmatpush1.bf16.msra.mxu0 %v4746
      %5216 = vmatprep.subr.bf16.mxu0 %v4757
      %5217 = vmatpush1.bf16.msra.mxu0 %v4756
      %5218 = vmatprep.subr.bf16.mxu0 %v4767
      %5219 = vmatpush1.bf16.msra.mxu0 %v4766
      %5220 = vmatprep.subr.bf16.mxu0 %v4777
      %5221 = vmatpush1.bf16.msra.mxu0 %v4776
      %5222 = vmatprep.subr.bf16.mxu0 %v4787
      %5223 = vmatpush1.bf16.msra.mxu0 %v4786
      %5224 = vmatprep.subr.bf16.mxu0 %v4797
      %5225 = vmatpush1.bf16.msra.mxu0 %v4796
      %5226 = vmatprep.subr.bf16.mxu0 %v4807
      %5227 = vmatpush1.bf16.msra.mxu0 %v4806
      %5228 = vmatprep.subr.bf16.mxu0 %v4817
      %5229 = vmatpush1.bf16.msra.mxu0 %v4816
      %5230 = vmatprep.subr.bf16.mxu0 %v4827
      %5231 = vmatpush1.bf16.msra.mxu0 %v4826
      %5232 = vmatprep.subr.bf16.mxu0 %v4837
      %5233 = vmatpush1.bf16.msra.mxu0 %v4836
      %5234 = vmatprep.subr.bf16.mxu0 %v4847
      %5235 = vmatpush1.bf16.msra.mxu0 %v4846
      %5236 = vmatprep.subr.bf16.mxu0 %v4857
      %5237 = vmatpush1.bf16.msra.mxu0 %v4856
      %5238 = vmatprep.subr.bf16.mxu0 %v4867
      %5239 = vmatpush1.bf16.msra.mxu0 %v4866
      %5240 = vmatprep.subr.bf16.mxu0 %v4877
      %5241 = vmatpush1.bf16.msra.mxu0 %v4876
      %5242 = vmatprep.mubr.bf16.mxu0 %v4235
      %5243 = vmatmul.mubr.bf16.gmra.mrb[0].mxu0 %v4218
      %v5244 = vpop.f32.mrb[0].mxu0
      %v5245 = vadd.f32 0.0, %v5244
      %v5246 = vpop.f32.mrb[0].mxu0
      %v5247 = vadd.f32 0.0, %v5246
      %v5248 = vpop.f32.mrb[0].mxu0
      %v5249 = vadd.f32 0.0, %v5248
      %v5250 = vpop.f32.mrb[0].mxu0
      %v5251 = vadd.f32 0.0, %v5250
      %5252 = vdwg.mxu0
      %v5253 = vld [vmem:[#allocation3] sm:$0xff]
      %v5254 = vld [vmem:[#allocation3 + $0x8] sm:$0xff]
      %v5255 = vld [vmem:[#allocation3 + $0x10] sm:$0xff]
      %v5256 = vld [vmem:[#allocation3 + $0x18] sm:$0xff]
      %v5257 = vld [vmem:[#allocation3 + $0x20] sm:$0xff]
      %v5258 = vld [vmem:[#allocation3 + $0x28] sm:$0xff]
      %v5259 = vld [vmem:[#allocation3 + $0x30] sm:$0xff]
      %v5260 = vld [vmem:[#allocation3 + $0x38] sm:$0xff]
      %v5261 = vld [vmem:[#allocation3 + $0x40] sm:$0xff]
      %v5262 = vld [vmem:[#allocation3 + $0x48] sm:$0xff]
      %v5263 = vld [vmem:[#allocation3 + $0x50] sm:$0xff]
      %v5264 = vld [vmem:[#allocation3 + $0x58] sm:$0xff]
      %v5265 = vld [vmem:[#allocation3 + $0x60] sm:$0xff]
      %v5266 = vld [vmem:[#allocation3 + $0x68] sm:$0xff]
      %v5267 = vld [vmem:[#allocation3 + $0x70] sm:$0xff]
      %v5268 = vld [vmem:[#allocation3 + $0x78] sm:$0xff]
      %v5269 = vld [vmem:[#allocation3 + $0x80] sm:$0xff]
      %v5270 = vld [vmem:[#allocation3 + $0x88] sm:$0xff]
      %v5271 = vld [vmem:[#allocation3 + $0x90] sm:$0xff]
      %v5272 = vld [vmem:[#allocation3 + $0x98] sm:$0xff]
      %v5273 = vadd.f32 %v5253, %v5073
      %v5274 = vadd.f32 %v5254, %v5075
      %v5275 = vadd.f32 %v5255, %v5116
      %v5276 = vadd.f32 %v5256, %v5118
      %v5277 = vadd.f32 %v5257, %v5159
      %v5278 = vadd.f32 %v5258, %v5161
      %v5279 = vadd.f32 %v5259, %v5202
      %v5280 = vadd.f32 %v5260, %v5204
      %v5281 = vadd.f32 %v5261, %v5245
      %v5282 = vadd.f32 %v5262, %v5247
      %v5283 = vadd.f32 %v5263, %v5077
      %v5284 = vadd.f32 %v5264, %v5079
      %v5285 = vadd.f32 %v5265, %v5120
      %v5286 = vadd.f32 %v5266, %v5122
      %v5287 = vadd.f32 %v5267, %v5163
      %v5288 = vadd.f32 %v5268, %v5165
      %v5289 = vadd.f32 %v5269, %v5206
      %v5290 = vadd.f32 %v5270, %v5208
      %v5291 = vadd.f32 %v5271, %v5249
      %v5292 = vadd.f32 %v5272, %v5251
      %5293 = vst [vmem:[#allocation3] sm:$0xff] %v5273
      %5294 = vst [vmem:[#allocation3 + $0x8] sm:$0xff] %v5274
      %5295 = vst [vmem:[#allocation3 + $0x10] sm:$0xff] %v5275
      %5296 = vst [vmem:[#allocation3 + $0x18] sm:$0xff] %v5276
      %5297 = vst [vmem:[#allocation3 + $0x20] sm:$0xff] %v5277
      %5298 = vst [vmem:[#allocation3 + $0x28] sm:$0xff] %v5278
      %5299 = vst [vmem:[#allocation3 + $0x30] sm:$0xff] %v5279
      %5300 = vst [vmem:[#allocation3 + $0x38] sm:$0xff] %v5280
      %5301 = vst [vmem:[#allocation3 + $0x40] sm:$0xff] %v5281
      %5302 = vst [vmem:[#allocation3 + $0x48] sm:$0xff] %v5282
      %5303 = vst [vmem:[#allocation3 + $0x50] sm:$0xff] %v5283
      %5304 = vst [vmem:[#allocation3 + $0x58] sm:$0xff] %v5284
      %5305 = vst [vmem:[#allocation3 + $0x60] sm:$0xff] %v5285
      %5306 = vst [vmem:[#allocation3 + $0x68] sm:$0xff] %v5286
      %5307 = vst [vmem:[#allocation3 + $0x70] sm:$0xff] %v5287
      %5308 = vst [vmem:[#allocation3 + $0x78] sm:$0xff] %v5288
      %5309 = vst [vmem:[#allocation3 + $0x80] sm:$0xff] %v5289
      %5310 = vst [vmem:[#allocation3 + $0x88] sm:$0xff] %v5290
      %5311 = vst [vmem:[#allocation3 + $0x90] sm:$0xff] %v5291
      %5312 = vst [vmem:[#allocation3 + $0x98] sm:$0xff] %v5292
      %v5313 = vld [vmem:[#allocation3] sm:$0xff]
      %v5314 = vld [vmem:[#allocation3 + $0x8] sm:$0xff]
      %v5315 = vld [vmem:[#allocation3 + $0x10] sm:$0xff]
      %v5316 = vld [vmem:[#allocation3 + $0x18] sm:$0xff]
      %v5317 = vld [vmem:[#allocation3 + $0x20] sm:$0xff]
      %v5318 = vld [vmem:[#allocation3 + $0x28] sm:$0xff]
      %v5319 = vld [vmem:[#allocation3 + $0x30] sm:$0xff]
      %v5320 = vld [vmem:[#allocation3 + $0x38] sm:$0xff]
      %v5321 = vld [vmem:[#allocation3 + $0x40] sm:$0xff]
      %v5322 = vld [vmem:[#allocation3 + $0x48] sm:$0xff]
      %v5323 = vld [vmem:[#allocation3 + $0x50] sm:$0xff]
      %v5324 = vld [vmem:[#allocation3 + $0x58] sm:$0xff]
      %v5325 = vld [vmem:[#allocation3 + $0x60] sm:$0xff]
      %v5326 = vld [vmem:[#allocation3 + $0x68] sm:$0xff]
      %v5327 = vld [vmem:[#allocation3 + $0x70] sm:$0xff]
      %v5328 = vld [vmem:[#allocation3 + $0x78] sm:$0xff]
      %v5329 = vld [vmem:[#allocation3 + $0x80] sm:$0xff]
      %v5330 = vld [vmem:[#allocation3 + $0x88] sm:$0xff]
      %v5331 = vld [vmem:[#allocation3 + $0x90] sm:$0xff]
      %v5332 = vld [vmem:[#allocation3 + $0x98] sm:$0xff]
      %v5333 = vmul.f32 %v5313, %v5313
      %v5334 = vmul.f32 %v5314, %v5314
      %v5335 = vmul.f32 %v5315, %v5315
      %v5336 = vmul.f32 %v5316, %v5316
      %v5337 = vmul.f32 %v5317, %v5317
      %v5338 = vmul.f32 %v5323, %v5323
      %v5339 = vmul.f32 %v5324, %v5324
      %v5340 = vmul.f32 %v5325, %v5325
      %v5341 = vmul.f32 %v5326, %v5326
      %v5342 = vmul.f32 %v5327, %v5327
      %v5343 = vmul.f32 %v5318, %v5318
      %v5344 = vmul.f32 %v5319, %v5319
      %v5345 = vmul.f32 %v5320, %v5320
      %v5346 = vmul.f32 %v5321, %v5321
      %v5347 = vmul.f32 %v5322, %v5322
      %v5348 = vmul.f32 %v5328, %v5328
      %v5349 = vmul.f32 %v5329, %v5329
      %v5350 = vmul.f32 %v5330, %v5330
      %v5351 = vmul.f32 %v5331, %v5331
      %v5352 = vmul.f32 %v5332, %v5332
      %v5353 = vadd.f32 %v5333, %v5343
      %v5354 = vadd.f32 %v5334, %v5344
      %v5355 = vadd.f32 %v5335, %v5345
      %v5356 = vadd.f32 %v5336, %v5346
      %v5357 = vadd.f32 %v5337, %v5347
      %v5358 = vadd.f32 %v5338, %v5348
      %v5359 = vadd.f32 %v5339, %v5349
      %v5360 = vadd.f32 %v5340, %v5350
      %v5361 = vadd.f32 %v5341, %v5351
      %v5362 = vadd.f32 %v5342, %v5352
      %v5363 = vrsqrt.pop %v5353
      %v5364 = vmul.f32 %v5353, %v5363
      %vm5365 = vcmp.eq.f32.partialorder %v5353, inf
      %v5366 = vsel %vm5365, %v5353, %v5364
      %vm5367 = vcmp.eq.f32.partialorder %v5353, 0.0
      %v5368 = vand.u32 %v5353, 2147483648
      %v5369 = vsel %vm5367, %v5368, %v5366
      %v5370 = vrsqrt.pop %v5354
      %v5371 = vmul.f32 %v5354, %v5370
      %vm5372 = vcmp.eq.f32.partialorder %v5354, inf
      %v5373 = vsel %vm5372, %v5354, %v5371
      %vm5374 = vcmp.eq.f32.partialorder %v5354, 0.0
      %v5375 = vand.u32 %v5354, 2147483648
      %v5376 = vsel %vm5374, %v5375, %v5373
      %v5377 = vrsqrt.pop %v5355
      %v5378 = vmul.f32 %v5355, %v5377
      %vm5379 = vcmp.eq.f32.partialorder %v5355, inf
      %v5380 = vsel %vm5379, %v5355, %v5378
      %vm5381 = vcmp.eq.f32.partialorder %v5355, 0.0
      %v5382 = vand.u32 %v5355, 2147483648
      %v5383 = vsel %vm5381, %v5382, %v5380
      %v5384 = vrsqrt.pop %v5356
      %v5385 = vmul.f32 %v5356, %v5384
      %vm5386 = vcmp.eq.f32.partialorder %v5356, inf
      %v5387 = vsel %vm5386, %v5356, %v5385
      %vm5388 = vcmp.eq.f32.partialorder %v5356, 0.0
      %v5389 = vand.u32 %v5356, 2147483648
      %v5390 = vsel %vm5388, %v5389, %v5387
      %v5391 = vrsqrt.pop %v5357
      %v5392 = vmul.f32 %v5357, %v5391
      %vm5393 = vcmp.eq.f32.partialorder %v5357, inf
      %v5394 = vsel %vm5393, %v5357, %v5392
      %vm5395 = vcmp.eq.f32.partialorder %v5357, 0.0
      %v5396 = vand.u32 %v5357, 2147483648
      %v5397 = vsel %vm5395, %v5396, %v5394
      %v5398 = vrsqrt.pop %v5358
      %v5399 = vmul.f32 %v5358, %v5398
      %vm5400 = vcmp.eq.f32.partialorder %v5358, inf
      %v5401 = vsel %vm5400, %v5358, %v5399
      %vm5402 = vcmp.eq.f32.partialorder %v5358, 0.0
      %v5403 = vand.u32 %v5358, 2147483648
      %v5404 = vsel %vm5402, %v5403, %v5401
      %v5405 = vrsqrt.pop %v5359
      %v5406 = vmul.f32 %v5359, %v5405
      %vm5407 = vcmp.eq.f32.partialorder %v5359, inf
      %v5408 = vsel %vm5407, %v5359, %v5406
      %vm5409 = vcmp.eq.f32.partialorder %v5359, 0.0
      %v5410 = vand.u32 %v5359, 2147483648
      %v5411 = vsel %vm5409, %v5410, %v5408
      %v5412 = vrsqrt.pop %v5360
      %v5413 = vmul.f32 %v5360, %v5412
      %vm5414 = vcmp.eq.f32.partialorder %v5360, inf
      %v5415 = vsel %vm5414, %v5360, %v5413
      %vm5416 = vcmp.eq.f32.partialorder %v5360, 0.0
      %v5417 = vand.u32 %v5360, 2147483648
      %v5418 = vsel %vm5416, %v5417, %v5415
      %v5419 = vrsqrt.pop %v5361
      %v5420 = vmul.f32 %v5361, %v5419
      %vm5421 = vcmp.eq.f32.partialorder %v5361, inf
      %v5422 = vsel %vm5421, %v5361, %v5420
      %vm5423 = vcmp.eq.f32.partialorder %v5361, 0.0
      %v5424 = vand.u32 %v5361, 2147483648
      %v5425 = vsel %vm5423, %v5424, %v5422
      %v5426 = vrsqrt.pop %v5362
      %v5427 = vmul.f32 %v5362, %v5426
      %vm5428 = vcmp.eq.f32.partialorder %v5362, inf
      %v5429 = vsel %vm5428, %v5362, %v5427
      %vm5430 = vcmp.eq.f32.partialorder %v5362, 0.0
      %v5431 = vand.u32 %v5362, 2147483648
      %v5432 = vsel %vm5430, %v5431, %v5429
      %v5433 = vld [vmem:[%s3] sm:$0xff]
      %v5434 = vld [vmem:[%s3 + $0x8] sm:$0xff]
      %v5435 = vld [vmem:[%s3 + $0x10] sm:$0xff]
      %v5436 = vld [vmem:[%s3 + $0x18] sm:$0xff]
      %v5437 = vld [vmem:[%s3 + $0x20] sm:$0xff]
      %v5438 = vld [vmem:[%s3 + $0x28] sm:$0xff]
      %v5439 = vld [vmem:[%s3 + $0x30] sm:$0xff]
      %v5440 = vld [vmem:[%s3 + $0x38] sm:$0xff]
      %v5441 = vld [vmem:[%s3 + $0x40] sm:$0xff]
      %v5442 = vld [vmem:[%s3 + $0x48] sm:$0xff]
      %v5443 = vld [vmem:[%s3 + $0x50] sm:$0xff]
      %v5444 = vld [vmem:[%s3 + $0x58] sm:$0xff]
      %v5445 = vld [vmem:[%s3 + $0x60] sm:$0xff]
      %v5446 = vld [vmem:[%s3 + $0x68] sm:$0xff]
      %v5447 = vld [vmem:[%s3 + $0x70] sm:$0xff]
      %v5448 = vld [vmem:[%s3 + $0x78] sm:$0xff]
      %v5449 = vld [vmem:[%s3 + $0x80] sm:$0xff]
      %v5450 = vld [vmem:[%s3 + $0x88] sm:$0xff]
      %v5451 = vld [vmem:[%s3 + $0x90] sm:$0xff]
      %v5452 = vld [vmem:[%s3 + $0x98] sm:$0xff]
      %v5453 = vld [vmem:[%s3 + $0xa0] sm:$0xff]
      %v5454 = vld [vmem:[%s3 + $0xa8] sm:$0xff]
      %v5455 = vld [vmem:[%s3 + $0xb0] sm:$0xff]
      %v5456 = vld [vmem:[%s3 + $0xb8] sm:$0xff]
      %v5457 = vld [vmem:[%s3 + $0xc0] sm:$0xff]
      %v5458 = vld [vmem:[%s3 + $0xc8] sm:$0xff]
      %v5459 = vld [vmem:[%s3 + $0xd0] sm:$0xff]
      %v5460 = vld [vmem:[%s3 + $0xd8] sm:$0xff]
      %v5461 = vld [vmem:[%s3 + $0xe0] sm:$0xff]
      %v5462 = vld [vmem:[%s3 + $0xe8] sm:$0xff]
      %v5463 = vld [vmem:[%s3 + $0xf0] sm:$0xff]
      %v5464 = vld [vmem:[%s3 + $0xf8] sm:$0xff]
      %v5465 = vld [vmem:[%s3 + $0x100] sm:$0xff]
      %v5466 = vld [vmem:[%s3 + $0x108] sm:$0xff]
      %v5467 = vld [vmem:[%s3 + $0x110] sm:$0xff]
      %v5468 = vld [vmem:[%s3 + $0x118] sm:$0xff]
      %v5469 = vld [vmem:[%s3 + $0x120] sm:$0xff]
      %v5470 = vld [vmem:[%s3 + $0x128] sm:$0xff]
      %v5471 = vld [vmem:[%s3 + $0x130] sm:$0xff]
      %v5472 = vld [vmem:[%s3 + $0x138] sm:$0xff]
      %v5473 = vld [vmem:[%s3 + $0x140] sm:$0xff]
      %v5474 = vld [vmem:[%s3 + $0x148] sm:$0xff]
      %v5475 = vld [vmem:[%s3 + $0x150] sm:$0xff]
      %v5476 = vld [vmem:[%s3 + $0x158] sm:$0xff]
      %v5477 = vld [vmem:[%s3 + $0x160] sm:$0xff]
      %v5478 = vld [vmem:[%s3 + $0x168] sm:$0xff]
      %v5479 = vld [vmem:[%s3 + $0x170] sm:$0xff]
      %v5480 = vld [vmem:[%s3 + $0x178] sm:$0xff]
      %v5481 = vld [vmem:[%s3 + $0x180] sm:$0xff]
      %v5482 = vld [vmem:[%s3 + $0x188] sm:$0xff]
      %v5483 = vld [vmem:[%s3 + $0x190] sm:$0xff]
      %v5484 = vld [vmem:[%s3 + $0x198] sm:$0xff]
      %v5485 = vld [vmem:[%s3 + $0x1a0] sm:$0xff]
      %v5486 = vld [vmem:[%s3 + $0x1a8] sm:$0xff]
      %v5487 = vld [vmem:[%s3 + $0x1b0] sm:$0xff]
      %v5488 = vld [vmem:[%s3 + $0x1b8] sm:$0xff]
      %v5489 = vld [vmem:[%s3 + $0x1c0] sm:$0xff]
      %v5490 = vld [vmem:[%s3 + $0x1c8] sm:$0xff]
      %v5491 = vld [vmem:[%s3 + $0x1d0] sm:$0xff]
      %v5492 = vld [vmem:[%s3 + $0x1d8] sm:$0xff]
      %v5493 = vld [vmem:[%s3 + $0x1e0] sm:$0xff]
      %v5494 = vld [vmem:[%s3 + $0x1e8] sm:$0xff]
      %v5495 = vld [vmem:[%s3 + $0x1f0] sm:$0xff]
      %v5496 = vld [vmem:[%s3 + $0x1f8] sm:$0xff]
      %v5497 = vld [vmem:[%s3 + $0x200] sm:$0xff]
      %v5498 = vld [vmem:[%s3 + $0x208] sm:$0xff]
      %v5499 = vld [vmem:[%s3 + $0x210] sm:$0xff]
      %v5500 = vld [vmem:[%s3 + $0x218] sm:$0xff]
      %v5501 = vld [vmem:[%s3 + $0x220] sm:$0xff]
      %v5502 = vld [vmem:[%s3 + $0x228] sm:$0xff]
      %v5503 = vld [vmem:[%s3 + $0x230] sm:$0xff]
      %v5504 = vld [vmem:[%s3 + $0x238] sm:$0xff]
      %v5505 = vld [vmem:[%s3 + $0x240] sm:$0xff]
      %v5506 = vld [vmem:[%s3 + $0x248] sm:$0xff]
      %v5507 = vld [vmem:[%s3 + $0x250] sm:$0xff]
      %v5508 = vld [vmem:[%s3 + $0x258] sm:$0xff]
      %v5509 = vld [vmem:[%s3 + $0x260] sm:$0xff]
      %v5510 = vld [vmem:[%s3 + $0x268] sm:$0xff]
      %v5511 = vld [vmem:[%s3 + $0x270] sm:$0xff]
      %v5512 = vld [vmem:[%s3 + $0x278] sm:$0xff]
      %5513 = vmatprep.subr.mxu0 0.0
      %5514 = vmatpush1.msra.mxu0 %v5433
      %5515 = vmatprep.subr.mxu0 0.0
      %5516 = vmatpush1.msra.mxu0 %v5434
      %5517 = vmatprep.subr.mxu0 0.0
      %5518 = vmatpush1.msra.mxu0 %v5435
      %5519 = vmatprep.subr.mxu0 0.0
      %5520 = vmatpush1.msra.mxu0 %v5436
      %5521 = vmatprep.subr.mxu0 0.0
      %5522 = vmatpush1.msra.mxu0 %v5437
      %5523 = vmatprep.subr.mxu0 0.0
      %5524 = vmatpush1.msra.mxu0 %v5438
      %5525 = vmatprep.subr.mxu0 0.0
      %5526 = vmatpush1.msra.mxu0 %v5439
      %5527 = vmatprep.subr.mxu0 0.0
      %5528 = vmatpush1.msra.mxu0 %v5440
      %5529 = vmatprep.subr.mxu0 0.0
      %5530 = vmatpush1.msra.mxu0 %v5441
      %5531 = vmatprep.subr.mxu0 0.0
      %5532 = vmatpush1.msra.mxu0 %v5442
      %5533 = vmatprep.subr.mxu0 0.0
      %5534 = vmatpush1.msra.mxu0 %v5443
      %5535 = vmatprep.subr.mxu0 0.0
      %5536 = vmatpush1.msra.mxu0 %v5444
      %5537 = vmatprep.subr.mxu0 0.0
      %5538 = vmatpush1.msra.mxu0 %v5445
      %5539 = vmatprep.subr.mxu0 0.0
      %5540 = vmatpush1.msra.mxu0 %v5446
      %5541 = vmatprep.subr.mxu0 0.0
      %5542 = vmatpush1.msra.mxu0 %v5447
      %5543 = vmatprep.subr.mxu0 0.0
      %5544 = vmatpush1.msra.mxu0 %v5448
      %5545 = vmatprep.subr.mxu0 0.0
      %5546 = vmatpush1.msra.mxu0 %v5449
      %5547 = vmatprep.subr.mxu0 0.0
      %5548 = vmatpush1.msra.mxu0 %v5450
      %5549 = vmatprep.subr.mxu0 0.0
      %5550 = vmatpush1.msra.mxu0 %v5451
      %5551 = vmatprep.subr.mxu0 0.0
      %5552 = vmatpush1.msra.mxu0 %v5452
      %5553 = vmatprep.subr.mxu0 0.0
      %5554 = vmatpush1.msra.mxu0 %v5453
      %5555 = vmatprep.subr.mxu0 0.0
      %5556 = vmatpush1.msra.mxu0 %v5454
      %5557 = vmatprep.subr.mxu0 0.0
      %5558 = vmatpush1.msra.mxu0 %v5455
      %5559 = vmatprep.subr.mxu0 0.0
      %5560 = vmatpush1.msra.mxu0 %v5456
      %5561 = vmatprep.subr.mxu0 0.0
      %5562 = vmatpush1.msra.mxu0 %v5457
      %5563 = vmatprep.subr.mxu0 0.0
      %5564 = vmatpush1.msra.mxu0 %v5458
      %5565 = vmatprep.subr.mxu0 0.0
      %5566 = vmatpush1.msra.mxu0 %v5459
      %5567 = vmatprep.subr.mxu0 0.0
      %5568 = vmatpush1.msra.mxu0 %v5460
      %5569 = vmatprep.subr.mxu0 0.0
      %5570 = vmatpush1.msra.mxu0 %v5461
      %5571 = vmatprep.subr.mxu0 0.0
      %5572 = vmatpush1.msra.mxu0 %v5462
      %5573 = vmatprep.subr.mxu0 0.0
      %5574 = vmatpush1.msra.mxu0 %v5463
      %5575 = vmatprep.subr.mxu0 0.0
      %5576 = vmatpush1.msra.mxu0 %v5464
      %5577 = vmatprep.mubr.f32.mxu0 %v5376
      %5578 = vmatmul.mubr.f32.gmra.mrb[0].mxu0 %v5369
      %v5579 = vpop.f32.mrb[0].mxu0
      %v5580 = vadd.f32 0.0, %v5579
      %v5581 = vpop.f32.mrb[0].mxu0
      %5582 = vmatprep.mubr.f32.mxu0 %v5411
      %5583 = vmatmul.mubr.f32.gmra.mrb[0].mxu0 %v5404
      %v5584 = vpop.f32.mrb[0].mxu0
      %v5585 = vadd.f32 0.0, %v5584
      %v5586 = vpop.f32.mrb[0].mxu0
      %5587 = vdwg.mxu0
      %5588 = vmatprep.subr.mxu0 0.0
      %5589 = vmatpush1.msra.mxu0 %v5465
      %5590 = vmatprep.subr.mxu0 0.0
      %5591 = vmatpush1.msra.mxu0 %v5466
      %5592 = vmatprep.subr.mxu0 0.0
      %5593 = vmatpush1.msra.mxu0 %v5467
      %5594 = vmatprep.subr.mxu0 0.0
      %5595 = vmatpush1.msra.mxu0 %v5468
      %5596 = vmatprep.subr.mxu0 0.0
      %5597 = vmatpush1.msra.mxu0 %v5469
      %5598 = vmatprep.subr.mxu0 0.0
      %5599 = vmatpush1.msra.mxu0 %v5470
      %5600 = vmatprep.subr.mxu0 0.0
      %5601 = vmatpush1.msra.mxu0 %v5471
      %5602 = vmatprep.subr.mxu0 0.0
      %5603 = vmatpush1.msra.mxu0 %v5472
      %5604 = vmatprep.subr.mxu0 0.0
      %5605 = vmatpush1.msra.mxu0 %v5473
      %5606 = vmatprep.subr.mxu0 0.0
      %5607 = vmatpush1.msra.mxu0 %v5474
      %5608 = vmatprep.subr.mxu0 0.0
      %5609 = vmatpush1.msra.mxu0 %v5475
      %5610 = vmatprep.subr.mxu0 0.0
      %5611 = vmatpush1.msra.mxu0 %v5476
      %5612 = vmatprep.subr.mxu0 0.0
      %5613 = vmatpush1.msra.mxu0 %v5477
      %5614 = vmatprep.subr.mxu0 0.0
      %5615 = vmatpush1.msra.mxu0 %v5478
      %5616 = vmatprep.subr.mxu0 0.0
      %5617 = vmatpush1.msra.mxu0 %v5479
      %5618 = vmatprep.subr.mxu0 0.0
      %5619 = vmatpush1.msra.mxu0 %v5480
      %5620 = vmatprep.subr.mxu0 0.0
      %5621 = vmatpush1.msra.mxu0 %v5481
      %5622 = vmatprep.subr.mxu0 0.0
      %5623 = vmatpush1.msra.mxu0 %v5482
      %5624 = vmatprep.subr.mxu0 0.0
      %5625 = vmatpush1.msra.mxu0 %v5483
      %5626 = vmatprep.subr.mxu0 0.0
      %5627 = vmatpush1.msra.mxu0 %v5484
      %5628 = vmatprep.subr.mxu0 0.0
      %5629 = vmatpush1.msra.mxu0 %v5485
      %5630 = vmatprep.subr.mxu0 0.0
      %5631 = vmatpush1.msra.mxu0 %v5486
      %5632 = vmatprep.subr.mxu0 0.0
      %5633 = vmatpush1.msra.mxu0 %v5487
      %5634 = vmatprep.subr.mxu0 0.0
      %5635 = vmatpush1.msra.mxu0 %v5488
      %5636 = vmatprep.subr.mxu0 0.0
      %5637 = vmatpush1.msra.mxu0 %v5489
      %5638 = vmatprep.subr.mxu0 0.0
      %5639 = vmatpush1.msra.mxu0 %v5490
      %5640 = vmatprep.subr.mxu0 0.0
      %5641 = vmatpush1.msra.mxu0 %v5491
      %5642 = vmatprep.subr.mxu0 0.0
      %5643 = vmatpush1.msra.mxu0 %v5492
      %5644 = vmatprep.subr.mxu0 0.0
      %5645 = vmatpush1.msra.mxu0 %v5493
      %5646 = vmatprep.subr.mxu0 0.0
      %5647 = vmatpush1.msra.mxu0 %v5494
      %5648 = vmatprep.subr.mxu0 0.0
      %5649 = vmatpush1.msra.mxu0 %v5495
      %5650 = vmatprep.subr.mxu0 0.0
      %5651 = vmatpush1.msra.mxu0 %v5496
      %5652 = vmatprep.mubr.f32.mxu0 %v5390
      %5653 = vmatmul.mubr.f32.gmra.mrb[0].mxu0 %v5383
      %v5654 = vpop.f32.mrb[0].mxu0
      %v5655 = vadd.f32 %v5580, %v5654
      %v5656 = vpop.f32.mrb[0].mxu0
      %5657 = vmatprep.mubr.f32.mxu0 %v5425
      %5658 = vmatmul.mubr.f32.gmra.mrb[0].mxu0 %v5418
      %v5659 = vpop.f32.mrb[0].mxu0
      %v5660 = vadd.f32 %v5585, %v5659
      %v5661 = vpop.f32.mrb[0].mxu0
      %5662 = vdwg.mxu0
      %5663 = vmatprep.subr.mxu0 0.0
      %5664 = vmatpush1.msra.mxu0 %v5497
      %5665 = vmatprep.subr.mxu0 0.0
      %5666 = vmatpush1.msra.mxu0 %v5498
      %5667 = vmatprep.subr.mxu0 0.0
      %5668 = vmatpush1.msra.mxu0 %v5499
      %5669 = vmatprep.subr.mxu0 0.0
      %5670 = vmatpush1.msra.mxu0 %v5500
      %5671 = vmatprep.subr.mxu0 0.0
      %5672 = vmatpush1.msra.mxu0 %v5501
      %5673 = vmatprep.subr.mxu0 0.0
      %5674 = vmatpush1.msra.mxu0 %v5502
      %5675 = vmatprep.subr.mxu0 0.0
      %5676 = vmatpush1.msra.mxu0 %v5503
      %5677 = vmatprep.subr.mxu0 0.0
      %5678 = vmatpush1.msra.mxu0 %v5504
      %5679 = vmatprep.subr.mxu0 0.0
      %5680 = vmatpush1.msra.mxu0 %v5505
      %5681 = vmatprep.subr.mxu0 0.0
      %5682 = vmatpush1.msra.mxu0 %v5506
      %5683 = vmatprep.subr.mxu0 0.0
      %5684 = vmatpush1.msra.mxu0 %v5507
      %5685 = vmatprep.subr.mxu0 0.0
      %5686 = vmatpush1.msra.mxu0 %v5508
      %5687 = vmatprep.subr.mxu0 0.0
      %5688 = vmatpush1.msra.mxu0 %v5509
      %5689 = vmatprep.subr.mxu0 0.0
      %5690 = vmatpush1.msra.mxu0 %v5510
      %5691 = vmatprep.subr.mxu0 0.0
      %5692 = vmatpush1.msra.mxu0 %v5511
      %5693 = vmatprep.subr.mxu0 0.0
      %5694 = vmatpush1.msra.mxu0 %v5512
      %5695 = vmatprep.subr.mxu0 0.0
      %5696 = vmatpush1.msra.mxu0 0.0
      %5697 = vmatprep.subr.mxu0 0.0
      %5698 = vmatpush1.msra.mxu0 0.0
      %5699 = vmatprep.subr.mxu0 0.0
      %5700 = vmatpush1.msra.mxu0 0.0
      %5701 = vmatprep.subr.mxu0 0.0
      %5702 = vmatpush1.msra.mxu0 0.0
      %5703 = vmatprep.subr.mxu0 0.0
      %5704 = vmatpush1.msra.mxu0 0.0
      %5705 = vmatprep.subr.mxu0 0.0
      %5706 = vmatpush1.msra.mxu0 0.0
      %5707 = vmatprep.subr.mxu0 0.0
      %5708 = vmatpush1.msra.mxu0 0.0
      %5709 = vmatprep.subr.mxu0 0.0
      %5710 = vmatpush1.msra.mxu0 0.0
      %5711 = vmatprep.subr.mxu0 0.0
      %5712 = vmatpush1.msra.mxu0 0.0
      %5713 = vmatprep.subr.mxu0 0.0
      %5714 = vmatpush1.msra.mxu0 0.0
      %5715 = vmatprep.subr.mxu0 0.0
      %5716 = vmatpush1.msra.mxu0 0.0
      %5717 = vmatprep.subr.mxu0 0.0
      %5718 = vmatpush1.msra.mxu0 0.0
      %5719 = vmatprep.subr.mxu0 0.0
      %5720 = vmatpush1.msra.mxu0 0.0
      %5721 = vmatprep.subr.mxu0 0.0
      %5722 = vmatpush1.msra.mxu0 0.0
      %5723 = vmatprep.subr.mxu0 0.0
      %5724 = vmatpush1.msra.mxu0 0.0
      %5725 = vmatprep.subr.mxu0 0.0
      %5726 = vmatpush1.msra.mxu0 0.0
      %5727 = vmatprep.mubr.f32.mxu0 0.0
      %5728 = vmatmul.mubr.f32.gmra.mrb[0].mxu0 %v5397
      %v5729 = vpop.f32.mrb[0].mxu0
      %v5730 = vadd.f32 %v5655, %v5729
      %v5731 = vpop.f32.mrb[0].mxu0
      %5732 = vmatprep.mubr.f32.mxu0 0.0
      %5733 = vmatmul.mubr.f32.gmra.mrb[0].mxu0 %v5432
      %v5734 = vpop.f32.mrb[0].mxu0
      %v5735 = vadd.f32 %v5660, %v5734
      %v5736 = vpop.f32.mrb[0].mxu0
      %5737 = vdwg.mxu0
      %v5738 = vmax.f32 %v5730, 1e-05
      %v5739 = vmax.f32 %v5735, 1e-05
      %v5740 = vlog2.pop %v5738
      %v5741 = vmul.f32 %v5740, 0.6931472
      %v5742 = vlog2.pop %v5739
      %v5743 = vmul.f32 %v5742, 0.6931472
      %5744 = vst [vmem:[%s286] sm:$0xff] %v5741
      %5745 = vst [vmem:[%s286 + $0x8] sm:$0xff] %v5743
      %s5746 = smul.u32 2, %s20
      %p5747 = scmp.lt.s32.totalorder %s19, 1
      %s5748 = scalar_select %p5747, %s19, 1
      %p5749 = scmp.lt.s32.totalorder %s5746, 1
      %s5750 = scalar_select %p5749, %s5746, 1
      %s5751 = smul.addr %s5748, 2
      %s5752 = sadd.s32 %s5750, %s5751
      %s5753 = smul.addr %s5752, 8
      %s5754 = scalar_lea.vmem %s4, %s5753
      // Predicated region
      $region37: #{mel_spectrogram.1} parent=35 // pred_check
        %p5755 = pneg %p149
      $region38: #{mel_spectrogram.1} parent=35 // pred_check_branch
        %5757 = sbr.rel (%p5755) target = $region40
      $region39: #{mel_spectrogram.1} parent=35 // pred_region
        %s5758 = smul.u32 2, %s20
      $region40: #{mel_spectrogram.1} parent=35 // pred_fallthru
        _
    $region36: #{mel_spectrogram.1} parent=5 // pred_fallthru
      _
    %p5759 = scmp.le.s32.totalorder 2, %s10
    // Predicated region
    $region41: #{mel_spectrogram.1} parent=5 // pred_check
      %p5760 = pneg %p5759
    $region42: #{mel_spectrogram.1} parent=5 // pred_check_branch
      %5762 = sbr.rel (%p5760) target = $region44
    $region43: #{mel_spectrogram.1} parent=5 // pred_region
      %s5763 = ssub.s32 %s10, 2
      // Predicated region
      $region45: #{mel_spectrogram.1} parent=43 // pred_check
        %p5764 = pneg %p155
      $region46: #{mel_spectrogram.1} parent=43 // pred_check_branch
        %5766 = sbr.rel (%p5764) target = $region48
      $region47: #{mel_spectrogram.1} parent=43 // pred_region
        %s5767 = smul.u32 2, %s22
        %p5768 = scmp.lt.s32.totalorder %s21, 1
        %s5769 = scalar_select %p5768, %s21, 1
        %p5770 = scmp.lt.s32.totalorder %s5767, 1
        %s5771 = scalar_select %p5770, %s5767, 1
        %s5772 = smul.addr %s5769, 2
        %s5773 = sadd.s32 %s5771, %s5772
        %s5774 = smul.addr %s5773, 8
        %s5775 = scalar_lea.vmem %s4, %s5774
      $region48: #{mel_spectrogram.1} parent=43 // pred_fallthru
        _
    $region44: #{mel_spectrogram.1} parent=5 // pred_fallthru
      _
  $region6: #{mel_spectrogram.1} parent=0 // loop_footer
    %s14 = sadd.s32 1, %s10
  $region7: #{mel_spectrogram.1} parent=0 // loop_footer_branch
    %9 = sbr.rel target = $region3
  $region8: #{mel_spectrogram.1} parent=0 // loop_exit
    _

</llo_original>
